<compile_context>
chip_gen: v6e
topology: v6e:2x2x1
jax: 0.10.0
libtpu: 0.0.40
codegen_flags: <defaults>
</compile_context>

<pallas_src>
import jax
import jax.numpy as jnp
import numpy as np
from jax.experimental import pallas as pl
from jax.experimental.pallas import tpu as pltpu


N_CLASSES = 10

_COMPILER_PARAMS = pltpu.CompilerParams(
    dimension_semantics=("parallel",),
    vmem_limit_bytes=32 * 1024 * 1024,
)


def _round_up(x, m):
    return ((x + m - 1) // m) * m


def _pick_m_tile(m8, cap=512):
    """Largest multiple-of-8 tile <= cap that evenly divides m8 (m8 % 8 == 0)."""
    best = 8
    for t in range(8, min(cap, m8) + 1, 8):
        if m8 % t == 0:
            best = t
    return best


# ----------------------------------------------------------------------------
# Pallas kernels
# ----------------------------------------------------------------------------
def _conv_pool_kernel(p_ref, w_ref, b_ref, o_ref):
    """Fused conv + bias + ReLU + 2x2 max-pool (single merged 4-corner matmul).

    p_ref: (4, TM, K)   im2col patches, one slab per 2x2 pool-window corner
    w_ref: (K, Cout)    flattened conv weights
    b_ref: (1, Cout)    bias
    o_ref: (TM, Cout)   pooled output rows, (n, i, j) flattened
    """
    _, tm, kdim = p_ref.shape
    cout = w_ref.shape[1]
    # One MXU push over all 4 corners; leading-dim merge is layout-free (TM % 8 == 0).
    y = jnp.dot(p_ref[...].reshape(4 * tm, kdim), w_ref[...],
                preferred_element_type=jnp.float32)
    # Bias hoisted out of the corner max; relu(max) == max(relu).
    y = jnp.max(y.reshape(4, tm, cout), axis=0) + b_ref[...]
    o_ref[...] = jnp.maximum(y, 0.0).astype(o_ref.dtype)


def _conv2_mlp_kernel(p_ref, w2_ref, b2_ref, wf1_ref, bf1_ref,
                      wf2_ref, bf2_ref, wf3_ref, bf3_ref, o_ref):
    """conv2 (merged 4-corner matmul) + bias + ReLU + pool, fused with fc1/fc2/fc3.

    p_ref  : (4, 25, TB, 150) conv2 pool-corner patches, row order (position, sample)
    w2_ref : (150, 16)    b2_ref : (1, 16)
    wf1_ref: (25, 16, 120)  fc1 weights, rows pre-permuted to (pos, chan) order
    wf2_ref: (120, 84)    wf3_ref: (84, 128) zero-padded to 128 output lanes
    o_ref  : (TB, 128)
    """
    _, npos, tb, kdim = p_ref.shape
    cout = w2_ref.shape[1]

    # conv2: one MXU push over (corner, position, sample); TB % 8 == 0 keeps the
    # leading-dim merge layout-free.
    y = jnp.dot(p_ref[...].reshape(4 * npos * tb, kdim), w2_ref[...],
                preferred_element_type=jnp.float32)
    y = jnp.max(y.reshape(4, npos, tb, cout), axis=0) + b2_ref[...]  # bias after corner max
    pooled = jnp.maximum(y, 0.0)                                     # (25, TB, 16)

    # fc1: torch's NCHW flatten is absorbed by wf1's row permutation; accumulate
    # over the 25 spatial positions so a (TB, 400) relayout is never needed.
    h = jnp.zeros((tb, wf1_ref.shape[2]), jnp.float32)
    for p in range(npos):  # static unroll
        h = h + jnp.dot(pooled[p], wf1_ref[p], preferred_element_type=jnp.float32)
    h = jnp.maximum(h + bf1_ref[...], 0.0)

    h = jnp.maximum(
        jnp.dot(h, wf2_ref[...], preferred_element_type=jnp.float32) + bf2_ref[...], 0.0)
    y3 = jnp.dot(h, wf3_ref[...], preferred_element_type=jnp.float32) + bf3_ref[...]
    o_ref[...] = y3.astype(o_ref.dtype)


# ----------------------------------------------------------------------------
# Trace-time glue: pool-corner im2col slabs via strided slices (no 6-D transpose)
# ----------------------------------------------------------------------------
def _corner_slabs(x, k):
    """x: (N, H, W, C) NHWC. Valid k x k conv (stride 1) followed by 2x2/2 max-pool.

    Returns (slabs, po, qo) with slabs: (4, N, po, qo, k*k*C); K ordering (dy, dx, c).
    """
    n, h, w, c = x.shape
    ho, wo = h - k + 1, w - k + 1
    po, qo = ho // 2, wo // 2
    corners = []
    for cy in range(2):
        for cx in range(2):
            pieces = [
                x[:, cy + dy:cy + dy + 2 * po:2, cx + dx:cx + dx + 2 * qo:2, :]
                for dy in range(k) for dx in range(k)
            ]
            corners.append(jnp.concatenate(pieces, axis=-1))  # (N, po, qo, k*k*C)
    return jnp.stack(corners, axis=0), po, qo                 # (4, N, po, qo, K)


# ----------------------------------------------------------------------------
# Wrappers
# ----------------------------------------------------------------------------
def conv_relu_pool_block(x, w_mat, b_row, k=5):
    """x: (N,H,W,Cin) NHWC; w_mat: (k*k*Cin, Cout); returns (N, Ho//2, Wo//2, Cout)."""
    n = x.shape[0]
    slabs, po, qo = _corner_slabs(x, k)
    kdim = slabs.shape[-1]
    cout = w_mat.shape[1]
    mp = n * po * qo
    slabs = slabs.reshape(4, mp, kdim)          # rows ordered (n, i, j); contiguous reshape
    mp8 = _round_up(mp, 8)
    if mp8 != mp:
        slabs = jnp.pad(slabs, ((0, 0), (0, mp8 - mp), (0, 0)))
    tm = _pick_m_tile(mp8)

    out = pl.pallas_call(
        _conv_pool_kernel,
        out_shape=jax.ShapeDtypeStruct((mp8, cout), jnp.float32),
        grid=(mp8 // tm,),
        in_specs=[
            pl.BlockSpec((4, tm, kdim), lambda i: (0, i, 0)),
            pl.BlockSpec((kdim, cout), lambda i: (0, 0)),
            pl.BlockSpec((1, cout), lambda i: (0, 0)),
        ],
        out_specs=pl.BlockSpec((tm, cout), lambda i: (i, 0)),
        compiler_params=_COMPILER_PARAMS,
    )(slabs, w_mat, b_row)
    return out[:mp].reshape(n, po, qo, cout)


def conv2_mlp_block(h1, pp):
    """Fused conv2(+bias, ReLU, 2x2 pool) -> fc1(ReLU) -> fc2(ReLU) -> fc3.

    h1: (N, 14, 14, 6) NHWC conv1 output.  Returns (N, N_CLASSES) logits.
    """
    n0 = h1.shape[0]
    n_pad = _round_up(n0, 8)
    if n_pad != n0:
        h1 = jnp.pad(h1, ((0, n_pad - n0), (0, 0), (0, 0), (0, 0)))

    slabs, po, qo = _corner_slabs(h1, k=5)                     # (4, Np, 5, 5, 150)
    npos, kdim = po * qo, slabs.shape[-1]
    # Row order (position, sample) so each batch tile is contiguous and positions
    # are leading-dim-indexable in-kernel (small tensor; cheap transpose).
    slabs = jnp.transpose(slabs, (0, 2, 3, 1, 4)).reshape(4, npos, n_pad, kdim)

    tb = _pick_m_tile(n_pad, cap=64)                           # batch tile, multiple of 8
    ncls_pad = pp["w_fc3"].shape[1]                            # 128 (lane-dense output)

    out = pl.pallas_call(
        _conv2_mlp_kernel,
        out_shape=jax.ShapeDtypeStruct((n_pad, ncls_pad), jnp.float32),
        grid=(n_pad // tb,),
        in_specs=[
            pl.BlockSpec((4, npos, tb, kdim), lambda b: (0, 0, b, 0)),
            pl.BlockSpec(pp["w_conv2"].shape, lambda b: (0, 0)),
            pl.BlockSpec(pp["b_conv2"].shape, lambda b: (0, 0)),
            pl.BlockSpec(pp["w_fc1"].shape, lambda b: (0, 0, 0)),
            pl.BlockSpec(pp["b_fc1"].shape, lambda b: (0, 0)),
            pl.BlockSpec(pp["w_fc2"].shape, lambda b: (0, 0)),
            pl.BlockSpec(pp["b_fc2"].shape, lambda b: (0, 0)),
            pl.BlockSpec(pp["w_fc3"].shape, lambda b: (0, 0)),
            pl.BlockSpec(pp["b_fc3"].shape, lambda b: (0, 0)),
        ],
        out_specs=pl.BlockSpec((tb, ncls_pad), lambda b: (b, 0)),
        compiler_params=_COMPILER_PARAMS,
    )(slabs, pp["w_conv2"], pp["b_conv2"], pp["w_fc1"], pp["b_fc1"],
      pp["w_fc2"], pp["b_fc2"], pp["w_fc3"], pp["b_fc3"])
    return out[:n0, :N_CLASSES]


def prepare_params(params):
    """One-time parameter prep, done OUTSIDE the jitted forward:
    conv weights OIHW -> (K, Cout) matching the (dy, dx, cin) patch K-ordering,
    fc1 rows permuted to absorb torch's NCHW flatten, fc3 zero-padded to 128 lanes."""
    k = 5
    w_c1 = jnp.transpose(params["w_conv1"], (2, 3, 1, 0)).reshape(k * k * 3, 6)
    w_c2 = jnp.transpose(params["w_conv2"], (2, 3, 1, 0)).reshape(k * k * 6, 16)
    # torch flatten index is c*25 + i*5 + j; the kernel consumes (p=i*5+j, c) order.
    w_f1 = jnp.transpose(params["w_fc1"].reshape(16, 25, 120), (1, 0, 2))  # (25, 16, 120)
    ncls = params["w_fc3"].shape[1]
    ncls_pad = _round_up(max(ncls, 128), 128)
    w_f3 = jnp.zeros((params["w_fc3"].shape[0], ncls_pad), jnp.float32)
    w_f3 = w_f3.at[:, :ncls].set(params["w_fc3"])
    b_f3 = jnp.zeros((1, ncls_pad), jnp.float32).at[:, :ncls].set(params["b_fc3"][None, :])
    return {
        "w_conv1": w_c1, "b_conv1": params["b_conv1"].reshape(1, -1),
        "w_conv2": w_c2, "b_conv2": params["b_conv2"].reshape(1, -1),
        "w_fc1": w_f1, "b_fc1": params["b_fc1"].reshape(1, -1),
        "w_fc2": params["w_fc2"], "b_fc2": params["b_fc2"].reshape(1, -1),
        "w_fc3": w_f3, "b_fc3": b_f3,
    }


# ----------------------------------------------------------------------------
# ConvCifar forward (matches the PyTorch module semantics)
# ----------------------------------------------------------------------------
def conv_cifar_forward(x_nchw, pp):
    x = jnp.transpose(x_nchw, (0, 2, 3, 1))                          # NCHW -> NHWC
    h1 = conv_relu_pool_block(x, pp["w_conv1"], pp["b_conv1"], k=5)  # (N, 14, 14, 6)
    return conv2_mlp_block(h1, pp)                                   # (N, 10)


# Pure-JAX reference (NCHW, torch-style conv) used only as a correctness check.
def reference_forward(x, params):
    def conv(x, w, b):
        y = jax.lax.conv_general_dilated(
            x, w, (1, 1), "VALID",
            dimension_numbers=("NCHW", "OIHW", "NCHW"))
        return jax.nn.relu(y + b[None, :, None, None])

    def pool(x):
        return jax.lax.reduce_window(
            x, -jnp.inf, jax.lax.max, (1, 1, 2, 2), (1, 1, 2, 2), "VALID")

    x = pool(conv(x, params["w_conv1"], params["b_conv1"]))
    x = pool(conv(x, params["w_conv2"], params["b_conv2"]))
    x = x.reshape(x.shape[0], -1)
    x = jax.nn.relu(x @ params["w_fc1"] + params["b_fc1"])
    x = jax.nn.relu(x @ params["w_fc2"] + params["b_fc2"])
    return x @ params["w_fc3"] + params["b_fc3"]


if __name__ == "__main__":
    key = jax.random.PRNGKey(0)
    ks = jax.random.split(key, 11)

    # CIFAR-shaped input: batch=2, 3 channels, 32x32 (required by the 16*5*5 flatten).
    x = jax.random.normal(ks[0], (2, 3, 32, 32), jnp.float32)

    # Deterministic synthetic parameters (PyTorch conv layout OIHW; FC stored as (in, out)).
    params = {
        "w_conv1": 0.1 * jax.random.normal(ks[1], (6, 3, 5, 5), jnp.float32),
        "b_conv1": 0.1 * jax.random.normal(ks[2], (6,), jnp.float32),
        "w_conv2": 0.1 * jax.random.normal(ks[3], (16, 6, 5, 5), jnp.float32),
        "b_conv2": 0.1 * jax.random.normal(ks[4], (16,), jnp.float32),
        "w_fc1": 0.05 * jax.random.normal(ks[5], (16 * 5 * 5, 120), jnp.float32),
        "b_fc1": 0.05 * jax.random.normal(ks[6], (120,), jnp.float32),
        "w_fc2": 0.05 * jax.random.normal(ks[7], (120, 84), jnp.float32),
        "b_fc2": 0.05 * jax.random.normal(ks[8], (84,), jnp.float32),
        "w_fc3": 0.05 * jax.random.normal(ks[9], (84, 10), jnp.float32),
        "b_fc3": 0.05 * jax.random.normal(ks[10], (10,), jnp.float32),
    }

    prepped = prepare_params(params)          # one-time weight prep, outside the jitted forward
    fwd = jax.jit(conv_cifar_forward)
    out = jax.block_until_ready(fwd(x, prepped))
    assert out.shape == (2, 10), out.shape

    ref = jax.block_until_ready(reference_forward(x, params))
    np.testing.assert_allclose(np.asarray(out), np.asarray(ref), rtol=1e-3, atol=1e-3)

    print("KERNEL_OK")
</pallas_src>

<mosaic_0001>
module attributes {stable_mosaic.version = 11 : i64} {
  func.func @_conv_pool_kernel(%arg0: i32, %arg1: memref<4x392x75xf32, #tpu.memory_space<vmem>>, %arg2: memref<75x6xf32, #tpu.memory_space<vmem>>, %arg3: memref<1x6xf32, #tpu.memory_space<vmem>>, %arg4: memref<392x6xf32, #tpu.memory_space<vmem>>) attributes {dimension_semantics = [#tpu.dimension_semantics<parallel>], iteration_bounds = array<i64: 1>, scalar_prefetch = 0 : i64, scratch_operands = 0 : i64, tpu.core_type = #tpu.core_type<tc>, window_params = [{transform_indices = @transform_0, window_bounds = array<i64: 4, 392, 75>}, {pipeline_mode = #tpu.pipeline_mode<synchronous>, transform_indices = @transform_1, window_bounds = array<i64: 75, 6>}, {pipeline_mode = #tpu.pipeline_mode<synchronous>, transform_indices = @transform_2, window_bounds = array<i64: 1, 6>}, {transform_indices = @transform_3, window_bounds = array<i64: 392, 6>}]} {
    %c0 = arith.constant 0 : index
    %c0_0 = arith.constant 0 : index
    %c0_1 = arith.constant 0 : index
    %0 = vector.load %arg1[%c0, %c0_0, %c0_1] : memref<4x392x75xf32, #tpu.memory_space<vmem>>, vector<4x392x75xf32>
    %1 = vector.shape_cast %0 : vector<4x392x75xf32> to vector<1568x75xf32>
    %c0_2 = arith.constant 0 : index
    %c0_3 = arith.constant 0 : index
    %2 = vector.load %arg2[%c0_2, %c0_3] : memref<75x6xf32, #tpu.memory_space<vmem>>, vector<75x6xf32>
    %cst = arith.constant dense<0.000000e+00> : vector<1568x6xf32>
    %3 = tpu.matmul %1, %2, %cst {dimension_numbers = #tpu.dot_dimension_numbers<[1], [0], [0], [1], [0, 0, 1, 1], [], []>} : vector<1568x75xf32>, vector<75x6xf32>, vector<1568x6xf32> -> vector<1568x6xf32>
    %4 = vector.shape_cast %3 : vector<1568x6xf32> to vector<4x392x6xf32>
    %cst_4 = arith.constant dense<0xFF800000> : vector<392x6xf32>
    %5 = vector.multi_reduction <maximumf>, %4, %cst_4 [0] : vector<4x392x6xf32> to vector<392x6xf32>
    %c0_5 = arith.constant 0 : index
    %c0_6 = arith.constant 0 : index
    %6 = vector.load %arg3[%c0_5, %c0_6] : memref<1x6xf32, #tpu.memory_space<vmem>>, vector<1x6xf32>
    %7 = vector.broadcast %6 : vector<1x6xf32> to vector<392x6xf32>
    %8 = arith.addf %5, %7 : vector<392x6xf32>
    %cst_7 = arith.constant 0.000000e+00 : f32
    %9 = vector.broadcast %cst_7 : f32 to vector<392x6xf32>
    %10 = arith.maximumf %8, %9 : vector<392x6xf32>
    %c0_8 = arith.constant 0 : index
    %c0_9 = arith.constant 0 : index
    %11 = vector.load %arg4[%c0_8, %c0_9] : memref<392x6xf32, #tpu.memory_space<vmem>>, vector<392x6xf32>
    tpu.vector_store %arg4[%c0_8, %c0_9], %10 {strides = array<i32>} : memref<392x6xf32, #tpu.memory_space<vmem>>, vector<392x6xf32>,
    return
  }
  func.func @transform_0(%arg0: i32) -> (i32, i32, i32) {
    %c0_i32 = arith.constant 0 : i32
    %c0_i32_0 = arith.constant 0 : i32
    %c0_i32_1 = arith.constant 0 : i32
    return %c0_i32, %arg0, %c0_i32_0 : i32, i32, i32
  }
  func.func @transform_1(%arg0: i32) -> (i32, i32) {
    %c0_i32 = arith.constant 0 : i32
    %c0_i32_0 = arith.constant 0 : i32
    %c0_i32_1 = arith.constant 0 : i32
    return %c0_i32, %c0_i32_0 : i32, i32
  }
  func.func @transform_2(%arg0: i32) -> (i32, i32) {
    %c0_i32 = arith.constant 0 : i32
    %c0_i32_0 = arith.constant 0 : i32
    %c0_i32_1 = arith.constant 0 : i32
    return %c0_i32, %c0_i32_0 : i32, i32
  }
  func.func @transform_3(%arg0: i32) -> (i32, i32) {
    %c0_i32 = arith.constant 0 : i32
    %c0_i32_0 = arith.constant 0 : i32
    return %arg0, %c0_i32 : i32, i32
  }
}

module attributes {stable_mosaic.version = 11 : i64} {
  func.func @_conv2_mlp_kernel(%arg0: i32, %arg1: memref<4x25x8x150xf32, #tpu.memory_space<vmem>>, %arg2: memref<150x16xf32, #tpu.memory_space<vmem>>, %arg3: memref<1x16xf32, #tpu.memory_space<vmem>>, %arg4: memref<25x16x120xf32, #tpu.memory_space<vmem>>, %arg5: memref<1x120xf32, #tpu.memory_space<vmem>>, %arg6: memref<120x84xf32, #tpu.memory_space<vmem>>, %arg7: memref<1x84xf32, #tpu.memory_space<vmem>>, %arg8: memref<84x128xf32, #tpu.memory_space<vmem>>, %arg9: memref<1x128xf32, #tpu.memory_space<vmem>>, %arg10: memref<8x128xf32, #tpu.memory_space<vmem>>) attributes {dimension_semantics = [#tpu.dimension_semantics<parallel>], iteration_bounds = array<i64: 1>, scalar_prefetch = 0 : i64, scratch_operands = 0 : i64, tpu.core_type = #tpu.core_type<tc>, window_params = [{transform_indices = @transform_0, window_bounds = array<i64: 4, 25, 8, 150>}, {pipeline_mode = #tpu.pipeline_mode<synchronous>, transform_indices = @transform_1, window_bounds = array<i64: 150, 16>}, {pipeline_mode = #tpu.pipeline_mode<synchronous>, transform_indices = @transform_2, window_bounds = array<i64: 1, 16>}, {pipeline_mode = #tpu.pipeline_mode<synchronous>, transform_indices = @transform_3, window_bounds = array<i64: 25, 16, 120>}, {pipeline_mode = #tpu.pipeline_mode<synchronous>, transform_indices = @transform_4, window_bounds = array<i64: 1, 120>}, {pipeline_mode = #tpu.pipeline_mode<synchronous>, transform_indices = @transform_5, window_bounds = array<i64: 120, 84>}, {pipeline_mode = #tpu.pipeline_mode<synchronous>, transform_indices = @transform_6, window_bounds = array<i64: 1, 84>}, {pipeline_mode = #tpu.pipeline_mode<synchronous>, transform_indices = @transform_7, window_bounds = array<i64: 84, 128>}, {pipeline_mode = #tpu.pipeline_mode<synchronous>, transform_indices = @transform_8, window_bounds = array<i64: 1, 128>}, {transform_indices = @transform_9, window_bounds = array<i64: 8, 128>}]} {
    %c0 = arith.constant 0 : index
    %c0_0 = arith.constant 0 : index
    %c0_1 = arith.constant 0 : index
    %c0_2 = arith.constant 0 : index
    %0 = vector.load %arg1[%c0, %c0_0, %c0_1, %c0_2] : memref<4x25x8x150xf32, #tpu.memory_space<vmem>>, vector<4x25x8x150xf32>
    %1 = vector.shape_cast %0 : vector<4x25x8x150xf32> to vector<800x150xf32>
    %c0_3 = arith.constant 0 : index
    %c0_4 = arith.constant 0 : index
    %2 = vector.load %arg2[%c0_3, %c0_4] : memref<150x16xf32, #tpu.memory_space<vmem>>, vector<150x16xf32>
    %cst = arith.constant dense<0.000000e+00> : vector<800x16xf32>
    %3 = tpu.matmul %1, %2, %cst {dimension_numbers = #tpu.dot_dimension_numbers<[1], [0], [0], [1], [0, 0, 1, 1], [], []>} : vector<800x150xf32>, vector<150x16xf32>, vector<800x16xf32> -> vector<800x16xf32>
    %4 = vector.shape_cast %3 : vector<800x16xf32> to vector<4x25x8x16xf32>
    %cst_5 = arith.constant dense<0xFF800000> : vector<25x8x16xf32>
    %5 = vector.multi_reduction <maximumf>, %4, %cst_5 [0] : vector<4x25x8x16xf32> to vector<25x8x16xf32>
    %c0_6 = arith.constant 0 : index
    %c0_7 = arith.constant 0 : index
    %6 = vector.load %arg3[%c0_6, %c0_7] : memref<1x16xf32, #tpu.memory_space<vmem>>, vector<1x16xf32>
    %7 = vector.shape_cast %6 : vector<1x16xf32> to vector<1x1x16xf32>
    %8 = vector.broadcast %7 : vector<1x1x16xf32> to vector<25x8x16xf32>
    %9 = arith.addf %5, %8 : vector<25x8x16xf32>
    %cst_8 = arith.constant 0.000000e+00 : f32
    %10 = vector.broadcast %cst_8 : f32 to vector<25x8x16xf32>
    %11 = arith.maximumf %9, %10 : vector<25x8x16xf32>
    %cst_9 = arith.constant 0.000000e+00 : f32
    %12 = vector.broadcast %cst_9 : f32 to vector<8x120xf32>
    %13 = vector.extract_strided_slice %11 {offsets = [0, 0, 0], sizes = [1, 8, 16], strides = [1, 1, 1]} : vector<25x8x16xf32> to vector<1x8x16xf32>
    %14 = vector.shape_cast %13 : vector<1x8x16xf32> to vector<8x16xf32>
    %c0_10 = arith.constant 0 : index
    %c0_11 = arith.constant 0 : index
    %c0_12 = arith.constant 0 : index
    %15 = vector.load %arg4[%c0_10, %c0_11, %c0_12] : memref<25x16x120xf32, #tpu.memory_space<vmem>>, vector<1x16x120xf32>
    %16 = vector.shape_cast %15 : vector<1x16x120xf32> to vector<16x120xf32>
    %cst_13 = arith.constant dense<0.000000e+00> : vector<8x120xf32>
    %17 = tpu.matmul %14, %16, %cst_13 {dimension_numbers = #tpu.dot_dimension_numbers<[1], [0], [0], [1], [0, 0, 1, 1], [], []>} : vector<8x16xf32>, vector<16x120xf32>, vector<8x120xf32> -> vector<8x120xf32>
    %18 = arith.addf %12, %17 : vector<8x120xf32>
    %19 = vector.extract_strided_slice %11 {offsets = [1, 0, 0], sizes = [1, 8, 16], strides = [1, 1, 1]} : vector<25x8x16xf32> to vector<1x8x16xf32>
    %20 = vector.shape_cast %19 : vector<1x8x16xf32> to vector<8x16xf32>
    %c1 = arith.constant 1 : index
    %c0_14 = arith.constant 0 : index
    %c0_15 = arith.constant 0 : index
    %21 = vector.load %arg4[%c1, %c0_14, %c0_15] : memref<25x16x120xf32, #tpu.memory_space<vmem>>, vector<1x16x120xf32>
    %22 = vector.shape_cast %21 : vector<1x16x120xf32> to vector<16x120xf32>
    %cst_16 = arith.constant dense<0.000000e+00> : vector<8x120xf32>
    %23 = tpu.matmul %20, %22, %cst_16 {dimension_numbers = #tpu.dot_dimension_numbers<[1], [0], [0], [1], [0, 0, 1, 1], [], []>} : vector<8x16xf32>, vector<16x120xf32>, vector<8x120xf32> -> vector<8x120xf32>
    %24 = arith.addf %18, %23 : vector<8x120xf32>
    %25 = vector.extract_strided_slice %11 {offsets = [2, 0, 0], sizes = [1, 8, 16], strides = [1, 1, 1]} : vector<25x8x16xf32> to vector<1x8x16xf32>
    %26 = vector.shape_cast %25 : vector<1x8x16xf32> to vector<8x16xf32>
    %c2 = arith.constant 2 : index
    %c0_17 = arith.constant 0 : index
    %c0_18 = arith.constant 0 : index
    %27 = vector.load %arg4[%c2, %c0_17, %c0_18] : memref<25x16x120xf32, #tpu.memory_space<vmem>>, vector<1x16x120xf32>
    %28 = vector.shape_cast %27 : vector<1x16x120xf32> to vector<16x120xf32>
    %cst_19 = arith.constant dense<0.000000e+00> : vector<8x120xf32>
    %29 = tpu.matmul %26, %28, %cst_19 {dimension_numbers = #tpu.dot_dimension_numbers<[1], [0], [0], [1], [0, 0, 1, 1], [], []>} : vector<8x16xf32>, vector<16x120xf32>, vector<8x120xf32> -> vector<8x120xf32>
    %30 = arith.addf %24, %29 : vector<8x120xf32>
    %31 = vector.extract_strided_slice %11 {offsets = [3, 0, 0], sizes = [1, 8, 16], strides = [1, 1, 1]} : vector<25x8x16xf32> to vector<1x8x16xf32>
    %32 = vector.shape_cast %31 : vector<1x8x16xf32> to vector<8x16xf32>
    %c3 = arith.constant 3 : index
    %c0_20 = arith.constant 0 : index
    %c0_21 = arith.constant 0 : index
    %33 = vector.load %arg4[%c3, %c0_20, %c0_21] : memref<25x16x120xf32, #tpu.memory_space<vmem>>, vector<1x16x120xf32>
    %34 = vector.shape_cast %33 : vector<1x16x120xf32> to vector<16x120xf32>
    %cst_22 = arith.constant dense<0.000000e+00> : vector<8x120xf32>
    %35 = tpu.matmul %32, %34, %cst_22 {dimension_numbers = #tpu.dot_dimension_numbers<[1], [0], [0], [1], [0, 0, 1, 1], [], []>} : vector<8x16xf32>, vector<16x120xf32>, vector<8x120xf32> -> vector<8x120xf32>
    %36 = arith.addf %30, %35 : vector<8x120xf32>
    %37 = vector.extract_strided_slice %11 {offsets = [4, 0, 0], sizes = [1, 8, 16], strides = [1, 1, 1]} : vector<25x8x16xf32> to vector<1x8x16xf32>
    %38 = vector.shape_cast %37 : vector<1x8x16xf32> to vector<8x16xf32>
    %c4 = arith.constant 4 : index
    %c0_23 = arith.constant 0 : index
    %c0_24 = arith.constant 0 : index
    %39 = vector.load %arg4[%c4, %c0_23, %c0_24] : memref<25x16x120xf32, #tpu.memory_space<vmem>>, vector<1x16x120xf32>
    %40 = vector.shape_cast %39 : vector<1x16x120xf32> to vector<16x120xf32>
    %cst_25 = arith.constant dense<0.000000e+00> : vector<8x120xf32>
    %41 = tpu.matmul %38, %40, %cst_25 {dimension_numbers = #tpu.dot_dimension_numbers<[1], [0], [0], [1], [0, 0, 1, 1], [], []>} : vector<8x16xf32>, vector<16x120xf32>, vector<8x120xf32> -> vector<8x120xf32>
    %42 = arith.addf %36, %41 : vector<8x120xf32>
    %43 = vector.extract_strided_slice %11 {offsets = [5, 0, 0], sizes = [1, 8, 16], strides = [1, 1, 1]} : vector<25x8x16xf32> to vector<1x8x16xf32>
    %44 = vector.shape_cast %43 : vector<1x8x16xf32> to vector<8x16xf32>
    %c5 = arith.constant 5 : index
    %c0_26 = arith.constant 0 : index
    %c0_27 = arith.constant 0 : index
    %45 = vector.load %arg4[%c5, %c0_26, %c0_27] : memref<25x16x120xf32, #tpu.memory_space<vmem>>, vector<1x16x120xf32>
    %46 = vector.shape_cast %45 : vector<1x16x120xf32> to vector<16x120xf32>
    %cst_28 = arith.constant dense<0.000000e+00> : vector<8x120xf32>
    %47 = tpu.matmul %44, %46, %cst_28 {dimension_numbers = #tpu.dot_dimension_numbers<[1], [0], [0], [1], [0, 0, 1, 1], [], []>} : vector<8x16xf32>, vector<16x120xf32>, vector<8x120xf32> -> vector<8x120xf32>
    %48 = arith.addf %42, %47 : vector<8x120xf32>
    %49 = vector.extract_strided_slice %11 {offsets = [6, 0, 0], sizes = [1, 8, 16], strides = [1, 1, 1]} : vector<25x8x16xf32> to vector<1x8x16xf32>
    %50 = vector.shape_cast %49 : vector<1x8x16xf32> to vector<8x16xf32>
    %c6 = arith.constant 6 : index
    %c0_29 = arith.constant 0 : index
    %c0_30 = arith.constant 0 : index
    %51 = vector.load %arg4[%c6, %c0_29, %c0_30] : memref<25x16x120xf32, #tpu.memory_space<vmem>>, vector<1x16x120xf32>
    %52 = vector.shape_cast %51 : vector<1x16x120xf32> to vector<16x120xf32>
    %cst_31 = arith.constant dense<0.000000e+00> : vector<8x120xf32>
    %53 = tpu.matmul %50, %52, %cst_31 {dimension_numbers = #tpu.dot_dimension_numbers<[1], [0], [0], [1], [0, 0, 1, 1], [], []>} : vector<8x16xf32>, vector<16x120xf32>, vector<8x120xf32> -> vector<8x120xf32>
    %54 = arith.addf %48, %53 : vector<8x120xf32>
    %55 = vector.extract_strided_slice %11 {offsets = [7, 0, 0], sizes = [1, 8, 16], strides = [1, 1, 1]} : vector<25x8x16xf32> to vector<1x8x16xf32>
    %56 = vector.shape_cast %55 : vector<1x8x16xf32> to vector<8x16xf32>
    %c7 = arith.constant 7 : index
    %c0_32 = arith.constant 0 : index
    %c0_33 = arith.constant 0 : index
    %57 = vector.load %arg4[%c7, %c0_32, %c0_33] : memref<25x16x120xf32, #tpu.memory_space<vmem>>, vector<1x16x120xf32>
    %58 = vector.shape_cast %57 : vector<1x16x120xf32> to vector<16x120xf32>
    %cst_34 = arith.constant dense<0.000000e+00> : vector<8x120xf32>
    %59 = tpu.matmul %56, %58, %cst_34 {dimension_numbers = #tpu.dot_dimension_numbers<[1], [0], [0], [1], [0, 0, 1, 1], [], []>} : vector<8x16xf32>, vector<16x120xf32>, vector<8x120xf32> -> vector<8x120xf32>
    %60 = arith.addf %54, %59 : vector<8x120xf32>
    %61 = vector.extract_strided_slice %11 {offsets = [8, 0, 0], sizes = [1, 8, 16], strides = [1, 1, 1]} : vector<25x8x16xf32> to vector<1x8x16xf32>
    %62 = vector.shape_cast %61 : vector<1x8x16xf32> to vector<8x16xf32>
    %c8 = arith.constant 8 : index
    %c0_35 = arith.constant 0 : index
    %c0_36 = arith.constant 0 : index
    %63 = vector.load %arg4[%c8, %c0_35, %c0_36] : memref<25x16x120xf32, #tpu.memory_space<vmem>>, vector<1x16x120xf32>
    %64 = vector.shape_cast %63 : vector<1x16x120xf32> to vector<16x120xf32>
    %cst_37 = arith.constant dense<0.000000e+00> : vector<8x120xf32>
    %65 = tpu.matmul %62, %64, %cst_37 {dimension_numbers = #tpu.dot_dimension_numbers<[1], [0], [0], [1], [0, 0, 1, 1], [], []>} : vector<8x16xf32>, vector<16x120xf32>, vector<8x120xf32> -> vector<8x120xf32>
    %66 = arith.addf %60, %65 : vector<8x120xf32>
    %67 = vector.extract_strided_slice %11 {offsets = [9, 0, 0], sizes = [1, 8, 16], strides = [1, 1, 1]} : vector<25x8x16xf32> to vector<1x8x16xf32>
    %68 = vector.shape_cast %67 : vector<1x8x16xf32> to vector<8x16xf32>
    %c9 = arith.constant 9 : index
    %c0_38 = arith.constant 0 : index
    %c0_39 = arith.constant 0 : index
    %69 = vector.load %arg4[%c9, %c0_38, %c0_39] : memref<25x16x120xf32, #tpu.memory_space<vmem>>, vector<1x16x120xf32>
    %70 = vector.shape_cast %69 : vector<1x16x120xf32> to vector<16x120xf32>
    %cst_40 = arith.constant dense<0.000000e+00> : vector<8x120xf32>
    %71 = tpu.matmul %68, %70, %cst_40 {dimension_numbers = #tpu.dot_dimension_numbers<[1], [0], [0], [1], [0, 0, 1, 1], [], []>} : vector<8x16xf32>, vector<16x120xf32>, vector<8x120xf32> -> vector<8x120xf32>
    %72 = arith.addf %66, %71 : vector<8x120xf32>
    %73 = vector.extract_strided_slice %11 {offsets = [10, 0, 0], sizes = [1, 8, 16], strides = [1, 1, 1]} : vector<25x8x16xf32> to vector<1x8x16xf32>
    %74 = vector.shape_cast %73 : vector<1x8x16xf32> to vector<8x16xf32>
    %c10 = arith.constant 10 : index
    %c0_41 = arith.constant 0 : index
    %c0_42 = arith.constant 0 : index
    %75 = vector.load %arg4[%c10, %c0_41, %c0_42] : memref<25x16x120xf32, #tpu.memory_space<vmem>>, vector<1x16x120xf32>
    %76 = vector.shape_cast %75 : vector<1x16x120xf32> to vector<16x120xf32>
    %cst_43 = arith.constant dense<0.000000e+00> : vector<8x120xf32>
    %77 = tpu.matmul %74, %76, %cst_43 {dimension_numbers = #tpu.dot_dimension_numbers<[1], [0], [0], [1], [0, 0, 1, 1], [], []>} : vector<8x16xf32>, vector<16x120xf32>, vector<8x120xf32> -> vector<8x120xf32>
    %78 = arith.addf %72, %77 : vector<8x120xf32>
    %79 = vector.extract_strided_slice %11 {offsets = [11, 0, 0], sizes = [1, 8, 16], strides = [1, 1, 1]} : vector<25x8x16xf32> to vector<1x8x16xf32>
    %80 = vector.shape_cast %79 : vector<1x8x16xf32> to vector<8x16xf32>
    %c11 = arith.constant 11 : index
    %c0_44 = arith.constant 0 : index
    %c0_45 = arith.constant 0 : index
    %81 = vector.load %arg4[%c11, %c0_44, %c0_45] : memref<25x16x120xf32, #tpu.memory_space<vmem>>, vector<1x16x120xf32>
    %82 = vector.shape_cast %81 : vector<1x16x120xf32> to vector<16x120xf32>
    %cst_46 = arith.constant dense<0.000000e+00> : vector<8x120xf32>
    %83 = tpu.matmul %80, %82, %cst_46 {dimension_numbers = #tpu.dot_dimension_numbers<[1], [0], [0], [1], [0, 0, 1, 1], [], []>} : vector<8x16xf32>, vector<16x120xf32>, vector<8x120xf32> -> vector<8x120xf32>
    %84 = arith.addf %78, %83 : vector<8x120xf32>
    %85 = vector.extract_strided_slice %11 {offsets = [12, 0, 0], sizes = [1, 8, 16], strides = [1, 1, 1]} : vector<25x8x16xf32> to vector<1x8x16xf32>
    %86 = vector.shape_cast %85 : vector<1x8x16xf32> to vector<8x16xf32>
    %c12 = arith.constant 12 : index
    %c0_47 = arith.constant 0 : index
    %c0_48 = arith.constant 0 : index
    %87 = vector.load %arg4[%c12, %c0_47, %c0_48] : memref<25x16x120xf32, #tpu.memory_space<vmem>>, vector<1x16x120xf32>
    %88 = vector.shape_cast %87 : vector<1x16x120xf32> to vector<16x120xf32>
    %cst_49 = arith.constant dense<0.000000e+00> : vector<8x120xf32>
    %89 = tpu.matmul %86, %88, %cst_49 {dimension_numbers = #tpu.dot_dimension_numbers<[1], [0], [0], [1], [0, 0, 1, 1], [], []>} : vector<8x16xf32>, vector<16x120xf32>, vector<8x120xf32> -> vector<8x120xf32>
    %90 = arith.addf %84, %89 : vector<8x120xf32>
    %91 = vector.extract_strided_slice %11 {offsets = [13, 0, 0], sizes = [1, 8, 16], strides = [1, 1, 1]} : vector<25x8x16xf32> to vector<1x8x16xf32>
    %92 = vector.shape_cast %91 : vector<1x8x16xf32> to vector<8x16xf32>
    %c13 = arith.constant 13 : index
    %c0_50 = arith.constant 0 : index
    %c0_51 = arith.constant 0 : index
    %93 = vector.load %arg4[%c13, %c0_50, %c0_51] : memref<25x16x120xf32, #tpu.memory_space<vmem>>, vector<1x16x120xf32>
    %94 = vector.shape_cast %93 : vector<1x16x120xf32> to vector<16x120xf32>
    %cst_52 = arith.constant dense<0.000000e+00> : vector<8x120xf32>
    %95 = tpu.matmul %92, %94, %cst_52 {dimension_numbers = #tpu.dot_dimension_numbers<[1], [0], [0], [1], [0, 0, 1, 1], [], []>} : vector<8x16xf32>, vector<16x120xf32>, vector<8x120xf32> -> vector<8x120xf32>
    %96 = arith.addf %90, %95 : vector<8x120xf32>
    %97 = vector.extract_strided_slice %11 {offsets = [14, 0, 0], sizes = [1, 8, 16], strides = [1, 1, 1]} : vector<25x8x16xf32> to vector<1x8x16xf32>
    %98 = vector.shape_cast %97 : vector<1x8x16xf32> to vector<8x16xf32>
    %c14 = arith.constant 14 : index
    %c0_53 = arith.constant 0 : index
    %c0_54 = arith.constant 0 : index
    %99 = vector.load %arg4[%c14, %c0_53, %c0_54] : memref<25x16x120xf32, #tpu.memory_space<vmem>>, vector<1x16x120xf32>
    %100 = vector.shape_cast %99 : vector<1x16x120xf32> to vector<16x120xf32>
    %cst_55 = arith.constant dense<0.000000e+00> : vector<8x120xf32>
    %101 = tpu.matmul %98, %100, %cst_55 {dimension_numbers = #tpu.dot_dimension_numbers<[1], [0], [0], [1], [0, 0, 1, 1], [], []>} : vector<8x16xf32>, vector<16x120xf32>, vector<8x120xf32> -> vector<8x120xf32>
    %102 = arith.addf %96, %101 : vector<8x120xf32>
    %103 = vector.extract_strided_slice %11 {offsets = [15, 0, 0], sizes = [1, 8, 16], strides = [1, 1, 1]} : vector<25x8x16xf32> to vector<1x8x16xf32>
    %104 = vector.shape_cast %103 : vector<1x8x16xf32> to vector<8x16xf32>
    %c15 = arith.constant 15 : index
    %c0_56 = arith.constant 0 : index
    %c0_57 = arith.constant 0 : index
    %105 = vector.load %arg4[%c15, %c0_56, %c0_57] : memref<25x16x120xf32, #tpu.memory_space<vmem>>, vector<1x16x120xf32>
    %106 = vector.shape_cast %105 : vector<1x16x120xf32> to vector<16x120xf32>
    %cst_58 = arith.constant dense<0.000000e+00> : vector<8x120xf32>
    %107 = tpu.matmul %104, %106, %cst_58 {dimension_numbers = #tpu.dot_dimension_numbers<[1], [0], [0], [1], [0, 0, 1, 1], [], []>} : vector<8x16xf32>, vector<16x120xf32>, vector<8x120xf32> -> vector<8x120xf32>
    %108 = arith.addf %102, %107 : vector<8x120xf32>
    %109 = vector.extract_strided_slice %11 {offsets = [16, 0, 0], sizes = [1, 8, 16], strides = [1, 1, 1]} : vector<25x8x16xf32> to vector<1x8x16xf32>
    %110 = vector.shape_cast %109 : vector<1x8x16xf32> to vector<8x16xf32>
    %c16 = arith.constant 16 : index
    %c0_59 = arith.constant 0 : index
    %c0_60 = arith.constant 0 : index
    %111 = vector.load %arg4[%c16, %c0_59, %c0_60] : memref<25x16x120xf32, #tpu.memory_space<vmem>>, vector<1x16x120xf32>
    %112 = vector.shape_cast %111 : vector<1x16x120xf32> to vector<16x120xf32>
    %cst_61 = arith.constant dense<0.000000e+00> : vector<8x120xf32>
    %113 = tpu.matmul %110, %112, %cst_61 {dimension_numbers = #tpu.dot_dimension_numbers<[1], [0], [0], [1], [0, 0, 1, 1], [], []>} : vector<8x16xf32>, vector<16x120xf32>, vector<8x120xf32> -> vector<8x120xf32>
    %114 = arith.addf %108, %113 : vector<8x120xf32>
    %115 = vector.extract_strided_slice %11 {offsets = [17, 0, 0], sizes = [1, 8, 16], strides = [1, 1, 1]} : vector<25x8x16xf32> to vector<1x8x16xf32>
    %116 = vector.shape_cast %115 : vector<1x8x16xf32> to vector<8x16xf32>
    %c17 = arith.constant 17 : index
    %c0_62 = arith.constant 0 : index
    %c0_63 = arith.constant 0 : index
    %117 = vector.load %arg4[%c17, %c0_62, %c0_63] : memref<25x16x120xf32, #tpu.memory_space<vmem>>, vector<1x16x120xf32>
    %118 = vector.shape_cast %117 : vector<1x16x120xf32> to vector<16x120xf32>
    %cst_64 = arith.constant dense<0.000000e+00> : vector<8x120xf32>
    %119 = tpu.matmul %116, %118, %cst_64 {dimension_numbers = #tpu.dot_dimension_numbers<[1], [0], [0], [1], [0, 0, 1, 1], [], []>} : vector<8x16xf32>, vector<16x120xf32>, vector<8x120xf32> -> vector<8x120xf32>
    %120 = arith.addf %114, %119 : vector<8x120xf32>
    %121 = vector.extract_strided_slice %11 {offsets = [18, 0, 0], sizes = [1, 8, 16], strides = [1, 1, 1]} : vector<25x8x16xf32> to vector<1x8x16xf32>
    %122 = vector.shape_cast %121 : vector<1x8x16xf32> to vector<8x16xf32>
    %c18 = arith.constant 18 : index
    %c0_65 = arith.constant 0 : index
    %c0_66 = arith.constant 0 : index
    %123 = vector.load %arg4[%c18, %c0_65, %c0_66] : memref<25x16x120xf32, #tpu.memory_space<vmem>>, vector<1x16x120xf32>
    %124 = vector.shape_cast %123 : vector<1x16x120xf32> to vector<16x120xf32>
    %cst_67 = arith.constant dense<0.000000e+00> : vector<8x120xf32>
    %125 = tpu.matmul %122, %124, %cst_67 {dimension_numbers = #tpu.dot_dimension_numbers<[1], [0], [0], [1], [0, 0, 1, 1], [], []>} : vector<8x16xf32>, vector<16x120xf32>, vector<8x120xf32> -> vector<8x120xf32>
    %126 = arith.addf %120, %125 : vector<8x120xf32>
    %127 = vector.extract_strided_slice %11 {offsets = [19, 0, 0], sizes = [1, 8, 16], strides = [1, 1, 1]} : vector<25x8x16xf32> to vector<1x8x16xf32>
    %128 = vector.shape_cast %127 : vector<1x8x16xf32> to vector<8x16xf32>
    %c19 = arith.constant 19 : index
    %c0_68 = arith.constant 0 : index
    %c0_69 = arith.constant 0 : index
    %129 = vector.load %arg4[%c19, %c0_68, %c0_69] : memref<25x16x120xf32, #tpu.memory_space<vmem>>, vector<1x16x120xf32>
    %130 = vector.shape_cast %129 : vector<1x16x120xf32> to vector<16x120xf32>
    %cst_70 = arith.constant dense<0.000000e+00> : vector<8x120xf32>
    %131 = tpu.matmul %128, %130, %cst_70 {dimension_numbers = #tpu.dot_dimension_numbers<[1], [0], [0], [1], [0, 0, 1, 1], [], []>} : vector<8x16xf32>, vector<16x120xf32>, vector<8x120xf32> -> vector<8x120xf32>
    %132 = arith.addf %126, %131 : vector<8x120xf32>
    %133 = vector.extract_strided_slice %11 {offsets = [20, 0, 0], sizes = [1, 8, 16], strides = [1, 1, 1]} : vector<25x8x16xf32> to vector<1x8x16xf32>
    %134 = vector.shape_cast %133 : vector<1x8x16xf32> to vector<8x16xf32>
    %c20 = arith.constant 20 : index
    %c0_71 = arith.constant 0 : index
    %c0_72 = arith.constant 0 : index
    %135 = vector.load %arg4[%c20, %c0_71, %c0_72] : memref<25x16x120xf32, #tpu.memory_space<vmem>>, vector<1x16x120xf32>
    %136 = vector.shape_cast %135 : vector<1x16x120xf32> to vector<16x120xf32>
    %cst_73 = arith.constant dense<0.000000e+00> : vector<8x120xf32>
    %137 = tpu.matmul %134, %136, %cst_73 {dimension_numbers = #tpu.dot_dimension_numbers<[1], [0], [0], [1], [0, 0, 1, 1], [], []>} : vector<8x16xf32>, vector<16x120xf32>, vector<8x120xf32> -> vector<8x120xf32>
    %138 = arith.addf %132, %137 : vector<8x120xf32>
    %139 = vector.extract_strided_slice %11 {offsets = [21, 0, 0], sizes = [1, 8, 16], strides = [1, 1, 1]} : vector<25x8x16xf32> to vector<1x8x16xf32>
    %140 = vector.shape_cast %139 : vector<1x8x16xf32> to vector<8x16xf32>
    %c21 = arith.constant 21 : index
    %c0_74 = arith.constant 0 : index
    %c0_75 = arith.constant 0 : index
    %141 = vector.load %arg4[%c21, %c0_74, %c0_75] : memref<25x16x120xf32, #tpu.memory_space<vmem>>, vector<1x16x120xf32>
    %142 = vector.shape_cast %141 : vector<1x16x120xf32> to vector<16x120xf32>
    %cst_76 = arith.constant dense<0.000000e+00> : vector<8x120xf32>
    %143 = tpu.matmul %140, %142, %cst_76 {dimension_numbers = #tpu.dot_dimension_numbers<[1], [0], [0], [1], [0, 0, 1, 1], [], []>} : vector<8x16xf32>, vector<16x120xf32>, vector<8x120xf32> -> vector<8x120xf32>
    %144 = arith.addf %138, %143 : vector<8x120xf32>
    %145 = vector.extract_strided_slice %11 {offsets = [22, 0, 0], sizes = [1, 8, 16], strides = [1, 1, 1]} : vector<25x8x16xf32> to vector<1x8x16xf32>
    %146 = vector.shape_cast %145 : vector<1x8x16xf32> to vector<8x16xf32>
    %c22 = arith.constant 22 : index
    %c0_77 = arith.constant 0 : index
    %c0_78 = arith.constant 0 : index
    %147 = vector.load %arg4[%c22, %c0_77, %c0_78] : memref<25x16x120xf32, #tpu.memory_space<vmem>>, vector<1x16x120xf32>
    %148 = vector.shape_cast %147 : vector<1x16x120xf32> to vector<16x120xf32>
    %cst_79 = arith.constant dense<0.000000e+00> : vector<8x120xf32>
    %149 = tpu.matmul %146, %148, %cst_79 {dimension_numbers = #tpu.dot_dimension_numbers<[1], [0], [0], [1], [0, 0, 1, 1], [], []>} : vector<8x16xf32>, vector<16x120xf32>, vector<8x120xf32> -> vector<8x120xf32>
    %150 = arith.addf %144, %149 : vector<8x120xf32>
    %151 = vector.extract_strided_slice %11 {offsets = [23, 0, 0], sizes = [1, 8, 16], strides = [1, 1, 1]} : vector<25x8x16xf32> to vector<1x8x16xf32>
    %152 = vector.shape_cast %151 : vector<1x8x16xf32> to vector<8x16xf32>
    %c23 = arith.constant 23 : index
    %c0_80 = arith.constant 0 : index
    %c0_81 = arith.constant 0 : index
    %153 = vector.load %arg4[%c23, %c0_80, %c0_81] : memref<25x16x120xf32, #tpu.memory_space<vmem>>, vector<1x16x120xf32>
    %154 = vector.shape_cast %153 : vector<1x16x120xf32> to vector<16x120xf32>
    %cst_82 = arith.constant dense<0.000000e+00> : vector<8x120xf32>
    %155 = tpu.matmul %152, %154, %cst_82 {dimension_numbers = #tpu.dot_dimension_numbers<[1], [0], [0], [1], [0, 0, 1, 1], [], []>} : vector<8x16xf32>, vector<16x120xf32>, vector<8x120xf32> -> vector<8x120xf32>
    %156 = arith.addf %150, %155 : vector<8x120xf32>
    %157 = vector.extract_strided_slice %11 {offsets = [24, 0, 0], sizes = [1, 8, 16], strides = [1, 1, 1]} : vector<25x8x16xf32> to vector<1x8x16xf32>
    %158 = vector.shape_cast %157 : vector<1x8x16xf32> to vector<8x16xf32>
    %c24 = arith.constant 24 : index
    %c0_83 = arith.constant 0 : index
    %c0_84 = arith.constant 0 : index
    %159 = vector.load %arg4[%c24, %c0_83, %c0_84] : memref<25x16x120xf32, #tpu.memory_space<vmem>>, vector<1x16x120xf32>
    %160 = vector.shape_cast %159 : vector<1x16x120xf32> to vector<16x120xf32>
    %cst_85 = arith.constant dense<0.000000e+00> : vector<8x120xf32>
    %161 = tpu.matmul %158, %160, %cst_85 {dimension_numbers = #tpu.dot_dimension_numbers<[1], [0], [0], [1], [0, 0, 1, 1], [], []>} : vector<8x16xf32>, vector<16x120xf32>, vector<8x120xf32> -> vector<8x120xf32>
    %162 = arith.addf %156, %161 : vector<8x120xf32>
    %c0_86 = arith.constant 0 : index
    %c0_87 = arith.constant 0 : index
    %163 = vector.load %arg5[%c0_86, %c0_87] : memref<1x120xf32, #tpu.memory_space<vmem>>, vector<1x120xf32>
    %164 = vector.broadcast %163 : vector<1x120xf32> to vector<8x120xf32>
    %165 = arith.addf %162, %164 : vector<8x120xf32>
    %cst_88 = arith.constant 0.000000e+00 : f32
    %166 = vector.broadcast %cst_88 : f32 to vector<8x120xf32>
    %167 = arith.maximumf %165, %166 : vector<8x120xf32>
    %c0_89 = arith.constant 0 : index
    %c0_90 = arith.constant 0 : index
    %168 = vector.load %arg6[%c0_89, %c0_90] : memref<120x84xf32, #tpu.memory_space<vmem>>, vector<120x84xf32>
    %cst_91 = arith.constant dense<0.000000e+00> : vector<8x84xf32>
    %169 = tpu.matmul %167, %168, %cst_91 {dimension_numbers = #tpu.dot_dimension_numbers<[1], [0], [0], [1], [0, 0, 1, 1], [], []>} : vector<8x120xf32>, vector<120x84xf32>, vector<8x84xf32> -> vector<8x84xf32>
    %c0_92 = arith.constant 0 : index
    %c0_93 = arith.constant 0 : index
    %170 = vector.load %arg7[%c0_92, %c0_93] : memref<1x84xf32, #tpu.memory_space<vmem>>, vector<1x84xf32>
    %171 = vector.broadcast %170 : vector<1x84xf32> to vector<8x84xf32>
    %172 = arith.addf %169, %171 : vector<8x84xf32>
    %cst_94 = arith.constant 0.000000e+00 : f32
    %173 = vector.broadcast %cst_94 : f32 to vector<8x84xf32>
    %174 = arith.maximumf %172, %173 : vector<8x84xf32>
    %c0_95 = arith.constant 0 : index
    %c0_96 = arith.constant 0 : index
    %175 = vector.load %arg8[%c0_95, %c0_96] : memref<84x128xf32, #tpu.memory_space<vmem>>, vector<84x128xf32>
    %cst_97 = arith.constant dense<0.000000e+00> : vector<8x128xf32>
    %176 = tpu.matmul %174, %175, %cst_97 {dimension_numbers = #tpu.dot_dimension_numbers<[1], [0], [0], [1], [0, 0, 1, 1], [], []>} : vector<8x84xf32>, vector<84x128xf32>, vector<8x128xf32> -> vector<8x128xf32>
    %c0_98 = arith.constant 0 : index
    %c0_99 = arith.constant 0 : index
    %177 = vector.load %arg9[%c0_98, %c0_99] : memref<1x128xf32, #tpu.memory_space<vmem>>, vector<1x128xf32>
    %178 = vector.broadcast %177 : vector<1x128xf32> to vector<8x128xf32>
    %179 = arith.addf %176, %178 : vector<8x128xf32>
    %c0_100 = arith.constant 0 : index
    %c0_101 = arith.constant 0 : index
    %180 = vector.load %arg10[%c0_100, %c0_101] : memref<8x128xf32, #tpu.memory_space<vmem>>, vector<8x128xf32>
    tpu.vector_store %arg10[%c0_100, %c0_101], %179 {strides = array<i32>} : memref<8x128xf32, #tpu.memory_space<vmem>>, vector<8x128xf32>,
    return
  }
  func.func @transform_0(%arg0: i32) -> (i32, i32, i32, i32) {
    %c0_i32 = arith.constant 0 : i32
    %c0_i32_0 = arith.constant 0 : i32
    %c0_i32_1 = arith.constant 0 : i32
    %c0_i32_2 = arith.constant 0 : i32
    return %c0_i32, %c0_i32_0, %arg0, %c0_i32_1 : i32, i32, i32, i32
  }
  func.func @transform_1(%arg0: i32) -> (i32, i32) {
    %c0_i32 = arith.constant 0 : i32
    %c0_i32_0 = arith.constant 0 : i32
    %c0_i32_1 = arith.constant 0 : i32
    return %c0_i32, %c0_i32_0 : i32, i32
  }
  func.func @transform_2(%arg0: i32) -> (i32, i32) {
    %c0_i32 = arith.constant 0 : i32
    %c0_i32_0 = arith.constant 0 : i32
    %c0_i32_1 = arith.constant 0 : i32
    return %c0_i32, %c0_i32_0 : i32, i32
  }
  func.func @transform_3(%arg0: i32) -> (i32, i32, i32) {
    %c0_i32 = arith.constant 0 : i32
    %c0_i32_0 = arith.constant 0 : i32
    %c0_i32_1 = arith.constant 0 : i32
    %c0_i32_2 = arith.constant 0 : i32
    return %c0_i32, %c0_i32_0, %c0_i32_1 : i32, i32, i32
  }
  func.func @transform_4(%arg0: i32) -> (i32, i32) {
    %c0_i32 = arith.constant 0 : i32
    %c0_i32_0 = arith.constant 0 : i32
    %c0_i32_1 = arith.constant 0 : i32
    return %c0_i32, %c0_i32_0 : i32, i32
  }
  func.func @transform_5(%arg0: i32) -> (i32, i32) {
    %c0_i32 = arith.constant 0 : i32
    %c0_i32_0 = arith.constant 0 : i32
    %c0_i32_1 = arith.constant 0 : i32
    return %c0_i32, %c0_i32_0 : i32, i32
  }
  func.func @transform_6(%arg0: i32) -> (i32, i32) {
    %c0_i32 = arith.constant 0 : i32
    %c0_i32_0 = arith.constant 0 : i32
    %c0_i32_1 = arith.constant 0 : i32
    return %c0_i32, %c0_i32_0 : i32, i32
  }
  func.func @transform_7(%arg0: i32) -> (i32, i32) {
    %c0_i32 = arith.constant 0 : i32
    %c0_i32_0 = arith.constant 0 : i32
    %c0_i32_1 = arith.constant 0 : i32
    return %c0_i32, %c0_i32_0 : i32, i32
  }
  func.func @transform_8(%arg0: i32) -> (i32, i32) {
    %c0_i32 = arith.constant 0 : i32
    %c0_i32_0 = arith.constant 0 : i32
    %c0_i32_1 = arith.constant 0 : i32
    return %c0_i32, %c0_i32_0 : i32, i32
  }
  func.func @transform_9(%arg0: i32) -> (i32, i32) {
    %c0_i32 = arith.constant 0 : i32
    %c0_i32_0 = arith.constant 0 : i32
    return %arg0, %c0_i32 : i32, i32
  }
}

</mosaic_0001>

<llo_original>
// kernel: conv_cifar_forward.2
$region0: #{conv_cifar_forward.2}
  #allocation0 [shape = 'u32[]', space=smem, size = 0x4, offset = 0x4, fixed_abs, tag = 'smem constant byte address 0x4 - core index']
  #allocation1 [shape = 'u32[144,128]{1,0:T(1,128)}', space=vmem, size = 0x12000, scoped, tag = 'internal scratch']
  %s0 = inlined_call_operand.vmem [shape: f32[4,392,75], index: 0, kind: input, shape index: {}]
  %s1 = inlined_call_operand.vmem [shape: f32[75,6], index: 1, kind: input, shape index: {}]
  %s2 = inlined_call_operand.vmem [shape: f32[1,6], index: 2, kind: input, shape index: {}]
  %s3 = inlined_call_operand.vmem [shape: f32[392,6], index: 3, kind: output, shape index: {}]
  %s4 = sld [smem:[#allocation0]]
  $region22: #{conv_cifar_forward.2} parent=0
    _
  %s6 = ssub.s32 1, %s4
  %s7 = scalar_select 0, %s6, %s4
  // Predicated region
  $region2: #{conv_cifar_forward.2} parent=0 // pred_check
    _
  $region3: #{conv_cifar_forward.2} parent=0 // pred_check_branch
    %9 = sbr.rel (0) target = $region5
  $region4: #{conv_cifar_forward.2} parent=0 // pred_region
    _
  $region5: #{conv_cifar_forward.2} parent=0 // pred_fallthru
    _
  // Predicated region
  $region6: #{conv_cifar_forward.2} parent=0 // pred_check
    _
  $region7: #{conv_cifar_forward.2} parent=0 // pred_check_branch
    %11 = sbr.rel (0) target = $region9
  $region8: #{conv_cifar_forward.2} parent=0 // pred_region
    _
  $region9: #{conv_cifar_forward.2} parent=0 // pred_fallthru
    _
  // Predicated region
  $region10: #{conv_cifar_forward.2} parent=0 // pred_check
    _
  $region11: #{conv_cifar_forward.2} parent=0 // pred_check_branch
    %13 = sbr.rel (0) target = $region13
  $region12: #{conv_cifar_forward.2} parent=0 // pred_region
    _
  $region13: #{conv_cifar_forward.2} parent=0 // pred_fallthru
    _
  %v14 = vld [vmem:[%s0] sm:$0xff]
  %v15 = vld [vmem:[%s0 + $0x8] sm:$0xff]
  %v16 = vld [vmem:[%s0 + $0x10] sm:$0xff]
  %v17 = vld [vmem:[%s0 + $0x18] sm:$0xff]
  %v18 = vld [vmem:[%s0 + $0x20] sm:$0xff]
  %v19 = vld [vmem:[%s0 + $0x28] sm:$0xff]
  %v20 = vld [vmem:[%s0 + $0x30] sm:$0xff]
  %v21 = vld [vmem:[%s0 + $0x38] sm:$0xff]
  %v22 = vld [vmem:[%s0 + $0x40] sm:$0xff]
  %v23 = vld [vmem:[%s0 + $0x48] sm:$0xff]
  %v24 = vld [vmem:[%s0 + $0x50] sm:$0xff]
  %v25 = vld [vmem:[%s0 + $0x58] sm:$0xff]
  %v26 = vld [vmem:[%s0 + $0x60] sm:$0xff]
  %v27 = vld [vmem:[%s0 + $0x68] sm:$0xff]
  %v28 = vld [vmem:[%s0 + $0x70] sm:$0xff]
  %v29 = vld [vmem:[%s0 + $0x78] sm:$0xff]
  %v30 = vld [vmem:[%s0 + $0x80] sm:$0xff]
  %v31 = vld [vmem:[%s0 + $0x88] sm:$0xff]
  %v32 = vld [vmem:[%s0 + $0x90] sm:$0xff]
  %v33 = vld [vmem:[%s0 + $0x98] sm:$0xff]
  %v34 = vld [vmem:[%s0 + $0xa0] sm:$0xff]
  %v35 = vld [vmem:[%s0 + $0xa8] sm:$0xff]
  %v36 = vld [vmem:[%s0 + $0xb0] sm:$0xff]
  %v37 = vld [vmem:[%s0 + $0xb8] sm:$0xff]
  %v38 = vld [vmem:[%s0 + $0xc0] sm:$0xff]
  %v39 = vld [vmem:[%s0 + $0xc8] sm:$0xff]
  %v40 = vld [vmem:[%s0 + $0xd0] sm:$0xff]
  %v41 = vld [vmem:[%s0 + $0xd8] sm:$0xff]
  %v42 = vld [vmem:[%s0 + $0xe0] sm:$0xff]
  %v43 = vld [vmem:[%s0 + $0xe8] sm:$0xff]
  %v44 = vld [vmem:[%s0 + $0xf0] sm:$0xff]
  %v45 = vld [vmem:[%s0 + $0xf8] sm:$0xff]
  %v46 = vld [vmem:[%s0 + $0x100] sm:$0xff]
  %v47 = vld [vmem:[%s0 + $0x108] sm:$0xff]
  %v48 = vld [vmem:[%s0 + $0x110] sm:$0xff]
  %v49 = vld [vmem:[%s0 + $0x118] sm:$0xff]
  %v50 = vld [vmem:[%s0 + $0x120] sm:$0xff]
  %v51 = vld [vmem:[%s0 + $0x128] sm:$0xff]
  %v52 = vld [vmem:[%s0 + $0x130] sm:$0xff]
  %v53 = vld [vmem:[%s0 + $0x138] sm:$0xff]
  %v54 = vld [vmem:[%s0 + $0x140] sm:$0xff]
  %v55 = vld [vmem:[%s0 + $0x148] sm:$0xff]
  %v56 = vld [vmem:[%s0 + $0x150] sm:$0xff]
  %v57 = vld [vmem:[%s0 + $0x158] sm:$0xff]
  %v58 = vld [vmem:[%s0 + $0x160] sm:$0xff]
  %v59 = vld [vmem:[%s0 + $0x168] sm:$0xff]
  %v60 = vld [vmem:[%s0 + $0x170] sm:$0xff]
  %v61 = vld [vmem:[%s0 + $0x178] sm:$0xff]
  %v62 = vld [vmem:[%s0 + $0x180] sm:$0xff]
  %v63 = vld [vmem:[%s0 + $0x188] sm:$0xff]
  %v64 = vld [vmem:[%s0 + $0x190] sm:$0xff]
  %v65 = vld [vmem:[%s0 + $0x198] sm:$0xff]
  %v66 = vld [vmem:[%s0 + $0x1a0] sm:$0xff]
  %v67 = vld [vmem:[%s0 + $0x1a8] sm:$0xff]
  %v68 = vld [vmem:[%s0 + $0x1b0] sm:$0xff]
  %v69 = vld [vmem:[%s0 + $0x1b8] sm:$0xff]
  %v70 = vld [vmem:[%s0 + $0x1c0] sm:$0xff]
  %v71 = vld [vmem:[%s0 + $0x1c8] sm:$0xff]
  %v72 = vld [vmem:[%s0 + $0x1d0] sm:$0xff]
  %v73 = vld [vmem:[%s0 + $0x1d8] sm:$0xff]
  %v74 = vld [vmem:[%s0 + $0x1e0] sm:$0xff]
  %v75 = vld [vmem:[%s0 + $0x1e8] sm:$0xff]
  %v76 = vld [vmem:[%s0 + $0x1f0] sm:$0xff]
  %v77 = vld [vmem:[%s0 + $0x1f8] sm:$0xff]
  %v78 = vld [vmem:[%s0 + $0x200] sm:$0xff]
  %v79 = vld [vmem:[%s0 + $0x208] sm:$0xff]
  %v80 = vld [vmem:[%s0 + $0x210] sm:$0xff]
  %v81 = vld [vmem:[%s0 + $0x218] sm:$0xff]
  %v82 = vld [vmem:[%s0 + $0x220] sm:$0xff]
  %v83 = vld [vmem:[%s0 + $0x228] sm:$0xff]
  %v84 = vld [vmem:[%s0 + $0x230] sm:$0xff]
  %v85 = vld [vmem:[%s0 + $0x238] sm:$0xff]
  %v86 = vld [vmem:[%s0 + $0x240] sm:$0xff]
  %v87 = vld [vmem:[%s0 + $0x248] sm:$0xff]
  %v88 = vld [vmem:[%s0 + $0x250] sm:$0xff]
  %v89 = vld [vmem:[%s0 + $0x258] sm:$0xff]
  %v90 = vld [vmem:[%s0 + $0x260] sm:$0xff]
  %v91 = vld [vmem:[%s0 + $0x268] sm:$0xff]
  %v92 = vld [vmem:[%s0 + $0x270] sm:$0xff]
  %v93 = vld [vmem:[%s0 + $0x278] sm:$0xff]
  %v94 = vld [vmem:[%s0 + $0x280] sm:$0xff]
  %v95 = vld [vmem:[%s0 + $0x288] sm:$0xff]
  %v96 = vld [vmem:[%s0 + $0x290] sm:$0xff]
  %v97 = vld [vmem:[%s0 + $0x298] sm:$0xff]
  %v98 = vld [vmem:[%s0 + $0x2a0] sm:$0xff]
  %v99 = vld [vmem:[%s0 + $0x2a8] sm:$0xff]
  %v100 = vld [vmem:[%s0 + $0x2b0] sm:$0xff]
  %v101 = vld [vmem:[%s0 + $0x2b8] sm:$0xff]
  %v102 = vld [vmem:[%s0 + $0x2c0] sm:$0xff]
  %v103 = vld [vmem:[%s0 + $0x2c8] sm:$0xff]
  %v104 = vld [vmem:[%s0 + $0x2d0] sm:$0xff]
  %v105 = vld [vmem:[%s0 + $0x2d8] sm:$0xff]
  %v106 = vld [vmem:[%s0 + $0x2e0] sm:$0xff]
  %v107 = vld [vmem:[%s0 + $0x2e8] sm:$0xff]
  %v108 = vld [vmem:[%s0 + $0x2f0] sm:$0xff]
  %v109 = vld [vmem:[%s0 + $0x2f8] sm:$0xff]
  %v110 = vld [vmem:[%s0 + $0x300] sm:$0xff]
  %v111 = vld [vmem:[%s0 + $0x308] sm:$0xff]
  %v112 = vld [vmem:[%s0 + $0x310] sm:$0xff]
  %v113 = vld [vmem:[%s0 + $0x318] sm:$0xff]
  %v114 = vld [vmem:[%s0 + $0x320] sm:$0xff]
  %v115 = vld [vmem:[%s0 + $0x328] sm:$0xff]
  %v116 = vld [vmem:[%s0 + $0x330] sm:$0xff]
  %v117 = vld [vmem:[%s0 + $0x338] sm:$0xff]
  %v118 = vld [vmem:[%s0 + $0x340] sm:$0xff]
  %v119 = vld [vmem:[%s0 + $0x348] sm:$0xff]
  %v120 = vld [vmem:[%s0 + $0x350] sm:$0xff]
  %v121 = vld [vmem:[%s0 + $0x358] sm:$0xff]
  %v122 = vld [vmem:[%s0 + $0x360] sm:$0xff]
  %v123 = vld [vmem:[%s0 + $0x368] sm:$0xff]
  %v124 = vld [vmem:[%s0 + $0x370] sm:$0xff]
  %v125 = vld [vmem:[%s0 + $0x378] sm:$0xff]
  %v126 = vld [vmem:[%s0 + $0x380] sm:$0xff]
  %v127 = vld [vmem:[%s0 + $0x388] sm:$0xff]
  %v128 = vld [vmem:[%s0 + $0x390] sm:$0xff]
  %v129 = vld [vmem:[%s0 + $0x398] sm:$0xff]
  %v130 = vld [vmem:[%s0 + $0x3a0] sm:$0xff]
  %v131 = vld [vmem:[%s0 + $0x3a8] sm:$0xff]
  %v132 = vld [vmem:[%s0 + $0x3b0] sm:$0xff]
  %v133 = vld [vmem:[%s0 + $0x3b8] sm:$0xff]
  %v134 = vld [vmem:[%s0 + $0x3c0] sm:$0xff]
  %v135 = vld [vmem:[%s0 + $0x3c8] sm:$0xff]
  %v136 = vld [vmem:[%s0 + $0x3d0] sm:$0xff]
  %v137 = vld [vmem:[%s0 + $0x3d8] sm:$0xff]
  %v138 = vld [vmem:[%s0 + $0x3e0] sm:$0xff]
  %v139 = vld [vmem:[%s0 + $0x3e8] sm:$0xff]
  %v140 = vld [vmem:[%s0 + $0x3f0] sm:$0xff]
  %v141 = vld [vmem:[%s0 + $0x3f8] sm:$0xff]
  %v142 = vld [vmem:[%s0 + $0x400] sm:$0xff]
  %v143 = vld [vmem:[%s0 + $0x408] sm:$0xff]
  %v144 = vld [vmem:[%s0 + $0x410] sm:$0xff]
  %v145 = vld [vmem:[%s0 + $0x418] sm:$0xff]
  %v146 = vld [vmem:[%s0 + $0x420] sm:$0xff]
  %v147 = vld [vmem:[%s0 + $0x428] sm:$0xff]
  %v148 = vld [vmem:[%s0 + $0x430] sm:$0xff]
  %v149 = vld [vmem:[%s0 + $0x438] sm:$0xff]
  %v150 = vld [vmem:[%s0 + $0x440] sm:$0xff]
  %v151 = vld [vmem:[%s0 + $0x448] sm:$0xff]
  %v152 = vld [vmem:[%s0 + $0x450] sm:$0xff]
  %v153 = vld [vmem:[%s0 + $0x458] sm:$0xff]
  %v154 = vld [vmem:[%s0 + $0x460] sm:$0xff]
  %v155 = vld [vmem:[%s0 + $0x468] sm:$0xff]
  %v156 = vld [vmem:[%s0 + $0x470] sm:$0xff]
  %v157 = vld [vmem:[%s0 + $0x478] sm:$0xff]
  %v158 = vld [vmem:[%s0 + $0x480] sm:$0xff]
  %v159 = vld [vmem:[%s0 + $0x488] sm:$0xff]
  %v160 = vld [vmem:[%s0 + $0x490] sm:$0xff]
  %v161 = vld [vmem:[%s0 + $0x498] sm:$0xff]
  %v162 = vld [vmem:[%s0 + $0x4a0] sm:$0xff]
  %v163 = vld [vmem:[%s0 + $0x4a8] sm:$0xff]
  %v164 = vld [vmem:[%s0 + $0x4b0] sm:$0xff]
  %v165 = vld [vmem:[%s0 + $0x4b8] sm:$0xff]
  %v166 = vld [vmem:[%s0 + $0x4c0] sm:$0xff]
  %v167 = vld [vmem:[%s0 + $0x4c8] sm:$0xff]
  %v168 = vld [vmem:[%s0 + $0x4d0] sm:$0xff]
  %v169 = vld [vmem:[%s0 + $0x4d8] sm:$0xff]
  %v170 = vld [vmem:[%s0 + $0x4e0] sm:$0xff]
  %v171 = vld [vmem:[%s0 + $0x4e8] sm:$0xff]
  %v172 = vld [vmem:[%s0 + $0x4f0] sm:$0xff]
  %v173 = vld [vmem:[%s0 + $0x4f8] sm:$0xff]
  %v174 = vld [vmem:[%s0 + $0x500] sm:$0xff]
  %v175 = vld [vmem:[%s0 + $0x508] sm:$0xff]
  %v176 = vld [vmem:[%s0 + $0x510] sm:$0xff]
  %v177 = vld [vmem:[%s0 + $0x518] sm:$0xff]
  %v178 = vld [vmem:[%s0 + $0x520] sm:$0xff]
  %v179 = vld [vmem:[%s0 + $0x528] sm:$0xff]
  %v180 = vld [vmem:[%s0 + $0x530] sm:$0xff]
  %v181 = vld [vmem:[%s0 + $0x538] sm:$0xff]
  %v182 = vld [vmem:[%s0 + $0x540] sm:$0xff]
  %v183 = vld [vmem:[%s0 + $0x548] sm:$0xff]
  %v184 = vld [vmem:[%s0 + $0x550] sm:$0xff]
  %v185 = vld [vmem:[%s0 + $0x558] sm:$0xff]
  %v186 = vld [vmem:[%s0 + $0x560] sm:$0xff]
  %v187 = vld [vmem:[%s0 + $0x568] sm:$0xff]
  %v188 = vld [vmem:[%s0 + $0x570] sm:$0xff]
  %v189 = vld [vmem:[%s0 + $0x578] sm:$0xff]
  %v190 = vld [vmem:[%s0 + $0x580] sm:$0xff]
  %v191 = vld [vmem:[%s0 + $0x588] sm:$0xff]
  %v192 = vld [vmem:[%s0 + $0x590] sm:$0xff]
  %v193 = vld [vmem:[%s0 + $0x598] sm:$0xff]
  %v194 = vld [vmem:[%s0 + $0x5a0] sm:$0xff]
  %v195 = vld [vmem:[%s0 + $0x5a8] sm:$0xff]
  %v196 = vld [vmem:[%s0 + $0x5b0] sm:$0xff]
  %v197 = vld [vmem:[%s0 + $0x5b8] sm:$0xff]
  %v198 = vld [vmem:[%s0 + $0x5c0] sm:$0xff]
  %v199 = vld [vmem:[%s0 + $0x5c8] sm:$0xff]
  %v200 = vld [vmem:[%s0 + $0x5d0] sm:$0xff]
  %v201 = vld [vmem:[%s0 + $0x5d8] sm:$0xff]
  %v202 = vld [vmem:[%s0 + $0x5e0] sm:$0xff]
  %v203 = vld [vmem:[%s0 + $0x5e8] sm:$0xff]
  %v204 = vld [vmem:[%s0 + $0x5f0] sm:$0xff]
  %v205 = vld [vmem:[%s0 + $0x5f8] sm:$0xff]
  %v206 = vld [vmem:[%s0 + $0x600] sm:$0xff]
  %v207 = vld [vmem:[%s0 + $0x608] sm:$0xff]
  %v208 = vld [vmem:[%s0 + $0x610] sm:$0xff]
  %v209 = vld [vmem:[%s0 + $0x618] sm:$0xff]
  %v210 = vld [vmem:[%s1] sm:$0xff]
  %v211 = vld [vmem:[%s1 + $0x8] sm:$0xff]
  %v212 = vld [vmem:[%s1 + $0x10] sm:$0xff]
  %v213 = vld [vmem:[%s1 + $0x18] sm:$0xff]
  %v214 = vld [vmem:[%s1 + $0x20] sm:$0xff]
  %v215 = vld [vmem:[%s1 + $0x28] sm:$0xff]
  %v216 = vld [vmem:[%s1 + $0x30] sm:$0xff]
  %v217 = vld [vmem:[%s1 + $0x38] sm:$0xff]
  %v218 = vld [vmem:[%s1 + $0x40] sm:$0xff]
  %v219 = vld [vmem:[%s1 + $0x48] sm:$0x7]
  %vm220 = vcmask 613376
  %v222 = vsel %vm220, %v14, 0
  %v225 = vsel %vm220, %v15, 0
  %v228 = vsel %vm220, %v16, 0
  %v231 = vsel %vm220, %v17, 0
  %v234 = vsel %vm220, %v18, 0
  %v237 = vsel %vm220, %v19, 0
  %v240 = vsel %vm220, %v20, 0
  %v243 = vsel %vm220, %v21, 0
  %v246 = vsel %vm220, %v22, 0
  %v249 = vsel %vm220, %v23, 0
  %v252 = vsel %vm220, %v24, 0
  %v255 = vsel %vm220, %v25, 0
  %v258 = vsel %vm220, %v26, 0
  %v261 = vsel %vm220, %v27, 0
  %v264 = vsel %vm220, %v28, 0
  %v267 = vsel %vm220, %v29, 0
  %v270 = vsel %vm220, %v30, 0
  %v273 = vsel %vm220, %v31, 0
  %v276 = vsel %vm220, %v32, 0
  %v279 = vsel %vm220, %v33, 0
  %v282 = vsel %vm220, %v34, 0
  %v285 = vsel %vm220, %v35, 0
  %v288 = vsel %vm220, %v36, 0
  %v291 = vsel %vm220, %v37, 0
  %v294 = vsel %vm220, %v38, 0
  %v297 = vsel %vm220, %v39, 0
  %v300 = vsel %vm220, %v40, 0
  %v303 = vsel %vm220, %v41, 0
  %v306 = vsel %vm220, %v42, 0
  %v309 = vsel %vm220, %v43, 0
  %v312 = vsel %vm220, %v44, 0
  %v315 = vsel %vm220, %v45, 0
  %v318 = vsel %vm220, %v46, 0
  %v321 = vsel %vm220, %v47, 0
  %v324 = vsel %vm220, %v48, 0
  %v327 = vsel %vm220, %v49, 0
  %v330 = vsel %vm220, %v50, 0
  %v333 = vsel %vm220, %v51, 0
  %v336 = vsel %vm220, %v52, 0
  %v339 = vsel %vm220, %v53, 0
  %v342 = vsel %vm220, %v54, 0
  %v345 = vsel %vm220, %v55, 0
  %v348 = vsel %vm220, %v56, 0
  %v351 = vsel %vm220, %v57, 0
  %v354 = vsel %vm220, %v58, 0
  %v357 = vsel %vm220, %v59, 0
  %v360 = vsel %vm220, %v60, 0
  %v363 = vsel %vm220, %v61, 0
  %v366 = vsel %vm220, %v62, 0
  %v369 = vsel %vm220, %v63, 0
  %v372 = vsel %vm220, %v64, 0
  %v375 = vsel %vm220, %v65, 0
  %v378 = vsel %vm220, %v66, 0
  %v381 = vsel %vm220, %v67, 0
  %v384 = vsel %vm220, %v68, 0
  %v387 = vsel %vm220, %v69, 0
  %v390 = vsel %vm220, %v70, 0
  %v393 = vsel %vm220, %v71, 0
  %v396 = vsel %vm220, %v72, 0
  %v399 = vsel %vm220, %v73, 0
  %v402 = vsel %vm220, %v74, 0
  %v405 = vsel %vm220, %v75, 0
  %v408 = vsel %vm220, %v76, 0
  %v411 = vsel %vm220, %v77, 0
  %v414 = vsel %vm220, %v78, 0
  %v417 = vsel %vm220, %v79, 0
  %v420 = vsel %vm220, %v80, 0
  %v423 = vsel %vm220, %v81, 0
  %v426 = vsel %vm220, %v82, 0
  %v429 = vsel %vm220, %v83, 0
  %v432 = vsel %vm220, %v84, 0
  %v435 = vsel %vm220, %v85, 0
  %v438 = vsel %vm220, %v86, 0
  %v441 = vsel %vm220, %v87, 0
  %v444 = vsel %vm220, %v88, 0
  %v447 = vsel %vm220, %v89, 0
  %v450 = vsel %vm220, %v90, 0
  %v453 = vsel %vm220, %v91, 0
  %v456 = vsel %vm220, %v92, 0
  %v459 = vsel %vm220, %v93, 0
  %v462 = vsel %vm220, %v94, 0
  %v465 = vsel %vm220, %v95, 0
  %v468 = vsel %vm220, %v96, 0
  %v471 = vsel %vm220, %v97, 0
  %v474 = vsel %vm220, %v98, 0
  %v477 = vsel %vm220, %v99, 0
  %v480 = vsel %vm220, %v100, 0
  %v483 = vsel %vm220, %v101, 0
  %v486 = vsel %vm220, %v102, 0
  %v489 = vsel %vm220, %v103, 0
  %v492 = vsel %vm220, %v104, 0
  %v495 = vsel %vm220, %v105, 0
  %v498 = vsel %vm220, %v106, 0
  %v501 = vsel %vm220, %v107, 0
  %v504 = vsel %vm220, %v108, 0
  %v507 = vsel %vm220, %v109, 0
  %v510 = vsel %vm220, %v110, 0
  %v513 = vsel %vm220, %v111, 0
  %v516 = vsel %vm220, %v112, 0
  %v519 = vsel %vm220, %v113, 0
  %v522 = vsel %vm220, %v114, 0
  %v525 = vsel %vm220, %v115, 0
  %v528 = vsel %vm220, %v116, 0
  %v531 = vsel %vm220, %v117, 0
  %v534 = vsel %vm220, %v118, 0
  %v537 = vsel %vm220, %v119, 0
  %v540 = vsel %vm220, %v120, 0
  %v543 = vsel %vm220, %v121, 0
  %v546 = vsel %vm220, %v122, 0
  %v549 = vsel %vm220, %v123, 0
  %v552 = vsel %vm220, %v124, 0
  %v555 = vsel %vm220, %v125, 0
  %v558 = vsel %vm220, %v126, 0
  %v561 = vsel %vm220, %v127, 0
  %v564 = vsel %vm220, %v128, 0
  %v567 = vsel %vm220, %v129, 0
  %v570 = vsel %vm220, %v130, 0
  %v573 = vsel %vm220, %v131, 0
  %v576 = vsel %vm220, %v132, 0
  %v579 = vsel %vm220, %v133, 0
  %v582 = vsel %vm220, %v134, 0
  %v585 = vsel %vm220, %v135, 0
  %v588 = vsel %vm220, %v136, 0
  %v591 = vsel %vm220, %v137, 0
  %v594 = vsel %vm220, %v138, 0
  %v597 = vsel %vm220, %v139, 0
  %v600 = vsel %vm220, %v140, 0
  %v603 = vsel %vm220, %v141, 0
  %v606 = vsel %vm220, %v142, 0
  %v609 = vsel %vm220, %v143, 0
  %v612 = vsel %vm220, %v144, 0
  %v615 = vsel %vm220, %v145, 0
  %v618 = vsel %vm220, %v146, 0
  %v621 = vsel %vm220, %v147, 0
  %v624 = vsel %vm220, %v148, 0
  %v627 = vsel %vm220, %v149, 0
  %v630 = vsel %vm220, %v150, 0
  %v633 = vsel %vm220, %v151, 0
  %v636 = vsel %vm220, %v152, 0
  %v639 = vsel %vm220, %v153, 0
  %v642 = vsel %vm220, %v154, 0
  %v645 = vsel %vm220, %v155, 0
  %v648 = vsel %vm220, %v156, 0
  %v651 = vsel %vm220, %v157, 0
  %v654 = vsel %vm220, %v158, 0
  %v657 = vsel %vm220, %v159, 0
  %v660 = vsel %vm220, %v160, 0
  %v663 = vsel %vm220, %v161, 0
  %v666 = vsel %vm220, %v162, 0
  %v669 = vsel %vm220, %v163, 0
  %v672 = vsel %vm220, %v164, 0
  %v675 = vsel %vm220, %v165, 0
  %v678 = vsel %vm220, %v166, 0
  %v681 = vsel %vm220, %v167, 0
  %v684 = vsel %vm220, %v168, 0
  %v687 = vsel %vm220, %v169, 0
  %v690 = vsel %vm220, %v170, 0
  %v693 = vsel %vm220, %v171, 0
  %v696 = vsel %vm220, %v172, 0
  %v699 = vsel %vm220, %v173, 0
  %v702 = vsel %vm220, %v174, 0
  %v705 = vsel %vm220, %v175, 0
  %v708 = vsel %vm220, %v176, 0
  %v711 = vsel %vm220, %v177, 0
  %v714 = vsel %vm220, %v178, 0
  %v717 = vsel %vm220, %v179, 0
  %v720 = vsel %vm220, %v180, 0
  %v723 = vsel %vm220, %v181, 0
  %v726 = vsel %vm220, %v182, 0
  %v729 = vsel %vm220, %v183, 0
  %v732 = vsel %vm220, %v184, 0
  %v735 = vsel %vm220, %v185, 0
  %v738 = vsel %vm220, %v186, 0
  %v741 = vsel %vm220, %v187, 0
  %v744 = vsel %vm220, %v188, 0
  %v747 = vsel %vm220, %v189, 0
  %v750 = vsel %vm220, %v190, 0
  %v753 = vsel %vm220, %v191, 0
  %v756 = vsel %vm220, %v192, 0
  %v759 = vsel %vm220, %v193, 0
  %v762 = vsel %vm220, %v194, 0
  %v765 = vsel %vm220, %v195, 0
  %v768 = vsel %vm220, %v196, 0
  %v771 = vsel %vm220, %v197, 0
  %v774 = vsel %vm220, %v198, 0
  %v777 = vsel %vm220, %v199, 0
  %v780 = vsel %vm220, %v200, 0
  %v783 = vsel %vm220, %v201, 0
  %v786 = vsel %vm220, %v202, 0
  %v789 = vsel %vm220, %v203, 0
  %v792 = vsel %vm220, %v204, 0
  %v795 = vsel %vm220, %v205, 0
  %v798 = vsel %vm220, %v206, 0
  %v801 = vsel %vm220, %v207, 0
  %v804 = vsel %vm220, %v208, 0
  %v807 = vsel %vm220, %v209, 0
  %vm809 = vcmask 1042432
  %v811 = vsel %vm809, %v219, 0
  %813 = vmatprep.subr.mxu0 0.0
  %814 = vmatpush1.msra.mxu0 0.0
  %815 = vmatprep.subr.mxu0 0.0
  %816 = vmatpush1.msra.mxu0 0.0
  %817 = vmatprep.subr.mxu0 0.0
  %818 = vmatpush1.msra.mxu0 0.0
  %819 = vmatprep.subr.mxu0 0.0
  %820 = vmatpush1.msra.mxu0 0.0
  %821 = vmatprep.subr.mxu0 0.0
  %822 = vmatpush1.msra.mxu0 0.0
  %823 = vmatprep.subr.mxu0 0.0
  %824 = vmatpush1.msra.mxu0 0.0
  %825 = vmatprep.subr.mxu0 0.0
  %826 = vmatpush1.msra.mxu0 %v811
  %827 = vmatprep.subr.mxu0 0.0
  %828 = vmatpush1.msra.mxu0 %v218
  %829 = vmatprep.subr.mxu0 0.0
  %830 = vmatpush1.msra.mxu0 %v217
  %831 = vmatprep.subr.mxu0 0.0
  %832 = vmatpush1.msra.mxu0 %v216
  %833 = vmatprep.subr.mxu0 0.0
  %834 = vmatpush1.msra.mxu0 %v215
  %835 = vmatprep.subr.mxu0 0.0
  %836 = vmatpush1.msra.mxu0 %v214
  %837 = vmatprep.subr.mxu0 0.0
  %838 = vmatpush1.msra.mxu0 %v213
  %839 = vmatprep.subr.mxu0 0.0
  %840 = vmatpush1.msra.mxu0 %v212
  %841 = vmatprep.subr.mxu0 0.0
  %842 = vmatpush1.msra.mxu0 %v211
  %843 = vmatprep.subr.mxu0 0.0
  %844 = vmatpush1.msra.mxu0 %v210
  %845 = vmatprep.subr.mxu0 0.0
  %846 = vmatpush2.msra.mxu0 0.0
  %847 = vmatprep.subr.mxu0 0.0
  %848 = vmatpush2.msra.mxu0 0.0
  %849 = vmatprep.subr.mxu0 0.0
  %850 = vmatpush2.msra.mxu0 0.0
  %851 = vmatprep.subr.mxu0 0.0
  %852 = vmatpush2.msra.mxu0 0.0
  %853 = vmatprep.subr.mxu0 0.0
  %854 = vmatpush2.msra.mxu0 0.0
  %855 = vmatprep.subr.mxu0 0.0
  %856 = vmatpush2.msra.mxu0 0.0
  %857 = vmatprep.subr.mxu0 0.0
  %858 = vmatpush2.msra.mxu0 0.0
  %859 = vmatprep.subr.mxu0 0.0
  %860 = vmatpush2.msra.mxu0 0.0
  %861 = vmatprep.subr.mxu0 0.0
  %862 = vmatpush2.msra.mxu0 0.0
  %863 = vmatprep.subr.mxu0 0.0
  %864 = vmatpush2.msra.mxu0 0.0
  %865 = vmatprep.subr.mxu0 0.0
  %866 = vmatpush2.msra.mxu0 0.0
  %867 = vmatprep.subr.mxu0 0.0
  %868 = vmatpush2.msra.mxu0 0.0
  %869 = vmatprep.subr.mxu0 0.0
  %870 = vmatpush2.msra.mxu0 0.0
  %871 = vmatprep.subr.mxu0 0.0
  %872 = vmatpush2.msra.mxu0 0.0
  %873 = vmatprep.subr.mxu0 0.0
  %874 = vmatpush2.msra.mxu0 0.0
  %875 = vmatprep.subr.mxu0 0.0
  %876 = vmatpush2.msra.mxu0 0.0
  %877 = vmatprep.mubr.f32.mxu0 0.0
  %878 = vmatmul.mubr.f32.gmra.mxu0 %v222
  %v879 = vpop.f32.mrf.mxu0
  %v880 = vadd.f32 0.0, %v879
  %v881 = vpop.f32.mrf.mxu0
  %882 = vmatprep.mubr.f32.mxu0 0.0
  %883 = vmatmul.mubr.f32.gmra.mxu0 %v225
  %v884 = vpop.f32.mrf.mxu0
  %v885 = vadd.f32 0.0, %v884
  %v886 = vpop.f32.mrf.mxu0
  %887 = vmatprep.mubr.f32.mxu0 0.0
  %888 = vmatmul.mubr.f32.gmra.mxu0 %v228
  %v889 = vpop.f32.mrf.mxu0
  %v890 = vadd.f32 0.0, %v889
  %v891 = vpop.f32.mrf.mxu0
  %892 = vmatprep.mubr.f32.mxu0 0.0
  %893 = vmatmul.mubr.f32.gmra.mxu0 %v231
  %v894 = vpop.f32.mrf.mxu0
  %v895 = vadd.f32 0.0, %v894
  %v896 = vpop.f32.mrf.mxu0
  %897 = vmatprep.mubr.f32.mxu0 0.0
  %898 = vmatmul.mubr.f32.gmra.mxu0 %v234
  %v899 = vpop.f32.mrf.mxu0
  %v900 = vadd.f32 0.0, %v899
  %v901 = vpop.f32.mrf.mxu0
  %902 = vmatprep.mubr.f32.mxu0 0.0
  %903 = vmatmul.mubr.f32.gmra.mxu0 %v237
  %v904 = vpop.f32.mrf.mxu0
  %v905 = vadd.f32 0.0, %v904
  %v906 = vpop.f32.mrf.mxu0
  %907 = vmatprep.mubr.f32.mxu0 0.0
  %908 = vmatmul.mubr.f32.gmra.mxu0 %v240
  %v909 = vpop.f32.mrf.mxu0
  %v910 = vadd.f32 0.0, %v909
  %v911 = vpop.f32.mrf.mxu0
  %912 = vmatprep.mubr.f32.mxu0 0.0
  %913 = vmatmul.mubr.f32.gmra.mxu0 %v243
  %v914 = vpop.f32.mrf.mxu0
  %v915 = vadd.f32 0.0, %v914
  %v916 = vpop.f32.mrf.mxu0
  %917 = vmatprep.mubr.f32.mxu0 0.0
  %918 = vmatmul.mubr.f32.gmra.mxu0 %v246
  %v919 = vpop.f32.mrf.mxu0
  %v920 = vadd.f32 0.0, %v919
  %v921 = vpop.f32.mrf.mxu0
  %922 = vmatprep.mubr.f32.mxu0 0.0
  %923 = vmatmul.mubr.f32.gmra.mxu0 %v249
  %v924 = vpop.f32.mrf.mxu0
  %v925 = vadd.f32 0.0, %v924
  %v926 = vpop.f32.mrf.mxu0
  %927 = vmatprep.mubr.f32.mxu0 0.0
  %928 = vmatmul.mubr.f32.gmra.mxu0 %v252
  %v929 = vpop.f32.mrf.mxu0
  %v930 = vadd.f32 0.0, %v929
  %v931 = vpop.f32.mrf.mxu0
  %932 = vmatprep.mubr.f32.mxu0 0.0
  %933 = vmatmul.mubr.f32.gmra.mxu0 %v255
  %v934 = vpop.f32.mrf.mxu0
  %v935 = vadd.f32 0.0, %v934
  %v936 = vpop.f32.mrf.mxu0
  %937 = vmatprep.mubr.f32.mxu0 0.0
  %938 = vmatmul.mubr.f32.gmra.mxu0 %v258
  %v939 = vpop.f32.mrf.mxu0
  %v940 = vadd.f32 0.0, %v939
  %v941 = vpop.f32.mrf.mxu0
  %942 = vmatprep.mubr.f32.mxu0 0.0
  %943 = vmatmul.mubr.f32.gmra.mxu0 %v261
  %v944 = vpop.f32.mrf.mxu0
  %v945 = vadd.f32 0.0, %v944
  %v946 = vpop.f32.mrf.mxu0
  %947 = vmatprep.mubr.f32.mxu0 0.0
  %948 = vmatmul.mubr.f32.gmra.mxu0 %v264
  %v949 = vpop.f32.mrf.mxu0
  %v950 = vadd.f32 0.0, %v949
  %v951 = vpop.f32.mrf.mxu0
  %952 = vmatprep.mubr.f32.mxu0 0.0
  %953 = vmatmul.mubr.f32.gmra.mxu0 %v267
  %v954 = vpop.f32.mrf.mxu0
  %v955 = vadd.f32 0.0, %v954
  %v956 = vpop.f32.mrf.mxu0
  %957 = vmatprep.mubr.f32.mxu0 0.0
  %958 = vmatmul.mubr.f32.gmra.mxu0 %v270
  %v959 = vpop.f32.mrf.mxu0
  %v960 = vadd.f32 0.0, %v959
  %v961 = vpop.f32.mrf.mxu0
  %962 = vmatprep.mubr.f32.mxu0 0.0
  %963 = vmatmul.mubr.f32.gmra.mxu0 %v273
  %v964 = vpop.f32.mrf.mxu0
  %v965 = vadd.f32 0.0, %v964
  %v966 = vpop.f32.mrf.mxu0
  %967 = vmatprep.mubr.f32.mxu0 0.0
  %968 = vmatmul.mubr.f32.gmra.mxu0 %v276
  %v969 = vpop.f32.mrf.mxu0
  %v970 = vadd.f32 0.0, %v969
  %v971 = vpop.f32.mrf.mxu0
  %972 = vmatprep.mubr.f32.mxu0 0.0
  %973 = vmatmul.mubr.f32.gmra.mxu0 %v279
  %v974 = vpop.f32.mrf.mxu0
  %v975 = vadd.f32 0.0, %v974
  %v976 = vpop.f32.mrf.mxu0
  %977 = vmatprep.mubr.f32.mxu0 0.0
  %978 = vmatmul.mubr.f32.gmra.mxu0 %v282
  %v979 = vpop.f32.mrf.mxu0
  %v980 = vadd.f32 0.0, %v979
  %v981 = vpop.f32.mrf.mxu0
  %982 = vmatprep.mubr.f32.mxu0 0.0
  %983 = vmatmul.mubr.f32.gmra.mxu0 %v285
  %v984 = vpop.f32.mrf.mxu0
  %v985 = vadd.f32 0.0, %v984
  %v986 = vpop.f32.mrf.mxu0
  %987 = vmatprep.mubr.f32.mxu0 0.0
  %988 = vmatmul.mubr.f32.gmra.mxu0 %v288
  %v989 = vpop.f32.mrf.mxu0
  %v990 = vadd.f32 0.0, %v989
  %v991 = vpop.f32.mrf.mxu0
  %992 = vmatprep.mubr.f32.mxu0 0.0
  %993 = vmatmul.mubr.f32.gmra.mxu0 %v291
  %v994 = vpop.f32.mrf.mxu0
  %v995 = vadd.f32 0.0, %v994
  %v996 = vpop.f32.mrf.mxu0
  %997 = vmatprep.mubr.f32.mxu0 0.0
  %998 = vmatmul.mubr.f32.gmra.mxu0 %v294
  %v999 = vpop.f32.mrf.mxu0
  %v1000 = vadd.f32 0.0, %v999
  %v1001 = vpop.f32.mrf.mxu0
  %1002 = vmatprep.mubr.f32.mxu0 0.0
  %1003 = vmatmul.mubr.f32.gmra.mxu0 %v297
  %v1004 = vpop.f32.mrf.mxu0
  %v1005 = vadd.f32 0.0, %v1004
  %v1006 = vpop.f32.mrf.mxu0
  %1007 = vmatprep.mubr.f32.mxu0 0.0
  %1008 = vmatmul.mubr.f32.gmra.mxu0 %v300
  %v1009 = vpop.f32.mrf.mxu0
  %v1010 = vadd.f32 0.0, %v1009
  %v1011 = vpop.f32.mrf.mxu0
  %1012 = vmatprep.mubr.f32.mxu0 0.0
  %1013 = vmatmul.mubr.f32.gmra.mxu0 %v303
  %v1014 = vpop.f32.mrf.mxu0
  %v1015 = vadd.f32 0.0, %v1014
  %v1016 = vpop.f32.mrf.mxu0
  %1017 = vmatprep.mubr.f32.mxu0 0.0
  %1018 = vmatmul.mubr.f32.gmra.mxu0 %v306
  %v1019 = vpop.f32.mrf.mxu0
  %v1020 = vadd.f32 0.0, %v1019
  %v1021 = vpop.f32.mrf.mxu0
  %1022 = vmatprep.mubr.f32.mxu0 0.0
  %1023 = vmatmul.mubr.f32.gmra.mxu0 %v309
  %v1024 = vpop.f32.mrf.mxu0
  %v1025 = vadd.f32 0.0, %v1024
  %v1026 = vpop.f32.mrf.mxu0
  %1027 = vmatprep.mubr.f32.mxu0 0.0
  %1028 = vmatmul.mubr.f32.gmra.mxu0 %v312
  %v1029 = vpop.f32.mrf.mxu0
  %v1030 = vadd.f32 0.0, %v1029
  %v1031 = vpop.f32.mrf.mxu0
  %1032 = vmatprep.mubr.f32.mxu0 0.0
  %1033 = vmatmul.mubr.f32.gmra.mxu0 %v315
  %v1034 = vpop.f32.mrf.mxu0
  %v1035 = vadd.f32 0.0, %v1034
  %v1036 = vpop.f32.mrf.mxu0
  %1037 = vmatprep.mubr.f32.mxu0 0.0
  %1038 = vmatmul.mubr.f32.gmra.mxu0 %v318
  %v1039 = vpop.f32.mrf.mxu0
  %v1040 = vadd.f32 0.0, %v1039
  %v1041 = vpop.f32.mrf.mxu0
  %1042 = vmatprep.mubr.f32.mxu0 0.0
  %1043 = vmatmul.mubr.f32.gmra.mxu0 %v321
  %v1044 = vpop.f32.mrf.mxu0
  %v1045 = vadd.f32 0.0, %v1044
  %v1046 = vpop.f32.mrf.mxu0
  %1047 = vmatprep.mubr.f32.mxu0 0.0
  %1048 = vmatmul.mubr.f32.gmra.mxu0 %v324
  %v1049 = vpop.f32.mrf.mxu0
  %v1050 = vadd.f32 0.0, %v1049
  %v1051 = vpop.f32.mrf.mxu0
  %1052 = vmatprep.mubr.f32.mxu0 0.0
  %1053 = vmatmul.mubr.f32.gmra.mxu0 %v327
  %v1054 = vpop.f32.mrf.mxu0
  %v1055 = vadd.f32 0.0, %v1054
  %v1056 = vpop.f32.mrf.mxu0
  %1057 = vmatprep.mubr.f32.mxu0 0.0
  %1058 = vmatmul.mubr.f32.gmra.mxu0 %v330
  %v1059 = vpop.f32.mrf.mxu0
  %v1060 = vadd.f32 0.0, %v1059
  %v1061 = vpop.f32.mrf.mxu0
  %1062 = vmatprep.mubr.f32.mxu0 0.0
  %1063 = vmatmul.mubr.f32.gmra.mxu0 %v333
  %v1064 = vpop.f32.mrf.mxu0
  %v1065 = vadd.f32 0.0, %v1064
  %v1066 = vpop.f32.mrf.mxu0
  %1067 = vmatprep.mubr.f32.mxu0 0.0
  %1068 = vmatmul.mubr.f32.gmra.mxu0 %v336
  %v1069 = vpop.f32.mrf.mxu0
  %v1070 = vadd.f32 0.0, %v1069
  %v1071 = vpop.f32.mrf.mxu0
  %1072 = vmatprep.mubr.f32.mxu0 0.0
  %1073 = vmatmul.mubr.f32.gmra.mxu0 %v339
  %v1074 = vpop.f32.mrf.mxu0
  %v1075 = vadd.f32 0.0, %v1074
  %v1076 = vpop.f32.mrf.mxu0
  %1077 = vmatprep.mubr.f32.mxu0 0.0
  %1078 = vmatmul.mubr.f32.gmra.mxu0 %v342
  %v1079 = vpop.f32.mrf.mxu0
  %v1080 = vadd.f32 0.0, %v1079
  %v1081 = vpop.f32.mrf.mxu0
  %1082 = vmatprep.mubr.f32.mxu0 0.0
  %1083 = vmatmul.mubr.f32.gmra.mxu0 %v345
  %v1084 = vpop.f32.mrf.mxu0
  %v1085 = vadd.f32 0.0, %v1084
  %v1086 = vpop.f32.mrf.mxu0
  %1087 = vmatprep.mubr.f32.mxu0 0.0
  %1088 = vmatmul.mubr.f32.gmra.mxu0 %v348
  %v1089 = vpop.f32.mrf.mxu0
  %v1090 = vadd.f32 0.0, %v1089
  %v1091 = vpop.f32.mrf.mxu0
  %1092 = vmatprep.mubr.f32.mxu0 0.0
  %1093 = vmatmul.mubr.f32.gmra.mxu0 %v351
  %v1094 = vpop.f32.mrf.mxu0
  %v1095 = vadd.f32 0.0, %v1094
  %v1096 = vpop.f32.mrf.mxu0
  %1097 = vmatprep.mubr.f32.mxu0 0.0
  %1098 = vmatmul.mubr.f32.gmra.mxu0 %v354
  %v1099 = vpop.f32.mrf.mxu0
  %v1100 = vadd.f32 0.0, %v1099
  %v1101 = vpop.f32.mrf.mxu0
  %1102 = vmatprep.mubr.f32.mxu0 0.0
  %1103 = vmatmul.mubr.f32.gmra.mxu0 %v357
  %v1104 = vpop.f32.mrf.mxu0
  %v1105 = vadd.f32 0.0, %v1104
  %v1106 = vpop.f32.mrf.mxu0
  %1107 = vmatprep.mubr.f32.mxu0 0.0
  %1108 = vmatmul.mubr.f32.gmra.mxu0 %v360
  %v1109 = vpop.f32.mrf.mxu0
  %v1110 = vadd.f32 0.0, %v1109
  %v1111 = vpop.f32.mrf.mxu0
  %1112 = vmatprep.mubr.f32.mxu0 0.0
  %1113 = vmatmul.mubr.f32.gmra.mxu0 %v363
  %v1114 = vpop.f32.mrf.mxu0
  %v1115 = vadd.f32 0.0, %v1114
  %v1116 = vpop.f32.mrf.mxu0
  %1117 = vmatprep.mubr.f32.mxu0 0.0
  %1118 = vmatmul.mubr.f32.gmra.mxu0 %v366
  %v1119 = vpop.f32.mrf.mxu0
  %v1120 = vadd.f32 0.0, %v1119
  %v1121 = vpop.f32.mrf.mxu0
  %1122 = vmatprep.mubr.f32.mxu0 0.0
  %1123 = vmatmul.mubr.f32.gmra.mxu0 %v369
  %v1124 = vpop.f32.mrf.mxu0
  %v1125 = vadd.f32 0.0, %v1124
  %v1126 = vpop.f32.mrf.mxu0
  %1127 = vmatprep.mubr.f32.mxu0 0.0
  %1128 = vmatmul.mubr.f32.gmra.mxu0 %v372
  %v1129 = vpop.f32.mrf.mxu0
  %v1130 = vadd.f32 0.0, %v1129
  %v1131 = vpop.f32.mrf.mxu0
  %1132 = vmatprep.mubr.f32.mxu0 0.0
  %1133 = vmatmul.mubr.f32.gmra.mxu0 %v375
  %v1134 = vpop.f32.mrf.mxu0
  %v1135 = vadd.f32 0.0, %v1134
  %v1136 = vpop.f32.mrf.mxu0
  %1137 = vmatprep.mubr.f32.mxu0 0.0
  %1138 = vmatmul.mubr.f32.gmra.mxu0 %v378
  %v1139 = vpop.f32.mrf.mxu0
  %v1140 = vadd.f32 0.0, %v1139
  %v1141 = vpop.f32.mrf.mxu0
  %1142 = vmatprep.mubr.f32.mxu0 0.0
  %1143 = vmatmul.mubr.f32.gmra.mxu0 %v381
  %v1144 = vpop.f32.mrf.mxu0
  %v1145 = vadd.f32 0.0, %v1144
  %v1146 = vpop.f32.mrf.mxu0
  %1147 = vmatprep.mubr.f32.mxu0 0.0
  %1148 = vmatmul.mubr.f32.gmra.mxu0 %v384
  %v1149 = vpop.f32.mrf.mxu0
  %v1150 = vadd.f32 0.0, %v1149
  %v1151 = vpop.f32.mrf.mxu0
  %1152 = vmatprep.mubr.f32.mxu0 0.0
  %1153 = vmatmul.mubr.f32.gmra.mxu0 %v387
  %v1154 = vpop.f32.mrf.mxu0
  %v1155 = vadd.f32 0.0, %v1154
  %v1156 = vpop.f32.mrf.mxu0
  %1157 = vmatprep.mubr.f32.mxu0 0.0
  %1158 = vmatmul.mubr.f32.gmra.mxu0 %v390
  %v1159 = vpop.f32.mrf.mxu0
  %v1160 = vadd.f32 0.0, %v1159
  %v1161 = vpop.f32.mrf.mxu0
  %1162 = vmatprep.mubr.f32.mxu0 0.0
  %1163 = vmatmul.mubr.f32.gmra.mxu0 %v393
  %v1164 = vpop.f32.mrf.mxu0
  %v1165 = vadd.f32 0.0, %v1164
  %v1166 = vpop.f32.mrf.mxu0
  %1167 = vmatprep.mubr.f32.mxu0 0.0
  %1168 = vmatmul.mubr.f32.gmra.mxu0 %v396
  %v1169 = vpop.f32.mrf.mxu0
  %v1170 = vadd.f32 0.0, %v1169
  %v1171 = vpop.f32.mrf.mxu0
  %1172 = vmatprep.mubr.f32.mxu0 0.0
  %1173 = vmatmul.mubr.f32.gmra.mxu0 %v399
  %v1174 = vpop.f32.mrf.mxu0
  %v1175 = vadd.f32 0.0, %v1174
  %v1176 = vpop.f32.mrf.mxu0
  %1177 = vmatprep.mubr.f32.mxu0 0.0
  %1178 = vmatmul.mubr.f32.gmra.mxu0 %v402
  %v1179 = vpop.f32.mrf.mxu0
  %v1180 = vadd.f32 0.0, %v1179
  %v1181 = vpop.f32.mrf.mxu0
  %1182 = vmatprep.mubr.f32.mxu0 0.0
  %1183 = vmatmul.mubr.f32.gmra.mxu0 %v405
  %v1184 = vpop.f32.mrf.mxu0
  %v1185 = vadd.f32 0.0, %v1184
  %v1186 = vpop.f32.mrf.mxu0
  %1187 = vmatprep.mubr.f32.mxu0 0.0
  %1188 = vmatmul.mubr.f32.gmra.mxu0 %v408
  %v1189 = vpop.f32.mrf.mxu0
  %v1190 = vadd.f32 0.0, %v1189
  %v1191 = vpop.f32.mrf.mxu0
  %1192 = vmatprep.mubr.f32.mxu0 0.0
  %1193 = vmatmul.mubr.f32.gmra.mxu0 %v411
  %v1194 = vpop.f32.mrf.mxu0
  %v1195 = vadd.f32 0.0, %v1194
  %v1196 = vpop.f32.mrf.mxu0
  %1197 = vmatprep.mubr.f32.mxu0 0.0
  %1198 = vmatmul.mubr.f32.gmra.mxu0 %v414
  %v1199 = vpop.f32.mrf.mxu0
  %v1200 = vadd.f32 0.0, %v1199
  %v1201 = vpop.f32.mrf.mxu0
  %1202 = vmatprep.mubr.f32.mxu0 0.0
  %1203 = vmatmul.mubr.f32.gmra.mxu0 %v417
  %v1204 = vpop.f32.mrf.mxu0
  %v1205 = vadd.f32 0.0, %v1204
  %v1206 = vpop.f32.mrf.mxu0
  %1207 = vmatprep.mubr.f32.mxu0 0.0
  %1208 = vmatmul.mubr.f32.gmra.mxu0 %v420
  %v1209 = vpop.f32.mrf.mxu0
  %v1210 = vadd.f32 0.0, %v1209
  %v1211 = vpop.f32.mrf.mxu0
  %1212 = vmatprep.mubr.f32.mxu0 0.0
  %1213 = vmatmul.mubr.f32.gmra.mxu0 %v423
  %v1214 = vpop.f32.mrf.mxu0
  %v1215 = vadd.f32 0.0, %v1214
  %v1216 = vpop.f32.mrf.mxu0
  %1217 = vmatprep.mubr.f32.mxu0 0.0
  %1218 = vmatmul.mubr.f32.gmra.mxu0 %v426
  %v1219 = vpop.f32.mrf.mxu0
  %v1220 = vadd.f32 0.0, %v1219
  %v1221 = vpop.f32.mrf.mxu0
  %1222 = vmatprep.mubr.f32.mxu0 0.0
  %1223 = vmatmul.mubr.f32.gmra.mxu0 %v429
  %v1224 = vpop.f32.mrf.mxu0
  %v1225 = vadd.f32 0.0, %v1224
  %v1226 = vpop.f32.mrf.mxu0
  %1227 = vmatprep.mubr.f32.mxu0 0.0
  %1228 = vmatmul.mubr.f32.gmra.mxu0 %v432
  %v1229 = vpop.f32.mrf.mxu0
  %v1230 = vadd.f32 0.0, %v1229
  %v1231 = vpop.f32.mrf.mxu0
  %1232 = vmatprep.mubr.f32.mxu0 0.0
  %1233 = vmatmul.mubr.f32.gmra.mxu0 %v435
  %v1234 = vpop.f32.mrf.mxu0
  %v1235 = vadd.f32 0.0, %v1234
  %v1236 = vpop.f32.mrf.mxu0
  %1237 = vmatprep.mubr.f32.mxu0 0.0
  %1238 = vmatmul.mubr.f32.gmra.mxu0 %v438
  %v1239 = vpop.f32.mrf.mxu0
  %v1240 = vadd.f32 0.0, %v1239
  %v1241 = vpop.f32.mrf.mxu0
  %1242 = vmatprep.mubr.f32.mxu0 0.0
  %1243 = vmatmul.mubr.f32.gmra.mxu0 %v441
  %v1244 = vpop.f32.mrf.mxu0
  %v1245 = vadd.f32 0.0, %v1244
  %v1246 = vpop.f32.mrf.mxu0
  %1247 = vmatprep.mubr.f32.mxu0 0.0
  %1248 = vmatmul.mubr.f32.gmra.mxu0 %v444
  %v1249 = vpop.f32.mrf.mxu0
  %v1250 = vadd.f32 0.0, %v1249
  %v1251 = vpop.f32.mrf.mxu0
  %1252 = vmatprep.mubr.f32.mxu0 0.0
  %1253 = vmatmul.mubr.f32.gmra.mxu0 %v447
  %v1254 = vpop.f32.mrf.mxu0
  %v1255 = vadd.f32 0.0, %v1254
  %v1256 = vpop.f32.mrf.mxu0
  %1257 = vmatprep.mubr.f32.mxu0 0.0
  %1258 = vmatmul.mubr.f32.gmra.mxu0 %v450
  %v1259 = vpop.f32.mrf.mxu0
  %v1260 = vadd.f32 0.0, %v1259
  %v1261 = vpop.f32.mrf.mxu0
  %1262 = vmatprep.mubr.f32.mxu0 0.0
  %1263 = vmatmul.mubr.f32.gmra.mxu0 %v453
  %v1264 = vpop.f32.mrf.mxu0
  %v1265 = vadd.f32 0.0, %v1264
  %v1266 = vpop.f32.mrf.mxu0
  %1267 = vmatprep.mubr.f32.mxu0 0.0
  %1268 = vmatmul.mubr.f32.gmra.mxu0 %v456
  %v1269 = vpop.f32.mrf.mxu0
  %v1270 = vadd.f32 0.0, %v1269
  %v1271 = vpop.f32.mrf.mxu0
  %1272 = vmatprep.mubr.f32.mxu0 0.0
  %1273 = vmatmul.mubr.f32.gmra.mxu0 %v459
  %v1274 = vpop.f32.mrf.mxu0
  %v1275 = vadd.f32 0.0, %v1274
  %v1276 = vpop.f32.mrf.mxu0
  %1277 = vmatprep.mubr.f32.mxu0 0.0
  %1278 = vmatmul.mubr.f32.gmra.mxu0 %v462
  %v1279 = vpop.f32.mrf.mxu0
  %v1280 = vadd.f32 0.0, %v1279
  %v1281 = vpop.f32.mrf.mxu0
  %1282 = vmatprep.mubr.f32.mxu0 0.0
  %1283 = vmatmul.mubr.f32.gmra.mxu0 %v465
  %v1284 = vpop.f32.mrf.mxu0
  %v1285 = vadd.f32 0.0, %v1284
  %v1286 = vpop.f32.mrf.mxu0
  %1287 = vmatprep.mubr.f32.mxu0 0.0
  %1288 = vmatmul.mubr.f32.gmra.mxu0 %v468
  %v1289 = vpop.f32.mrf.mxu0
  %v1290 = vadd.f32 0.0, %v1289
  %v1291 = vpop.f32.mrf.mxu0
  %1292 = vmatprep.mubr.f32.mxu0 0.0
  %1293 = vmatmul.mubr.f32.gmra.mxu0 %v471
  %v1294 = vpop.f32.mrf.mxu0
  %v1295 = vadd.f32 0.0, %v1294
  %v1296 = vpop.f32.mrf.mxu0
  %1297 = vmatprep.mubr.f32.mxu0 0.0
  %1298 = vmatmul.mubr.f32.gmra.mxu0 %v474
  %v1299 = vpop.f32.mrf.mxu0
  %v1300 = vadd.f32 0.0, %v1299
  %v1301 = vpop.f32.mrf.mxu0
  %1302 = vmatprep.mubr.f32.mxu0 0.0
  %1303 = vmatmul.mubr.f32.gmra.mxu0 %v477
  %v1304 = vpop.f32.mrf.mxu0
  %v1305 = vadd.f32 0.0, %v1304
  %v1306 = vpop.f32.mrf.mxu0
  %1307 = vmatprep.mubr.f32.mxu0 0.0
  %1308 = vmatmul.mubr.f32.gmra.mxu0 %v480
  %v1309 = vpop.f32.mrf.mxu0
  %v1310 = vadd.f32 0.0, %v1309
  %v1311 = vpop.f32.mrf.mxu0
  %1312 = vmatprep.mubr.f32.mxu0 0.0
  %1313 = vmatmul.mubr.f32.gmra.mxu0 %v483
  %v1314 = vpop.f32.mrf.mxu0
  %v1315 = vadd.f32 0.0, %v1314
  %v1316 = vpop.f32.mrf.mxu0
  %1317 = vmatprep.mubr.f32.mxu0 0.0
  %1318 = vmatmul.mubr.f32.gmra.mxu0 %v486
  %v1319 = vpop.f32.mrf.mxu0
  %v1320 = vadd.f32 0.0, %v1319
  %v1321 = vpop.f32.mrf.mxu0
  %1322 = vmatprep.mubr.f32.mxu0 0.0
  %1323 = vmatmul.mubr.f32.gmra.mxu0 %v489
  %v1324 = vpop.f32.mrf.mxu0
  %v1325 = vadd.f32 0.0, %v1324
  %v1326 = vpop.f32.mrf.mxu0
  %1327 = vmatprep.mubr.f32.mxu0 0.0
  %1328 = vmatmul.mubr.f32.gmra.mxu0 %v492
  %v1329 = vpop.f32.mrf.mxu0
  %v1330 = vadd.f32 0.0, %v1329
  %v1331 = vpop.f32.mrf.mxu0
  %1332 = vmatprep.mubr.f32.mxu0 0.0
  %1333 = vmatmul.mubr.f32.gmra.mxu0 %v495
  %v1334 = vpop.f32.mrf.mxu0
  %v1335 = vadd.f32 0.0, %v1334
  %v1336 = vpop.f32.mrf.mxu0
  %1337 = vmatprep.mubr.f32.mxu0 0.0
  %1338 = vmatmul.mubr.f32.gmra.mxu0 %v498
  %v1339 = vpop.f32.mrf.mxu0
  %v1340 = vadd.f32 0.0, %v1339
  %v1341 = vpop.f32.mrf.mxu0
  %1342 = vmatprep.mubr.f32.mxu0 0.0
  %1343 = vmatmul.mubr.f32.gmra.mxu0 %v501
  %v1344 = vpop.f32.mrf.mxu0
  %v1345 = vadd.f32 0.0, %v1344
  %v1346 = vpop.f32.mrf.mxu0
  %1347 = vmatprep.mubr.f32.mxu0 0.0
  %1348 = vmatmul.mubr.f32.gmra.mxu0 %v504
  %v1349 = vpop.f32.mrf.mxu0
  %v1350 = vadd.f32 0.0, %v1349
  %v1351 = vpop.f32.mrf.mxu0
  %1352 = vmatprep.mubr.f32.mxu0 0.0
  %1353 = vmatmul.mubr.f32.gmra.mxu0 %v507
  %v1354 = vpop.f32.mrf.mxu0
  %v1355 = vadd.f32 0.0, %v1354
  %v1356 = vpop.f32.mrf.mxu0
  %1357 = vmatprep.mubr.f32.mxu0 0.0
  %1358 = vmatmul.mubr.f32.gmra.mxu0 %v510
  %v1359 = vpop.f32.mrf.mxu0
  %v1360 = vadd.f32 0.0, %v1359
  %v1361 = vpop.f32.mrf.mxu0
  %1362 = vmatprep.mubr.f32.mxu0 0.0
  %1363 = vmatmul.mubr.f32.gmra.mxu0 %v513
  %v1364 = vpop.f32.mrf.mxu0
  %v1365 = vadd.f32 0.0, %v1364
  %v1366 = vpop.f32.mrf.mxu0
  %1367 = vmatprep.mubr.f32.mxu0 0.0
  %1368 = vmatmul.mubr.f32.gmra.mxu0 %v516
  %v1369 = vpop.f32.mrf.mxu0
  %v1370 = vadd.f32 0.0, %v1369
  %v1371 = vpop.f32.mrf.mxu0
  %1372 = vmatprep.mubr.f32.mxu0 0.0
  %1373 = vmatmul.mubr.f32.gmra.mxu0 %v519
  %v1374 = vpop.f32.mrf.mxu0
  %v1375 = vadd.f32 0.0, %v1374
  %v1376 = vpop.f32.mrf.mxu0
  %1377 = vmatprep.mubr.f32.mxu0 0.0
  %1378 = vmatmul.mubr.f32.gmra.mxu0 %v522
  %v1379 = vpop.f32.mrf.mxu0
  %v1380 = vadd.f32 0.0, %v1379
  %v1381 = vpop.f32.mrf.mxu0
  %1382 = vmatprep.mubr.f32.mxu0 0.0
  %1383 = vmatmul.mubr.f32.gmra.mxu0 %v525
  %v1384 = vpop.f32.mrf.mxu0
  %v1385 = vadd.f32 0.0, %v1384
  %v1386 = vpop.f32.mrf.mxu0
  %1387 = vmatprep.mubr.f32.mxu0 0.0
  %1388 = vmatmul.mubr.f32.gmra.mxu0 %v528
  %v1389 = vpop.f32.mrf.mxu0
  %v1390 = vadd.f32 0.0, %v1389
  %v1391 = vpop.f32.mrf.mxu0
  %1392 = vmatprep.mubr.f32.mxu0 0.0
  %1393 = vmatmul.mubr.f32.gmra.mxu0 %v531
  %v1394 = vpop.f32.mrf.mxu0
  %v1395 = vadd.f32 0.0, %v1394
  %v1396 = vpop.f32.mrf.mxu0
  %1397 = vmatprep.mubr.f32.mxu0 0.0
  %1398 = vmatmul.mubr.f32.gmra.mxu0 %v534
  %v1399 = vpop.f32.mrf.mxu0
  %v1400 = vadd.f32 0.0, %v1399
  %v1401 = vpop.f32.mrf.mxu0
  %1402 = vmatprep.mubr.f32.mxu0 0.0
  %1403 = vmatmul.mubr.f32.gmra.mxu0 %v537
  %v1404 = vpop.f32.mrf.mxu0
  %v1405 = vadd.f32 0.0, %v1404
  %v1406 = vpop.f32.mrf.mxu0
  %1407 = vmatprep.mubr.f32.mxu0 0.0
  %1408 = vmatmul.mubr.f32.gmra.mxu0 %v540
  %v1409 = vpop.f32.mrf.mxu0
  %v1410 = vadd.f32 0.0, %v1409
  %v1411 = vpop.f32.mrf.mxu0
  %1412 = vmatprep.mubr.f32.mxu0 0.0
  %1413 = vmatmul.mubr.f32.gmra.mxu0 %v543
  %v1414 = vpop.f32.mrf.mxu0
  %v1415 = vadd.f32 0.0, %v1414
  %v1416 = vpop.f32.mrf.mxu0
  %1417 = vmatprep.mubr.f32.mxu0 0.0
  %1418 = vmatmul.mubr.f32.gmra.mxu0 %v546
  %v1419 = vpop.f32.mrf.mxu0
  %v1420 = vadd.f32 0.0, %v1419
  %v1421 = vpop.f32.mrf.mxu0
  %1422 = vmatprep.mubr.f32.mxu0 0.0
  %1423 = vmatmul.mubr.f32.gmra.mxu0 %v549
  %v1424 = vpop.f32.mrf.mxu0
  %v1425 = vadd.f32 0.0, %v1424
  %v1426 = vpop.f32.mrf.mxu0
  %1427 = vmatprep.mubr.f32.mxu0 0.0
  %1428 = vmatmul.mubr.f32.gmra.mxu0 %v552
  %v1429 = vpop.f32.mrf.mxu0
  %v1430 = vadd.f32 0.0, %v1429
  %v1431 = vpop.f32.mrf.mxu0
  %1432 = vmatprep.mubr.f32.mxu0 0.0
  %1433 = vmatmul.mubr.f32.gmra.mxu0 %v555
  %v1434 = vpop.f32.mrf.mxu0
  %v1435 = vadd.f32 0.0, %v1434
  %v1436 = vpop.f32.mrf.mxu0
  %1437 = vmatprep.mubr.f32.mxu0 0.0
  %1438 = vmatmul.mubr.f32.gmra.mxu0 %v558
  %v1439 = vpop.f32.mrf.mxu0
  %v1440 = vadd.f32 0.0, %v1439
  %v1441 = vpop.f32.mrf.mxu0
  %1442 = vmatprep.mubr.f32.mxu0 0.0
  %1443 = vmatmul.mubr.f32.gmra.mxu0 %v561
  %v1444 = vpop.f32.mrf.mxu0
  %v1445 = vadd.f32 0.0, %v1444
  %v1446 = vpop.f32.mrf.mxu0
  %1447 = vmatprep.mubr.f32.mxu0 0.0
  %1448 = vmatmul.mubr.f32.gmra.mxu0 %v564
  %v1449 = vpop.f32.mrf.mxu0
  %v1450 = vadd.f32 0.0, %v1449
  %v1451 = vpop.f32.mrf.mxu0
  %1452 = vmatprep.mubr.f32.mxu0 0.0
  %1453 = vmatmul.mubr.f32.gmra.mxu0 %v567
  %v1454 = vpop.f32.mrf.mxu0
  %v1455 = vadd.f32 0.0, %v1454
  %v1456 = vpop.f32.mrf.mxu0
  %1457 = vmatprep.mubr.f32.mxu0 0.0
  %1458 = vmatmul.mubr.f32.gmra.mxu0 %v570
  %v1459 = vpop.f32.mrf.mxu0
  %v1460 = vadd.f32 0.0, %v1459
  %v1461 = vpop.f32.mrf.mxu0
  %1462 = vmatprep.mubr.f32.mxu0 0.0
  %1463 = vmatmul.mubr.f32.gmra.mxu0 %v573
  %v1464 = vpop.f32.mrf.mxu0
  %v1465 = vadd.f32 0.0, %v1464
  %v1466 = vpop.f32.mrf.mxu0
  %1467 = vmatprep.mubr.f32.mxu0 0.0
  %1468 = vmatmul.mubr.f32.gmra.mxu0 %v576
  %v1469 = vpop.f32.mrf.mxu0
  %v1470 = vadd.f32 0.0, %v1469
  %v1471 = vpop.f32.mrf.mxu0
  %1472 = vmatprep.mubr.f32.mxu0 0.0
  %1473 = vmatmul.mubr.f32.gmra.mxu0 %v579
  %v1474 = vpop.f32.mrf.mxu0
  %v1475 = vadd.f32 0.0, %v1474
  %v1476 = vpop.f32.mrf.mxu0
  %1477 = vmatprep.mubr.f32.mxu0 0.0
  %1478 = vmatmul.mubr.f32.gmra.mxu0 %v582
  %v1479 = vpop.f32.mrf.mxu0
  %v1480 = vadd.f32 0.0, %v1479
  %v1481 = vpop.f32.mrf.mxu0
  %1482 = vmatprep.mubr.f32.mxu0 0.0
  %1483 = vmatmul.mubr.f32.gmra.mxu0 %v585
  %v1484 = vpop.f32.mrf.mxu0
  %v1485 = vadd.f32 0.0, %v1484
  %v1486 = vpop.f32.mrf.mxu0
  %1487 = vmatprep.mubr.f32.mxu0 0.0
  %1488 = vmatmul.mubr.f32.gmra.mxu0 %v588
  %v1489 = vpop.f32.mrf.mxu0
  %v1490 = vadd.f32 0.0, %v1489
  %v1491 = vpop.f32.mrf.mxu0
  %1492 = vmatprep.mubr.f32.mxu0 0.0
  %1493 = vmatmul.mubr.f32.gmra.mxu0 %v591
  %v1494 = vpop.f32.mrf.mxu0
  %v1495 = vadd.f32 0.0, %v1494
  %v1496 = vpop.f32.mrf.mxu0
  %1497 = vmatprep.mubr.f32.mxu0 0.0
  %1498 = vmatmul.mubr.f32.gmra.mxu0 %v594
  %v1499 = vpop.f32.mrf.mxu0
  %v1500 = vadd.f32 0.0, %v1499
  %v1501 = vpop.f32.mrf.mxu0
  %1502 = vmatprep.mubr.f32.mxu0 0.0
  %1503 = vmatmul.mubr.f32.gmra.mxu0 %v597
  %v1504 = vpop.f32.mrf.mxu0
  %v1505 = vadd.f32 0.0, %v1504
  %v1506 = vpop.f32.mrf.mxu0
  %1507 = vmatprep.mubr.f32.mxu0 0.0
  %1508 = vmatmul.mubr.f32.gmra.mxu0 %v600
  %v1509 = vpop.f32.mrf.mxu0
  %v1510 = vadd.f32 0.0, %v1509
  %v1511 = vpop.f32.mrf.mxu0
  %1512 = vmatprep.mubr.f32.mxu0 0.0
  %1513 = vmatmul.mubr.f32.gmra.mxu0 %v603
  %v1514 = vpop.f32.mrf.mxu0
  %v1515 = vadd.f32 0.0, %v1514
  %v1516 = vpop.f32.mrf.mxu0
  %1517 = vmatprep.mubr.f32.mxu0 0.0
  %1518 = vmatmul.mubr.f32.gmra.mxu0 %v606
  %v1519 = vpop.f32.mrf.mxu0
  %v1520 = vadd.f32 0.0, %v1519
  %v1521 = vpop.f32.mrf.mxu0
  %1522 = vmatprep.mubr.f32.mxu0 0.0
  %1523 = vmatmul.mubr.f32.gmra.mxu0 %v609
  %v1524 = vpop.f32.mrf.mxu0
  %v1525 = vadd.f32 0.0, %v1524
  %v1526 = vpop.f32.mrf.mxu0
  %1527 = vmatprep.mubr.f32.mxu0 0.0
  %1528 = vmatmul.mubr.f32.gmra.mxu0 %v612
  %v1529 = vpop.f32.mrf.mxu0
  %v1530 = vadd.f32 0.0, %v1529
  %v1531 = vpop.f32.mrf.mxu0
  %1532 = vmatprep.mubr.f32.mxu0 0.0
  %1533 = vmatmul.mubr.f32.gmra.mxu0 %v615
  %v1534 = vpop.f32.mrf.mxu0
  %v1535 = vadd.f32 0.0, %v1534
  %v1536 = vpop.f32.mrf.mxu0
  %1537 = vmatprep.mubr.f32.mxu0 0.0
  %1538 = vmatmul.mubr.f32.gmra.mxu0 %v618
  %v1539 = vpop.f32.mrf.mxu0
  %v1540 = vadd.f32 0.0, %v1539
  %v1541 = vpop.f32.mrf.mxu0
  %1542 = vmatprep.mubr.f32.mxu0 0.0
  %1543 = vmatmul.mubr.f32.gmra.mxu0 %v621
  %v1544 = vpop.f32.mrf.mxu0
  %v1545 = vadd.f32 0.0, %v1544
  %v1546 = vpop.f32.mrf.mxu0
  %1547 = vmatprep.mubr.f32.mxu0 0.0
  %1548 = vmatmul.mubr.f32.gmra.mxu0 %v624
  %v1549 = vpop.f32.mrf.mxu0
  %v1550 = vadd.f32 0.0, %v1549
  %v1551 = vpop.f32.mrf.mxu0
  %1552 = vmatprep.mubr.f32.mxu0 0.0
  %1553 = vmatmul.mubr.f32.gmra.mxu0 %v627
  %v1554 = vpop.f32.mrf.mxu0
  %v1555 = vadd.f32 0.0, %v1554
  %v1556 = vpop.f32.mrf.mxu0
  %1557 = vmatprep.mubr.f32.mxu0 0.0
  %1558 = vmatmul.mubr.f32.gmra.mxu0 %v630
  %v1559 = vpop.f32.mrf.mxu0
  %v1560 = vadd.f32 0.0, %v1559
  %v1561 = vpop.f32.mrf.mxu0
  %1562 = vmatprep.mubr.f32.mxu0 0.0
  %1563 = vmatmul.mubr.f32.gmra.mxu0 %v633
  %v1564 = vpop.f32.mrf.mxu0
  %v1565 = vadd.f32 0.0, %v1564
  %v1566 = vpop.f32.mrf.mxu0
  %1567 = vmatprep.mubr.f32.mxu0 0.0
  %1568 = vmatmul.mubr.f32.gmra.mxu0 %v636
  %v1569 = vpop.f32.mrf.mxu0
  %v1570 = vadd.f32 0.0, %v1569
  %v1571 = vpop.f32.mrf.mxu0
  %1572 = vmatprep.mubr.f32.mxu0 0.0
  %1573 = vmatmul.mubr.f32.gmra.mxu0 %v639
  %v1574 = vpop.f32.mrf.mxu0
  %v1575 = vadd.f32 0.0, %v1574
  %v1576 = vpop.f32.mrf.mxu0
  %1577 = vmatprep.mubr.f32.mxu0 0.0
  %1578 = vmatmul.mubr.f32.gmra.mxu0 %v642
  %v1579 = vpop.f32.mrf.mxu0
  %v1580 = vadd.f32 0.0, %v1579
  %v1581 = vpop.f32.mrf.mxu0
  %1582 = vmatprep.mubr.f32.mxu0 0.0
  %1583 = vmatmul.mubr.f32.gmra.mxu0 %v645
  %v1584 = vpop.f32.mrf.mxu0
  %v1585 = vadd.f32 0.0, %v1584
  %v1586 = vpop.f32.mrf.mxu0
  %1587 = vmatprep.mubr.f32.mxu0 0.0
  %1588 = vmatmul.mubr.f32.gmra.mxu0 %v648
  %v1589 = vpop.f32.mrf.mxu0
  %v1590 = vadd.f32 0.0, %v1589
  %v1591 = vpop.f32.mrf.mxu0
  %1592 = vmatprep.mubr.f32.mxu0 0.0
  %1593 = vmatmul.mubr.f32.gmra.mxu0 %v651
  %v1594 = vpop.f32.mrf.mxu0
  %v1595 = vadd.f32 0.0, %v1594
  %v1596 = vpop.f32.mrf.mxu0
  %1597 = vmatprep.mubr.f32.mxu0 0.0
  %1598 = vmatmul.mubr.f32.gmra.mxu0 %v654
  %v1599 = vpop.f32.mrf.mxu0
  %v1600 = vadd.f32 0.0, %v1599
  %v1601 = vpop.f32.mrf.mxu0
  %1602 = vmatprep.mubr.f32.mxu0 0.0
  %1603 = vmatmul.mubr.f32.gmra.mxu0 %v657
  %v1604 = vpop.f32.mrf.mxu0
  %v1605 = vadd.f32 0.0, %v1604
  %v1606 = vpop.f32.mrf.mxu0
  %1607 = vmatprep.mubr.f32.mxu0 0.0
  %1608 = vmatmul.mubr.f32.gmra.mxu0 %v660
  %v1609 = vpop.f32.mrf.mxu0
  %v1610 = vadd.f32 0.0, %v1609
  %v1611 = vpop.f32.mrf.mxu0
  %1612 = vmatprep.mubr.f32.mxu0 0.0
  %1613 = vmatmul.mubr.f32.gmra.mxu0 %v663
  %v1614 = vpop.f32.mrf.mxu0
  %v1615 = vadd.f32 0.0, %v1614
  %v1616 = vpop.f32.mrf.mxu0
  %1617 = vmatprep.mubr.f32.mxu0 0.0
  %1618 = vmatmul.mubr.f32.gmra.mxu0 %v666
  %v1619 = vpop.f32.mrf.mxu0
  %v1620 = vadd.f32 0.0, %v1619
  %v1621 = vpop.f32.mrf.mxu0
  %1622 = vmatprep.mubr.f32.mxu0 0.0
  %1623 = vmatmul.mubr.f32.gmra.mxu0 %v669
  %v1624 = vpop.f32.mrf.mxu0
  %v1625 = vadd.f32 0.0, %v1624
  %v1626 = vpop.f32.mrf.mxu0
  %1627 = vmatprep.mubr.f32.mxu0 0.0
  %1628 = vmatmul.mubr.f32.gmra.mxu0 %v672
  %v1629 = vpop.f32.mrf.mxu0
  %v1630 = vadd.f32 0.0, %v1629
  %v1631 = vpop.f32.mrf.mxu0
  %1632 = vmatprep.mubr.f32.mxu0 0.0
  %1633 = vmatmul.mubr.f32.gmra.mxu0 %v675
  %v1634 = vpop.f32.mrf.mxu0
  %v1635 = vadd.f32 0.0, %v1634
  %v1636 = vpop.f32.mrf.mxu0
  %1637 = vmatprep.mubr.f32.mxu0 0.0
  %1638 = vmatmul.mubr.f32.gmra.mxu0 %v678
  %v1639 = vpop.f32.mrf.mxu0
  %v1640 = vadd.f32 0.0, %v1639
  %v1641 = vpop.f32.mrf.mxu0
  %1642 = vmatprep.mubr.f32.mxu0 0.0
  %1643 = vmatmul.mubr.f32.gmra.mxu0 %v681
  %v1644 = vpop.f32.mrf.mxu0
  %v1645 = vadd.f32 0.0, %v1644
  %v1646 = vpop.f32.mrf.mxu0
  %1647 = vmatprep.mubr.f32.mxu0 0.0
  %1648 = vmatmul.mubr.f32.gmra.mxu0 %v684
  %v1649 = vpop.f32.mrf.mxu0
  %v1650 = vadd.f32 0.0, %v1649
  %v1651 = vpop.f32.mrf.mxu0
  %1652 = vmatprep.mubr.f32.mxu0 0.0
  %1653 = vmatmul.mubr.f32.gmra.mxu0 %v687
  %v1654 = vpop.f32.mrf.mxu0
  %v1655 = vadd.f32 0.0, %v1654
  %v1656 = vpop.f32.mrf.mxu0
  %1657 = vmatprep.mubr.f32.mxu0 0.0
  %1658 = vmatmul.mubr.f32.gmra.mxu0 %v690
  %v1659 = vpop.f32.mrf.mxu0
  %v1660 = vadd.f32 0.0, %v1659
  %v1661 = vpop.f32.mrf.mxu0
  %1662 = vmatprep.mubr.f32.mxu0 0.0
  %1663 = vmatmul.mubr.f32.gmra.mxu0 %v693
  %v1664 = vpop.f32.mrf.mxu0
  %v1665 = vadd.f32 0.0, %v1664
  %v1666 = vpop.f32.mrf.mxu0
  %1667 = vmatprep.mubr.f32.mxu0 0.0
  %1668 = vmatmul.mubr.f32.gmra.mxu0 %v696
  %v1669 = vpop.f32.mrf.mxu0
  %v1670 = vadd.f32 0.0, %v1669
  %v1671 = vpop.f32.mrf.mxu0
  %1672 = vmatprep.mubr.f32.mxu0 0.0
  %1673 = vmatmul.mubr.f32.gmra.mxu0 %v699
  %v1674 = vpop.f32.mrf.mxu0
  %v1675 = vadd.f32 0.0, %v1674
  %v1676 = vpop.f32.mrf.mxu0
  %1677 = vmatprep.mubr.f32.mxu0 0.0
  %1678 = vmatmul.mubr.f32.gmra.mxu0 %v702
  %v1679 = vpop.f32.mrf.mxu0
  %v1680 = vadd.f32 0.0, %v1679
  %v1681 = vpop.f32.mrf.mxu0
  %1682 = vmatprep.mubr.f32.mxu0 0.0
  %1683 = vmatmul.mubr.f32.gmra.mxu0 %v705
  %v1684 = vpop.f32.mrf.mxu0
  %v1685 = vadd.f32 0.0, %v1684
  %v1686 = vpop.f32.mrf.mxu0
  %1687 = vmatprep.mubr.f32.mxu0 0.0
  %1688 = vmatmul.mubr.f32.gmra.mxu0 %v708
  %v1689 = vpop.f32.mrf.mxu0
  %v1690 = vadd.f32 0.0, %v1689
  %v1691 = vpop.f32.mrf.mxu0
  %1692 = vmatprep.mubr.f32.mxu0 0.0
  %1693 = vmatmul.mubr.f32.gmra.mxu0 %v711
  %v1694 = vpop.f32.mrf.mxu0
  %v1695 = vadd.f32 0.0, %v1694
  %v1696 = vpop.f32.mrf.mxu0
  %1697 = vmatprep.mubr.f32.mxu0 0.0
  %1698 = vmatmul.mubr.f32.gmra.mxu0 %v714
  %v1699 = vpop.f32.mrf.mxu0
  %v1700 = vadd.f32 0.0, %v1699
  %v1701 = vpop.f32.mrf.mxu0
  %1702 = vmatprep.mubr.f32.mxu0 0.0
  %1703 = vmatmul.mubr.f32.gmra.mxu0 %v717
  %v1704 = vpop.f32.mrf.mxu0
  %v1705 = vadd.f32 0.0, %v1704
  %v1706 = vpop.f32.mrf.mxu0
  %1707 = vmatprep.mubr.f32.mxu0 0.0
  %1708 = vmatmul.mubr.f32.gmra.mxu0 %v720
  %v1709 = vpop.f32.mrf.mxu0
  %v1710 = vadd.f32 0.0, %v1709
  %v1711 = vpop.f32.mrf.mxu0
  %1712 = vmatprep.mubr.f32.mxu0 0.0
  %1713 = vmatmul.mubr.f32.gmra.mxu0 %v723
  %v1714 = vpop.f32.mrf.mxu0
  %v1715 = vadd.f32 0.0, %v1714
  %v1716 = vpop.f32.mrf.mxu0
  %1717 = vmatprep.mubr.f32.mxu0 0.0
  %1718 = vmatmul.mubr.f32.gmra.mxu0 %v726
  %v1719 = vpop.f32.mrf.mxu0
  %v1720 = vadd.f32 0.0, %v1719
  %v1721 = vpop.f32.mrf.mxu0
  %1722 = vmatprep.mubr.f32.mxu0 0.0
  %1723 = vmatmul.mubr.f32.gmra.mxu0 %v729
  %v1724 = vpop.f32.mrf.mxu0
  %v1725 = vadd.f32 0.0, %v1724
  %v1726 = vpop.f32.mrf.mxu0
  %1727 = vmatprep.mubr.f32.mxu0 0.0
  %1728 = vmatmul.mubr.f32.gmra.mxu0 %v732
  %v1729 = vpop.f32.mrf.mxu0
  %v1730 = vadd.f32 0.0, %v1729
  %v1731 = vpop.f32.mrf.mxu0
  %1732 = vmatprep.mubr.f32.mxu0 0.0
  %1733 = vmatmul.mubr.f32.gmra.mxu0 %v735
  %v1734 = vpop.f32.mrf.mxu0
  %v1735 = vadd.f32 0.0, %v1734
  %v1736 = vpop.f32.mrf.mxu0
  %1737 = vmatprep.mubr.f32.mxu0 0.0
  %1738 = vmatmul.mubr.f32.gmra.mxu0 %v738
  %v1739 = vpop.f32.mrf.mxu0
  %v1740 = vadd.f32 0.0, %v1739
  %v1741 = vpop.f32.mrf.mxu0
  %1742 = vmatprep.mubr.f32.mxu0 0.0
  %1743 = vmatmul.mubr.f32.gmra.mxu0 %v741
  %v1744 = vpop.f32.mrf.mxu0
  %v1745 = vadd.f32 0.0, %v1744
  %v1746 = vpop.f32.mrf.mxu0
  %1747 = vmatprep.mubr.f32.mxu0 0.0
  %1748 = vmatmul.mubr.f32.gmra.mxu0 %v744
  %v1749 = vpop.f32.mrf.mxu0
  %v1750 = vadd.f32 0.0, %v1749
  %v1751 = vpop.f32.mrf.mxu0
  %1752 = vmatprep.mubr.f32.mxu0 0.0
  %1753 = vmatmul.mubr.f32.gmra.mxu0 %v747
  %v1754 = vpop.f32.mrf.mxu0
  %v1755 = vadd.f32 0.0, %v1754
  %v1756 = vpop.f32.mrf.mxu0
  %1757 = vmatprep.mubr.f32.mxu0 0.0
  %1758 = vmatmul.mubr.f32.gmra.mxu0 %v750
  %v1759 = vpop.f32.mrf.mxu0
  %v1760 = vadd.f32 0.0, %v1759
  %v1761 = vpop.f32.mrf.mxu0
  %1762 = vmatprep.mubr.f32.mxu0 0.0
  %1763 = vmatmul.mubr.f32.gmra.mxu0 %v753
  %v1764 = vpop.f32.mrf.mxu0
  %v1765 = vadd.f32 0.0, %v1764
  %v1766 = vpop.f32.mrf.mxu0
  %1767 = vmatprep.mubr.f32.mxu0 0.0
  %1768 = vmatmul.mubr.f32.gmra.mxu0 %v756
  %v1769 = vpop.f32.mrf.mxu0
  %v1770 = vadd.f32 0.0, %v1769
  %v1771 = vpop.f32.mrf.mxu0
  %1772 = vmatprep.mubr.f32.mxu0 0.0
  %1773 = vmatmul.mubr.f32.gmra.mxu0 %v759
  %v1774 = vpop.f32.mrf.mxu0
  %v1775 = vadd.f32 0.0, %v1774
  %v1776 = vpop.f32.mrf.mxu0
  %1777 = vmatprep.mubr.f32.mxu0 0.0
  %1778 = vmatmul.mubr.f32.gmra.mxu0 %v762
  %v1779 = vpop.f32.mrf.mxu0
  %v1780 = vadd.f32 0.0, %v1779
  %v1781 = vpop.f32.mrf.mxu0
  %1782 = vmatprep.mubr.f32.mxu0 0.0
  %1783 = vmatmul.mubr.f32.gmra.mxu0 %v765
  %v1784 = vpop.f32.mrf.mxu0
  %v1785 = vadd.f32 0.0, %v1784
  %v1786 = vpop.f32.mrf.mxu0
  %1787 = vmatprep.mubr.f32.mxu0 0.0
  %1788 = vmatmul.mubr.f32.gmra.mxu0 %v768
  %v1789 = vpop.f32.mrf.mxu0
  %v1790 = vadd.f32 0.0, %v1789
  %v1791 = vpop.f32.mrf.mxu0
  %1792 = vmatprep.mubr.f32.mxu0 0.0
  %1793 = vmatmul.mubr.f32.gmra.mxu0 %v771
  %v1794 = vpop.f32.mrf.mxu0
  %v1795 = vadd.f32 0.0, %v1794
  %v1796 = vpop.f32.mrf.mxu0
  %1797 = vmatprep.mubr.f32.mxu0 0.0
  %1798 = vmatmul.mubr.f32.gmra.mxu0 %v774
  %v1799 = vpop.f32.mrf.mxu0
  %v1800 = vadd.f32 0.0, %v1799
  %v1801 = vpop.f32.mrf.mxu0
  %1802 = vmatprep.mubr.f32.mxu0 0.0
  %1803 = vmatmul.mubr.f32.gmra.mxu0 %v777
  %v1804 = vpop.f32.mrf.mxu0
  %v1805 = vadd.f32 0.0, %v1804
  %v1806 = vpop.f32.mrf.mxu0
  %1807 = vmatprep.mubr.f32.mxu0 0.0
  %1808 = vmatmul.mubr.f32.gmra.mxu0 %v780
  %v1809 = vpop.f32.mrf.mxu0
  %v1810 = vadd.f32 0.0, %v1809
  %v1811 = vpop.f32.mrf.mxu0
  %1812 = vmatprep.mubr.f32.mxu0 0.0
  %1813 = vmatmul.mubr.f32.gmra.mxu0 %v783
  %v1814 = vpop.f32.mrf.mxu0
  %v1815 = vadd.f32 0.0, %v1814
  %v1816 = vpop.f32.mrf.mxu0
  %1817 = vmatprep.mubr.f32.mxu0 0.0
  %1818 = vmatmul.mubr.f32.gmra.mxu0 %v786
  %v1819 = vpop.f32.mrf.mxu0
  %v1820 = vadd.f32 0.0, %v1819
  %v1821 = vpop.f32.mrf.mxu0
  %1822 = vmatprep.mubr.f32.mxu0 0.0
  %1823 = vmatmul.mubr.f32.gmra.mxu0 %v789
  %v1824 = vpop.f32.mrf.mxu0
  %v1825 = vadd.f32 0.0, %v1824
  %v1826 = vpop.f32.mrf.mxu0
  %1827 = vmatprep.mubr.f32.mxu0 0.0
  %1828 = vmatmul.mubr.f32.gmra.mxu0 %v792
  %v1829 = vpop.f32.mrf.mxu0
  %v1830 = vadd.f32 0.0, %v1829
  %v1831 = vpop.f32.mrf.mxu0
  %1832 = vmatprep.mubr.f32.mxu0 0.0
  %1833 = vmatmul.mubr.f32.gmra.mxu0 %v795
  %v1834 = vpop.f32.mrf.mxu0
  %v1835 = vadd.f32 0.0, %v1834
  %v1836 = vpop.f32.mrf.mxu0
  %1837 = vmatprep.mubr.f32.mxu0 0.0
  %1838 = vmatmul.mubr.f32.gmra.mxu0 %v798
  %v1839 = vpop.f32.mrf.mxu0
  %v1840 = vadd.f32 0.0, %v1839
  %v1841 = vpop.f32.mrf.mxu0
  %1842 = vmatprep.mubr.f32.mxu0 0.0
  %1843 = vmatmul.mubr.f32.gmra.mxu0 %v801
  %v1844 = vpop.f32.mrf.mxu0
  %v1845 = vadd.f32 0.0, %v1844
  %v1846 = vpop.f32.mrf.mxu0
  %1847 = vmatprep.mubr.f32.mxu0 0.0
  %1848 = vmatmul.mubr.f32.gmra.mxu0 %v804
  %v1849 = vpop.f32.mrf.mxu0
  %v1850 = vadd.f32 0.0, %v1849
  %v1851 = vpop.f32.mrf.mxu0
  %1852 = vmatprep.mubr.f32.mxu0 0.0
  %1853 = vmatmul.mubr.f32.gmra.mxu0 %v807
  %v1854 = vpop.f32.mrf.mxu0
  %v1855 = vadd.f32 0.0, %v1854
  %v1856 = vpop.f32.mrf.mxu0
  %1857 = vdwg.mxu0
  %vm1858 = vcmask 48128
  %v1859 = vsel %vm1858, %v880, -inf
  %v1860 = vsel %vm1858, %v1125, -inf
  %v1861 = vmax.f32 %v1859, %v1860
  %v1862 = vsel %vm1858, %v1370, -inf
  %v1863 = vmax.f32 %v1861, %v1862
  %v1864 = vsel %vm1858, %v1615, -inf
  %v1865 = vmax.f32 %v1863, %v1864
  %v1866 = vsel %vm1858, %v885, -inf
  %v1867 = vsel %vm1858, %v1130, -inf
  %v1868 = vmax.f32 %v1866, %v1867
  %v1869 = vsel %vm1858, %v1375, -inf
  %v1870 = vmax.f32 %v1868, %v1869
  %v1871 = vsel %vm1858, %v1620, -inf
  %v1872 = vmax.f32 %v1870, %v1871
  %v1873 = vsel %vm1858, %v890, -inf
  %v1874 = vsel %vm1858, %v1135, -inf
  %v1875 = vmax.f32 %v1873, %v1874
  %v1876 = vsel %vm1858, %v1380, -inf
  %v1877 = vmax.f32 %v1875, %v1876
  %v1878 = vsel %vm1858, %v1625, -inf
  %v1879 = vmax.f32 %v1877, %v1878
  %v1880 = vsel %vm1858, %v895, -inf
  %v1881 = vsel %vm1858, %v1140, -inf
  %v1882 = vmax.f32 %v1880, %v1881
  %v1883 = vsel %vm1858, %v1385, -inf
  %v1884 = vmax.f32 %v1882, %v1883
  %v1885 = vsel %vm1858, %v1630, -inf
  %v1886 = vmax.f32 %v1884, %v1885
  %v1887 = vsel %vm1858, %v900, -inf
  %v1888 = vsel %vm1858, %v1145, -inf
  %v1889 = vmax.f32 %v1887, %v1888
  %v1890 = vsel %vm1858, %v1390, -inf
  %v1891 = vmax.f32 %v1889, %v1890
  %v1892 = vsel %vm1858, %v1635, -inf
  %v1893 = vmax.f32 %v1891, %v1892
  %v1894 = vsel %vm1858, %v905, -inf
  %v1895 = vsel %vm1858, %v1150, -inf
  %v1896 = vmax.f32 %v1894, %v1895
  %v1897 = vsel %vm1858, %v1395, -inf
  %v1898 = vmax.f32 %v1896, %v1897
  %v1899 = vsel %vm1858, %v1640, -inf
  %v1900 = vmax.f32 %v1898, %v1899
  %v1901 = vsel %vm1858, %v910, -inf
  %v1902 = vsel %vm1858, %v1155, -inf
  %v1903 = vmax.f32 %v1901, %v1902
  %v1904 = vsel %vm1858, %v1400, -inf
  %v1905 = vmax.f32 %v1903, %v1904
  %v1906 = vsel %vm1858, %v1645, -inf
  %v1907 = vmax.f32 %v1905, %v1906
  %v1908 = vsel %vm1858, %v915, -inf
  %v1909 = vsel %vm1858, %v1160, -inf
  %v1910 = vmax.f32 %v1908, %v1909
  %v1911 = vsel %vm1858, %v1405, -inf
  %v1912 = vmax.f32 %v1910, %v1911
  %v1913 = vsel %vm1858, %v1650, -inf
  %v1914 = vmax.f32 %v1912, %v1913
  %v1915 = vsel %vm1858, %v920, -inf
  %v1916 = vsel %vm1858, %v1165, -inf
  %v1917 = vmax.f32 %v1915, %v1916
  %v1918 = vsel %vm1858, %v1410, -inf
  %v1919 = vmax.f32 %v1917, %v1918
  %v1920 = vsel %vm1858, %v1655, -inf
  %v1921 = vmax.f32 %v1919, %v1920
  %v1922 = vsel %vm1858, %v925, -inf
  %v1923 = vsel %vm1858, %v1170, -inf
  %v1924 = vmax.f32 %v1922, %v1923
  %v1925 = vsel %vm1858, %v1415, -inf
  %v1926 = vmax.f32 %v1924, %v1925
  %v1927 = vsel %vm1858, %v1660, -inf
  %v1928 = vmax.f32 %v1926, %v1927
  %v1929 = vsel %vm1858, %v930, -inf
  %v1930 = vsel %vm1858, %v1175, -inf
  %v1931 = vmax.f32 %v1929, %v1930
  %v1932 = vsel %vm1858, %v1420, -inf
  %v1933 = vmax.f32 %v1931, %v1932
  %v1934 = vsel %vm1858, %v1665, -inf
  %v1935 = vmax.f32 %v1933, %v1934
  %v1936 = vsel %vm1858, %v935, -inf
  %v1937 = vsel %vm1858, %v1180, -inf
  %v1938 = vmax.f32 %v1936, %v1937
  %v1939 = vsel %vm1858, %v1425, -inf
  %v1940 = vmax.f32 %v1938, %v1939
  %v1941 = vsel %vm1858, %v1670, -inf
  %v1942 = vmax.f32 %v1940, %v1941
  %v1943 = vsel %vm1858, %v940, -inf
  %v1944 = vsel %vm1858, %v1185, -inf
  %v1945 = vmax.f32 %v1943, %v1944
  %v1946 = vsel %vm1858, %v1430, -inf
  %v1947 = vmax.f32 %v1945, %v1946
  %v1948 = vsel %vm1858, %v1675, -inf
  %v1949 = vmax.f32 %v1947, %v1948
  %v1950 = vsel %vm1858, %v945, -inf
  %v1951 = vsel %vm1858, %v1190, -inf
  %v1952 = vmax.f32 %v1950, %v1951
  %v1953 = vsel %vm1858, %v1435, -inf
  %v1954 = vmax.f32 %v1952, %v1953
  %v1955 = vsel %vm1858, %v1680, -inf
  %v1956 = vmax.f32 %v1954, %v1955
  %v1957 = vsel %vm1858, %v950, -inf
  %v1958 = vsel %vm1858, %v1195, -inf
  %v1959 = vmax.f32 %v1957, %v1958
  %v1960 = vsel %vm1858, %v1440, -inf
  %v1961 = vmax.f32 %v1959, %v1960
  %v1962 = vsel %vm1858, %v1685, -inf
  %v1963 = vmax.f32 %v1961, %v1962
  %v1964 = vsel %vm1858, %v955, -inf
  %v1965 = vsel %vm1858, %v1200, -inf
  %v1966 = vmax.f32 %v1964, %v1965
  %v1967 = vsel %vm1858, %v1445, -inf
  %v1968 = vmax.f32 %v1966, %v1967
  %v1969 = vsel %vm1858, %v1690, -inf
  %v1970 = vmax.f32 %v1968, %v1969
  %v1971 = vsel %vm1858, %v960, -inf
  %v1972 = vsel %vm1858, %v1205, -inf
  %v1973 = vmax.f32 %v1971, %v1972
  %v1974 = vsel %vm1858, %v1450, -inf
  %v1975 = vmax.f32 %v1973, %v1974
  %v1976 = vsel %vm1858, %v1695, -inf
  %v1977 = vmax.f32 %v1975, %v1976
  %v1978 = vsel %vm1858, %v965, -inf
  %v1979 = vsel %vm1858, %v1210, -inf
  %v1980 = vmax.f32 %v1978, %v1979
  %v1981 = vsel %vm1858, %v1455, -inf
  %v1982 = vmax.f32 %v1980, %v1981
  %v1983 = vsel %vm1858, %v1700, -inf
  %v1984 = vmax.f32 %v1982, %v1983
  %v1985 = vsel %vm1858, %v970, -inf
  %v1986 = vsel %vm1858, %v1215, -inf
  %v1987 = vmax.f32 %v1985, %v1986
  %v1988 = vsel %vm1858, %v1460, -inf
  %v1989 = vmax.f32 %v1987, %v1988
  %v1990 = vsel %vm1858, %v1705, -inf
  %v1991 = vmax.f32 %v1989, %v1990
  %v1992 = vsel %vm1858, %v975, -inf
  %v1993 = vsel %vm1858, %v1220, -inf
  %v1994 = vmax.f32 %v1992, %v1993
  %v1995 = vsel %vm1858, %v1465, -inf
  %v1996 = vmax.f32 %v1994, %v1995
  %v1997 = vsel %vm1858, %v1710, -inf
  %v1998 = vmax.f32 %v1996, %v1997
  %v1999 = vsel %vm1858, %v980, -inf
  %v2000 = vsel %vm1858, %v1225, -inf
  %v2001 = vmax.f32 %v1999, %v2000
  %v2002 = vsel %vm1858, %v1470, -inf
  %v2003 = vmax.f32 %v2001, %v2002
  %v2004 = vsel %vm1858, %v1715, -inf
  %v2005 = vmax.f32 %v2003, %v2004
  %v2006 = vsel %vm1858, %v985, -inf
  %v2007 = vsel %vm1858, %v1230, -inf
  %v2008 = vmax.f32 %v2006, %v2007
  %v2009 = vsel %vm1858, %v1475, -inf
  %v2010 = vmax.f32 %v2008, %v2009
  %v2011 = vsel %vm1858, %v1720, -inf
  %v2012 = vmax.f32 %v2010, %v2011
  %v2013 = vsel %vm1858, %v990, -inf
  %v2014 = vsel %vm1858, %v1235, -inf
  %v2015 = vmax.f32 %v2013, %v2014
  %v2016 = vsel %vm1858, %v1480, -inf
  %v2017 = vmax.f32 %v2015, %v2016
  %v2018 = vsel %vm1858, %v1725, -inf
  %v2019 = vmax.f32 %v2017, %v2018
  %v2020 = vsel %vm1858, %v995, -inf
  %v2021 = vsel %vm1858, %v1240, -inf
  %v2022 = vmax.f32 %v2020, %v2021
  %v2023 = vsel %vm1858, %v1485, -inf
  %v2024 = vmax.f32 %v2022, %v2023
  %v2025 = vsel %vm1858, %v1730, -inf
  %v2026 = vmax.f32 %v2024, %v2025
  %v2027 = vsel %vm1858, %v1000, -inf
  %v2028 = vsel %vm1858, %v1245, -inf
  %v2029 = vmax.f32 %v2027, %v2028
  %v2030 = vsel %vm1858, %v1490, -inf
  %v2031 = vmax.f32 %v2029, %v2030
  %v2032 = vsel %vm1858, %v1735, -inf
  %v2033 = vmax.f32 %v2031, %v2032
  %v2034 = vsel %vm1858, %v1005, -inf
  %v2035 = vsel %vm1858, %v1250, -inf
  %v2036 = vmax.f32 %v2034, %v2035
  %v2037 = vsel %vm1858, %v1495, -inf
  %v2038 = vmax.f32 %v2036, %v2037
  %v2039 = vsel %vm1858, %v1740, -inf
  %v2040 = vmax.f32 %v2038, %v2039
  %v2041 = vsel %vm1858, %v1010, -inf
  %v2042 = vsel %vm1858, %v1255, -inf
  %v2043 = vmax.f32 %v2041, %v2042
  %v2044 = vsel %vm1858, %v1500, -inf
  %v2045 = vmax.f32 %v2043, %v2044
  %v2046 = vsel %vm1858, %v1745, -inf
  %v2047 = vmax.f32 %v2045, %v2046
  %v2048 = vsel %vm1858, %v1015, -inf
  %v2049 = vsel %vm1858, %v1260, -inf
  %v2050 = vmax.f32 %v2048, %v2049
  %v2051 = vsel %vm1858, %v1505, -inf
  %v2052 = vmax.f32 %v2050, %v2051
  %v2053 = vsel %vm1858, %v1750, -inf
  %v2054 = vmax.f32 %v2052, %v2053
  %v2055 = vsel %vm1858, %v1020, -inf
  %v2056 = vsel %vm1858, %v1265, -inf
  %v2057 = vmax.f32 %v2055, %v2056
  %v2058 = vsel %vm1858, %v1510, -inf
  %v2059 = vmax.f32 %v2057, %v2058
  %v2060 = vsel %vm1858, %v1755, -inf
  %v2061 = vmax.f32 %v2059, %v2060
  %v2062 = vsel %vm1858, %v1025, -inf
  %v2063 = vsel %vm1858, %v1270, -inf
  %v2064 = vmax.f32 %v2062, %v2063
  %v2065 = vsel %vm1858, %v1515, -inf
  %v2066 = vmax.f32 %v2064, %v2065
  %v2067 = vsel %vm1858, %v1760, -inf
  %v2068 = vmax.f32 %v2066, %v2067
  %v2069 = vsel %vm1858, %v1030, -inf
  %v2070 = vsel %vm1858, %v1275, -inf
  %v2071 = vmax.f32 %v2069, %v2070
  %v2072 = vsel %vm1858, %v1520, -inf
  %v2073 = vmax.f32 %v2071, %v2072
  %v2074 = vsel %vm1858, %v1765, -inf
  %v2075 = vmax.f32 %v2073, %v2074
  %v2076 = vsel %vm1858, %v1035, -inf
  %v2077 = vsel %vm1858, %v1280, -inf
  %v2078 = vmax.f32 %v2076, %v2077
  %v2079 = vsel %vm1858, %v1525, -inf
  %v2080 = vmax.f32 %v2078, %v2079
  %v2081 = vsel %vm1858, %v1770, -inf
  %v2082 = vmax.f32 %v2080, %v2081
  %v2083 = vsel %vm1858, %v1040, -inf
  %v2084 = vsel %vm1858, %v1285, -inf
  %v2085 = vmax.f32 %v2083, %v2084
  %v2086 = vsel %vm1858, %v1530, -inf
  %v2087 = vmax.f32 %v2085, %v2086
  %v2088 = vsel %vm1858, %v1775, -inf
  %v2089 = vmax.f32 %v2087, %v2088
  %v2090 = vsel %vm1858, %v1045, -inf
  %v2091 = vsel %vm1858, %v1290, -inf
  %v2092 = vmax.f32 %v2090, %v2091
  %v2093 = vsel %vm1858, %v1535, -inf
  %v2094 = vmax.f32 %v2092, %v2093
  %v2095 = vsel %vm1858, %v1780, -inf
  %v2096 = vmax.f32 %v2094, %v2095
  %v2097 = vsel %vm1858, %v1050, -inf
  %v2098 = vsel %vm1858, %v1295, -inf
  %v2099 = vmax.f32 %v2097, %v2098
  %v2100 = vsel %vm1858, %v1540, -inf
  %v2101 = vmax.f32 %v2099, %v2100
  %v2102 = vsel %vm1858, %v1785, -inf
  %v2103 = vmax.f32 %v2101, %v2102
  %v2104 = vsel %vm1858, %v1055, -inf
  %v2105 = vsel %vm1858, %v1300, -inf
  %v2106 = vmax.f32 %v2104, %v2105
  %v2107 = vsel %vm1858, %v1545, -inf
  %v2108 = vmax.f32 %v2106, %v2107
  %v2109 = vsel %vm1858, %v1790, -inf
  %v2110 = vmax.f32 %v2108, %v2109
  %v2111 = vsel %vm1858, %v1060, -inf
  %v2112 = vsel %vm1858, %v1305, -inf
  %v2113 = vmax.f32 %v2111, %v2112
  %v2114 = vsel %vm1858, %v1550, -inf
  %v2115 = vmax.f32 %v2113, %v2114
  %v2116 = vsel %vm1858, %v1795, -inf
  %v2117 = vmax.f32 %v2115, %v2116
  %v2118 = vsel %vm1858, %v1065, -inf
  %v2119 = vsel %vm1858, %v1310, -inf
  %v2120 = vmax.f32 %v2118, %v2119
  %v2121 = vsel %vm1858, %v1555, -inf
  %v2122 = vmax.f32 %v2120, %v2121
  %v2123 = vsel %vm1858, %v1800, -inf
  %v2124 = vmax.f32 %v2122, %v2123
  %v2125 = vsel %vm1858, %v1070, -inf
  %v2126 = vsel %vm1858, %v1315, -inf
  %v2127 = vmax.f32 %v2125, %v2126
  %v2128 = vsel %vm1858, %v1560, -inf
  %v2129 = vmax.f32 %v2127, %v2128
  %v2130 = vsel %vm1858, %v1805, -inf
  %v2131 = vmax.f32 %v2129, %v2130
  %v2132 = vsel %vm1858, %v1075, -inf
  %v2133 = vsel %vm1858, %v1320, -inf
  %v2134 = vmax.f32 %v2132, %v2133
  %v2135 = vsel %vm1858, %v1565, -inf
  %v2136 = vmax.f32 %v2134, %v2135
  %v2137 = vsel %vm1858, %v1810, -inf
  %v2138 = vmax.f32 %v2136, %v2137
  %v2139 = vsel %vm1858, %v1080, -inf
  %v2140 = vsel %vm1858, %v1325, -inf
  %v2141 = vmax.f32 %v2139, %v2140
  %v2142 = vsel %vm1858, %v1570, -inf
  %v2143 = vmax.f32 %v2141, %v2142
  %v2144 = vsel %vm1858, %v1815, -inf
  %v2145 = vmax.f32 %v2143, %v2144
  %v2146 = vsel %vm1858, %v1085, -inf
  %v2147 = vsel %vm1858, %v1330, -inf
  %v2148 = vmax.f32 %v2146, %v2147
  %v2149 = vsel %vm1858, %v1575, -inf
  %v2150 = vmax.f32 %v2148, %v2149
  %v2151 = vsel %vm1858, %v1820, -inf
  %v2152 = vmax.f32 %v2150, %v2151
  %v2153 = vsel %vm1858, %v1090, -inf
  %v2154 = vsel %vm1858, %v1335, -inf
  %v2155 = vmax.f32 %v2153, %v2154
  %v2156 = vsel %vm1858, %v1580, -inf
  %v2157 = vmax.f32 %v2155, %v2156
  %v2158 = vsel %vm1858, %v1825, -inf
  %v2159 = vmax.f32 %v2157, %v2158
  %v2160 = vsel %vm1858, %v1095, -inf
  %v2161 = vsel %vm1858, %v1340, -inf
  %v2162 = vmax.f32 %v2160, %v2161
  %v2163 = vsel %vm1858, %v1585, -inf
  %v2164 = vmax.f32 %v2162, %v2163
  %v2165 = vsel %vm1858, %v1830, -inf
  %v2166 = vmax.f32 %v2164, %v2165
  %v2167 = vsel %vm1858, %v1100, -inf
  %v2168 = vsel %vm1858, %v1345, -inf
  %v2169 = vmax.f32 %v2167, %v2168
  %v2170 = vsel %vm1858, %v1590, -inf
  %v2171 = vmax.f32 %v2169, %v2170
  %v2172 = vsel %vm1858, %v1835, -inf
  %v2173 = vmax.f32 %v2171, %v2172
  %v2174 = vsel %vm1858, %v1105, -inf
  %v2175 = vsel %vm1858, %v1350, -inf
  %v2176 = vmax.f32 %v2174, %v2175
  %v2177 = vsel %vm1858, %v1595, -inf
  %v2178 = vmax.f32 %v2176, %v2177
  %v2179 = vsel %vm1858, %v1840, -inf
  %v2180 = vmax.f32 %v2178, %v2179
  %v2181 = vsel %vm1858, %v1110, -inf
  %v2182 = vsel %vm1858, %v1355, -inf
  %v2183 = vmax.f32 %v2181, %v2182
  %v2184 = vsel %vm1858, %v1600, -inf
  %v2185 = vmax.f32 %v2183, %v2184
  %v2186 = vsel %vm1858, %v1845, -inf
  %v2187 = vmax.f32 %v2185, %v2186
  %v2188 = vsel %vm1858, %v1115, -inf
  %v2189 = vsel %vm1858, %v1360, -inf
  %v2190 = vmax.f32 %v2188, %v2189
  %v2191 = vsel %vm1858, %v1605, -inf
  %v2192 = vmax.f32 %v2190, %v2191
  %v2193 = vsel %vm1858, %v1850, -inf
  %v2194 = vmax.f32 %v2192, %v2193
  %v2195 = vsel %vm1858, %v1120, -inf
  %v2196 = vsel %vm1858, %v1365, -inf
  %v2197 = vmax.f32 %v2195, %v2196
  %v2198 = vsel %vm1858, %v1610, -inf
  %v2199 = vmax.f32 %v2197, %v2198
  %v2200 = vsel %vm1858, %v1855, -inf
  %v2201 = vmax.f32 %v2199, %v2200
  %v2202 = vld [vmem:[%s2] sm:$0x1]
  %v2204 = vlaneseq
  %v2205 = vshrl.u32 %v2204, 7
  %v2206 = vsub.s32 0, %v2205
  %v2207 = vrot.slane %v2202, %v2206
  %v2209 = vadd.f32 %v1865, %v2207
  %v2210 = vadd.f32 %v1872, %v2207
  %v2211 = vadd.f32 %v1879, %v2207
  %v2212 = vadd.f32 %v1886, %v2207
  %v2213 = vadd.f32 %v1893, %v2207
  %v2214 = vadd.f32 %v1900, %v2207
  %v2215 = vadd.f32 %v1907, %v2207
  %v2216 = vadd.f32 %v1914, %v2207
  %v2217 = vadd.f32 %v1921, %v2207
  %v2218 = vadd.f32 %v1928, %v2207
  %v2219 = vadd.f32 %v1935, %v2207
  %v2220 = vadd.f32 %v1942, %v2207
  %v2221 = vadd.f32 %v1949, %v2207
  %v2222 = vadd.f32 %v1956, %v2207
  %v2223 = vadd.f32 %v1963, %v2207
  %v2224 = vadd.f32 %v1970, %v2207
  %v2225 = vadd.f32 %v1977, %v2207
  %v2226 = vadd.f32 %v1984, %v2207
  %v2227 = vadd.f32 %v1991, %v2207
  %v2228 = vadd.f32 %v1998, %v2207
  %v2229 = vadd.f32 %v2005, %v2207
  %v2230 = vadd.f32 %v2012, %v2207
  %v2231 = vadd.f32 %v2019, %v2207
  %v2232 = vadd.f32 %v2026, %v2207
  %v2233 = vadd.f32 %v2033, %v2207
  %v2234 = vadd.f32 %v2040, %v2207
  %v2235 = vadd.f32 %v2047, %v2207
  %v2236 = vadd.f32 %v2054, %v2207
  %v2237 = vadd.f32 %v2061, %v2207
  %v2238 = vadd.f32 %v2068, %v2207
  %v2239 = vadd.f32 %v2075, %v2207
  %v2240 = vadd.f32 %v2082, %v2207
  %v2241 = vadd.f32 %v2089, %v2207
  %v2242 = vadd.f32 %v2096, %v2207
  %v2243 = vadd.f32 %v2103, %v2207
  %v2244 = vadd.f32 %v2110, %v2207
  %v2245 = vadd.f32 %v2117, %v2207
  %v2246 = vadd.f32 %v2124, %v2207
  %v2247 = vadd.f32 %v2131, %v2207
  %v2248 = vadd.f32 %v2138, %v2207
  %v2249 = vadd.f32 %v2145, %v2207
  %v2250 = vadd.f32 %v2152, %v2207
  %v2251 = vadd.f32 %v2159, %v2207
  %v2252 = vadd.f32 %v2166, %v2207
  %v2253 = vadd.f32 %v2173, %v2207
  %v2254 = vadd.f32 %v2180, %v2207
  %v2255 = vadd.f32 %v2187, %v2207
  %v2256 = vadd.f32 %v2194, %v2207
  %v2257 = vadd.f32 %v2201, %v2207
  %v2258 = vmax.f32 %v2209, 0.0
  %v2259 = vmax.f32 %v2210, 0.0
  %v2260 = vmax.f32 %v2211, 0.0
  %v2261 = vmax.f32 %v2212, 0.0
  %v2262 = vmax.f32 %v2213, 0.0
  %v2263 = vmax.f32 %v2214, 0.0
  %v2264 = vmax.f32 %v2215, 0.0
  %v2265 = vmax.f32 %v2216, 0.0
  %v2266 = vmax.f32 %v2217, 0.0
  %v2267 = vmax.f32 %v2218, 0.0
  %v2268 = vmax.f32 %v2219, 0.0
  %v2269 = vmax.f32 %v2220, 0.0
  %v2270 = vmax.f32 %v2221, 0.0
  %v2271 = vmax.f32 %v2222, 0.0
  %v2272 = vmax.f32 %v2223, 0.0
  %v2273 = vmax.f32 %v2224, 0.0
  %v2274 = vmax.f32 %v2225, 0.0
  %v2275 = vmax.f32 %v2226, 0.0
  %v2276 = vmax.f32 %v2227, 0.0
  %v2277 = vmax.f32 %v2228, 0.0
  %v2278 = vmax.f32 %v2229, 0.0
  %v2279 = vmax.f32 %v2230, 0.0
  %v2280 = vmax.f32 %v2231, 0.0
  %v2281 = vmax.f32 %v2232, 0.0
  %v2282 = vmax.f32 %v2233, 0.0
  %v2283 = vmax.f32 %v2234, 0.0
  %v2284 = vmax.f32 %v2235, 0.0
  %v2285 = vmax.f32 %v2236, 0.0
  %v2286 = vmax.f32 %v2237, 0.0
  %v2287 = vmax.f32 %v2238, 0.0
  %v2288 = vmax.f32 %v2239, 0.0
  %v2289 = vmax.f32 %v2240, 0.0
  %v2290 = vmax.f32 %v2241, 0.0
  %v2291 = vmax.f32 %v2242, 0.0
  %v2292 = vmax.f32 %v2243, 0.0
  %v2293 = vmax.f32 %v2244, 0.0
  %v2294 = vmax.f32 %v2245, 0.0
  %v2295 = vmax.f32 %v2246, 0.0
  %v2296 = vmax.f32 %v2247, 0.0
  %v2297 = vmax.f32 %v2248, 0.0
  %v2298 = vmax.f32 %v2249, 0.0
  %v2299 = vmax.f32 %v2250, 0.0
  %v2300 = vmax.f32 %v2251, 0.0
  %v2301 = vmax.f32 %v2252, 0.0
  %v2302 = vmax.f32 %v2253, 0.0
  %v2303 = vmax.f32 %v2254, 0.0
  %v2304 = vmax.f32 %v2255, 0.0
  %v2305 = vmax.f32 %v2256, 0.0
  %v2306 = vmax.f32 %v2257, 0.0
  %2307 = vst.msk [vmem:[%s3] sm:$0xff] %vm1858, %v2258
  %2308 = vst.msk [vmem:[%s3 + $0x8] sm:$0xff] %vm1858, %v2259
  %2309 = vst.msk [vmem:[%s3 + $0x10] sm:$0xff] %vm1858, %v2260
  %2310 = vst.msk [vmem:[%s3 + $0x18] sm:$0xff] %vm1858, %v2261
  %2311 = vst.msk [vmem:[%s3 + $0x20] sm:$0xff] %vm1858, %v2262
  %2312 = vst.msk [vmem:[%s3 + $0x28] sm:$0xff] %vm1858, %v2263
  %2313 = vst.msk [vmem:[%s3 + $0x30] sm:$0xff] %vm1858, %v2264
  %2314 = vst.msk [vmem:[%s3 + $0x38] sm:$0xff] %vm1858, %v2265
  %2315 = vst.msk [vmem:[%s3 + $0x40] sm:$0xff] %vm1858, %v2266
  %2316 = vst.msk [vmem:[%s3 + $0x48] sm:$0xff] %vm1858, %v2267
  %2317 = vst.msk [vmem:[%s3 + $0x50] sm:$0xff] %vm1858, %v2268
  %2318 = vst.msk [vmem:[%s3 + $0x58] sm:$0xff] %vm1858, %v2269
  %2319 = vst.msk [vmem:[%s3 + $0x60] sm:$0xff] %vm1858, %v2270
  %2320 = vst.msk [vmem:[%s3 + $0x68] sm:$0xff] %vm1858, %v2271
  %2321 = vst.msk [vmem:[%s3 + $0x70] sm:$0xff] %vm1858, %v2272
  %2322 = vst.msk [vmem:[%s3 + $0x78] sm:$0xff] %vm1858, %v2273
  %2323 = vst.msk [vmem:[%s3 + $0x80] sm:$0xff] %vm1858, %v2274
  %2324 = vst.msk [vmem:[%s3 + $0x88] sm:$0xff] %vm1858, %v2275
  %2325 = vst.msk [vmem:[%s3 + $0x90] sm:$0xff] %vm1858, %v2276
  %2326 = vst.msk [vmem:[%s3 + $0x98] sm:$0xff] %vm1858, %v2277
  %2327 = vst.msk [vmem:[%s3 + $0xa0] sm:$0xff] %vm1858, %v2278
  %2328 = vst.msk [vmem:[%s3 + $0xa8] sm:$0xff] %vm1858, %v2279
  %2329 = vst.msk [vmem:[%s3 + $0xb0] sm:$0xff] %vm1858, %v2280
  %2330 = vst.msk [vmem:[%s3 + $0xb8] sm:$0xff] %vm1858, %v2281
  %2331 = vst.msk [vmem:[%s3 + $0xc0] sm:$0xff] %vm1858, %v2282
  %2332 = vst.msk [vmem:[%s3 + $0xc8] sm:$0xff] %vm1858, %v2283
  %2333 = vst.msk [vmem:[%s3 + $0xd0] sm:$0xff] %vm1858, %v2284
  %2334 = vst.msk [vmem:[%s3 + $0xd8] sm:$0xff] %vm1858, %v2285
  %2335 = vst.msk [vmem:[%s3 + $0xe0] sm:$0xff] %vm1858, %v2286
  %2336 = vst.msk [vmem:[%s3 + $0xe8] sm:$0xff] %vm1858, %v2287
  %2337 = vst.msk [vmem:[%s3 + $0xf0] sm:$0xff] %vm1858, %v2288
  %2338 = vst.msk [vmem:[%s3 + $0xf8] sm:$0xff] %vm1858, %v2289
  %2339 = vst.msk [vmem:[%s3 + $0x100] sm:$0xff] %vm1858, %v2290
  %2340 = vst.msk [vmem:[%s3 + $0x108] sm:$0xff] %vm1858, %v2291
  %2341 = vst.msk [vmem:[%s3 + $0x110] sm:$0xff] %vm1858, %v2292
  %2342 = vst.msk [vmem:[%s3 + $0x118] sm:$0xff] %vm1858, %v2293
  %2343 = vst.msk [vmem:[%s3 + $0x120] sm:$0xff] %vm1858, %v2294
  %2344 = vst.msk [vmem:[%s3 + $0x128] sm:$0xff] %vm1858, %v2295
  %2345 = vst.msk [vmem:[%s3 + $0x130] sm:$0xff] %vm1858, %v2296
  %2346 = vst.msk [vmem:[%s3 + $0x138] sm:$0xff] %vm1858, %v2297
  %2347 = vst.msk [vmem:[%s3 + $0x140] sm:$0xff] %vm1858, %v2298
  %2348 = vst.msk [vmem:[%s3 + $0x148] sm:$0xff] %vm1858, %v2299
  %2349 = vst.msk [vmem:[%s3 + $0x150] sm:$0xff] %vm1858, %v2300
  %2350 = vst.msk [vmem:[%s3 + $0x158] sm:$0xff] %vm1858, %v2301
  %2351 = vst.msk [vmem:[%s3 + $0x160] sm:$0xff] %vm1858, %v2302
  %2352 = vst.msk [vmem:[%s3 + $0x168] sm:$0xff] %vm1858, %v2303
  %2353 = vst.msk [vmem:[%s3 + $0x170] sm:$0xff] %vm1858, %v2304
  %2354 = vst.msk [vmem:[%s3 + $0x178] sm:$0xff] %vm1858, %v2305
  %2355 = vst.msk [vmem:[%s3 + $0x180] sm:$0xff] %vm1858, %v2306
  // Predicated region
  $region14: #{conv_cifar_forward.2} parent=0 // pred_check
    _
  $region15: #{conv_cifar_forward.2} parent=0 // pred_check_branch
    %2357 = sbr.rel (0) target = $region17
  $region16: #{conv_cifar_forward.2} parent=0 // pred_region
    _
  $region17: #{conv_cifar_forward.2} parent=0 // pred_fallthru
    _
  // Predicated region
  $region18: #{conv_cifar_forward.2} parent=0 // pred_check
    _
  $region19: #{conv_cifar_forward.2} parent=0 // pred_check_branch
    %2359 = sbr.rel (0) target = $region21
  $region20: #{conv_cifar_forward.2} parent=0 // pred_region
    _
  $region21: #{conv_cifar_forward.2} parent=0 // pred_fallthru
    _

// kernel: conv_cifar_forward.3
$region0: #{conv_cifar_forward.3}
  #allocation0 [shape = 'u32[]', space=smem, size = 0x4, offset = 0x4, fixed_abs, tag = 'smem constant byte address 0x4 - core index']
  #allocation1 [shape = 'u32[144,128]{1,0:T(1,128)}', space=vmem, size = 0x12000, scoped, tag = 'internal scratch']
  %s0 = inlined_call_operand.vmem [shape: f32[4,25,8,150], index: 0, kind: input, shape index: {}]
  %s1 = inlined_call_operand.vmem [shape: f32[150,16], index: 1, kind: input, shape index: {}]
  %s2 = inlined_call_operand.vmem [shape: f32[1,16], index: 2, kind: input, shape index: {}]
  %s3 = inlined_call_operand.vmem [shape: f32[25,16,120], index: 3, kind: input, shape index: {}]
  %s4 = inlined_call_operand.vmem [shape: f32[1,120], index: 4, kind: input, shape index: {}]
  %s5 = inlined_call_operand.vmem [shape: f32[120,84], index: 5, kind: input, shape index: {}]
  %s6 = inlined_call_operand.vmem [shape: f32[1,84], index: 6, kind: input, shape index: {}]
  %s7 = inlined_call_operand.vmem [shape: f32[84,128], index: 7, kind: input, shape index: {}]
  %s8 = inlined_call_operand.vmem [shape: f32[1,128], index: 8, kind: input, shape index: {}]
  %s9 = inlined_call_operand.vmem [shape: f32[8,128], index: 9, kind: output, shape index: {}]
  %s10 = sld [smem:[#allocation0]]
  $region46: #{conv_cifar_forward.3} parent=0
    _
  %s12 = ssub.s32 1, %s10
  %s13 = scalar_select 0, %s12, %s10
  // Predicated region
  $region2: #{conv_cifar_forward.3} parent=0 // pred_check
    _
  $region3: #{conv_cifar_forward.3} parent=0 // pred_check_branch
    %15 = sbr.rel (0) target = $region5
  $region4: #{conv_cifar_forward.3} parent=0 // pred_region
    _
  $region5: #{conv_cifar_forward.3} parent=0 // pred_fallthru
    _
  // Predicated region
  $region6: #{conv_cifar_forward.3} parent=0 // pred_check
    _
  $region7: #{conv_cifar_forward.3} parent=0 // pred_check_branch
    %17 = sbr.rel (0) target = $region9
  $region8: #{conv_cifar_forward.3} parent=0 // pred_region
    _
  $region9: #{conv_cifar_forward.3} parent=0 // pred_fallthru
    _
  // Predicated region
  $region10: #{conv_cifar_forward.3} parent=0 // pred_check
    _
  $region11: #{conv_cifar_forward.3} parent=0 // pred_check_branch
    %19 = sbr.rel (0) target = $region13
  $region12: #{conv_cifar_forward.3} parent=0 // pred_region
    _
  $region13: #{conv_cifar_forward.3} parent=0 // pred_fallthru
    _
  // Predicated region
  $region14: #{conv_cifar_forward.3} parent=0 // pred_check
    _
  $region15: #{conv_cifar_forward.3} parent=0 // pred_check_branch
    %21 = sbr.rel (0) target = $region17
  $region16: #{conv_cifar_forward.3} parent=0 // pred_region
    _
  $region17: #{conv_cifar_forward.3} parent=0 // pred_fallthru
    _
  // Predicated region
  $region18: #{conv_cifar_forward.3} parent=0 // pred_check
    _
  $region19: #{conv_cifar_forward.3} parent=0 // pred_check_branch
    %23 = sbr.rel (0) target = $region21
  $region20: #{conv_cifar_forward.3} parent=0 // pred_region
    _
  $region21: #{conv_cifar_forward.3} parent=0 // pred_fallthru
    _
  // Predicated region
  $region22: #{conv_cifar_forward.3} parent=0 // pred_check
    _
  $region23: #{conv_cifar_forward.3} parent=0 // pred_check_branch
    %25 = sbr.rel (0) target = $region25
  $region24: #{conv_cifar_forward.3} parent=0 // pred_region
    _
  $region25: #{conv_cifar_forward.3} parent=0 // pred_fallthru
    _
  // Predicated region
  $region26: #{conv_cifar_forward.3} parent=0 // pred_check
    _
  $region27: #{conv_cifar_forward.3} parent=0 // pred_check_branch
    %27 = sbr.rel (0) target = $region29
  $region28: #{conv_cifar_forward.3} parent=0 // pred_region
    _
  $region29: #{conv_cifar_forward.3} parent=0 // pred_fallthru
    _
  // Predicated region
  $region30: #{conv_cifar_forward.3} parent=0 // pred_check
    _
  $region31: #{conv_cifar_forward.3} parent=0 // pred_check_branch
    %29 = sbr.rel (0) target = $region33
  $region32: #{conv_cifar_forward.3} parent=0 // pred_region
    _
  $region33: #{conv_cifar_forward.3} parent=0 // pred_fallthru
    _
  // Predicated region
  $region34: #{conv_cifar_forward.3} parent=0 // pred_check
    _
  $region35: #{conv_cifar_forward.3} parent=0 // pred_check_branch
    %31 = sbr.rel (0) target = $region37
  $region36: #{conv_cifar_forward.3} parent=0 // pred_region
    _
  $region37: #{conv_cifar_forward.3} parent=0 // pred_fallthru
    _
  %v32 = vld [vmem:[%s0] sm:$0xff]
  %v33 = vld [vmem:[%s0 + $0x8] sm:$0xff]
  %v34 = vld [vmem:[%s0 + $0x10] sm:$0xff]
  %v35 = vld [vmem:[%s0 + $0x18] sm:$0xff]
  %v36 = vld [vmem:[%s0 + $0x20] sm:$0xff]
  %v37 = vld [vmem:[%s0 + $0x28] sm:$0xff]
  %v38 = vld [vmem:[%s0 + $0x30] sm:$0xff]
  %v39 = vld [vmem:[%s0 + $0x38] sm:$0xff]
  %v40 = vld [vmem:[%s0 + $0x40] sm:$0xff]
  %v41 = vld [vmem:[%s0 + $0x48] sm:$0xff]
  %v42 = vld [vmem:[%s0 + $0x50] sm:$0xff]
  %v43 = vld [vmem:[%s0 + $0x58] sm:$0xff]
  %v44 = vld [vmem:[%s0 + $0x60] sm:$0xff]
  %v45 = vld [vmem:[%s0 + $0x68] sm:$0xff]
  %v46 = vld [vmem:[%s0 + $0x70] sm:$0xff]
  %v47 = vld [vmem:[%s0 + $0x78] sm:$0xff]
  %v48 = vld [vmem:[%s0 + $0x80] sm:$0xff]
  %v49 = vld [vmem:[%s0 + $0x88] sm:$0xff]
  %v50 = vld [vmem:[%s0 + $0x90] sm:$0xff]
  %v51 = vld [vmem:[%s0 + $0x98] sm:$0xff]
  %v52 = vld [vmem:[%s0 + $0xa0] sm:$0xff]
  %v53 = vld [vmem:[%s0 + $0xa8] sm:$0xff]
  %v54 = vld [vmem:[%s0 + $0xb0] sm:$0xff]
  %v55 = vld [vmem:[%s0 + $0xb8] sm:$0xff]
  %v56 = vld [vmem:[%s0 + $0xc0] sm:$0xff]
  %v57 = vld [vmem:[%s0 + $0xc8] sm:$0xff]
  %v58 = vld [vmem:[%s0 + $0xd0] sm:$0xff]
  %v59 = vld [vmem:[%s0 + $0xd8] sm:$0xff]
  %v60 = vld [vmem:[%s0 + $0xe0] sm:$0xff]
  %v61 = vld [vmem:[%s0 + $0xe8] sm:$0xff]
  %v62 = vld [vmem:[%s0 + $0xf0] sm:$0xff]
  %v63 = vld [vmem:[%s0 + $0xf8] sm:$0xff]
  %v64 = vld [vmem:[%s0 + $0x100] sm:$0xff]
  %v65 = vld [vmem:[%s0 + $0x108] sm:$0xff]
  %v66 = vld [vmem:[%s0 + $0x110] sm:$0xff]
  %v67 = vld [vmem:[%s0 + $0x118] sm:$0xff]
  %v68 = vld [vmem:[%s0 + $0x120] sm:$0xff]
  %v69 = vld [vmem:[%s0 + $0x128] sm:$0xff]
  %v70 = vld [vmem:[%s0 + $0x130] sm:$0xff]
  %v71 = vld [vmem:[%s0 + $0x138] sm:$0xff]
  %v72 = vld [vmem:[%s0 + $0x140] sm:$0xff]
  %v73 = vld [vmem:[%s0 + $0x148] sm:$0xff]
  %v74 = vld [vmem:[%s0 + $0x150] sm:$0xff]
  %v75 = vld [vmem:[%s0 + $0x158] sm:$0xff]
  %v76 = vld [vmem:[%s0 + $0x160] sm:$0xff]
  %v77 = vld [vmem:[%s0 + $0x168] sm:$0xff]
  %v78 = vld [vmem:[%s0 + $0x170] sm:$0xff]
  %v79 = vld [vmem:[%s0 + $0x178] sm:$0xff]
  %v80 = vld [vmem:[%s0 + $0x180] sm:$0xff]
  %v81 = vld [vmem:[%s0 + $0x188] sm:$0xff]
  %v82 = vld [vmem:[%s0 + $0x190] sm:$0xff]
  %v83 = vld [vmem:[%s0 + $0x198] sm:$0xff]
  %v84 = vld [vmem:[%s0 + $0x1a0] sm:$0xff]
  %v85 = vld [vmem:[%s0 + $0x1a8] sm:$0xff]
  %v86 = vld [vmem:[%s0 + $0x1b0] sm:$0xff]
  %v87 = vld [vmem:[%s0 + $0x1b8] sm:$0xff]
  %v88 = vld [vmem:[%s0 + $0x1c0] sm:$0xff]
  %v89 = vld [vmem:[%s0 + $0x1c8] sm:$0xff]
  %v90 = vld [vmem:[%s0 + $0x1d0] sm:$0xff]
  %v91 = vld [vmem:[%s0 + $0x1d8] sm:$0xff]
  %v92 = vld [vmem:[%s0 + $0x1e0] sm:$0xff]
  %v93 = vld [vmem:[%s0 + $0x1e8] sm:$0xff]
  %v94 = vld [vmem:[%s0 + $0x1f0] sm:$0xff]
  %v95 = vld [vmem:[%s0 + $0x1f8] sm:$0xff]
  %v96 = vld [vmem:[%s0 + $0x200] sm:$0xff]
  %v97 = vld [vmem:[%s0 + $0x208] sm:$0xff]
  %v98 = vld [vmem:[%s0 + $0x210] sm:$0xff]
  %v99 = vld [vmem:[%s0 + $0x218] sm:$0xff]
  %v100 = vld [vmem:[%s0 + $0x220] sm:$0xff]
  %v101 = vld [vmem:[%s0 + $0x228] sm:$0xff]
  %v102 = vld [vmem:[%s0 + $0x230] sm:$0xff]
  %v103 = vld [vmem:[%s0 + $0x238] sm:$0xff]
  %v104 = vld [vmem:[%s0 + $0x240] sm:$0xff]
  %v105 = vld [vmem:[%s0 + $0x248] sm:$0xff]
  %v106 = vld [vmem:[%s0 + $0x250] sm:$0xff]
  %v107 = vld [vmem:[%s0 + $0x258] sm:$0xff]
  %v108 = vld [vmem:[%s0 + $0x260] sm:$0xff]
  %v109 = vld [vmem:[%s0 + $0x268] sm:$0xff]
  %v110 = vld [vmem:[%s0 + $0x270] sm:$0xff]
  %v111 = vld [vmem:[%s0 + $0x278] sm:$0xff]
  %v112 = vld [vmem:[%s0 + $0x280] sm:$0xff]
  %v113 = vld [vmem:[%s0 + $0x288] sm:$0xff]
  %v114 = vld [vmem:[%s0 + $0x290] sm:$0xff]
  %v115 = vld [vmem:[%s0 + $0x298] sm:$0xff]
  %v116 = vld [vmem:[%s0 + $0x2a0] sm:$0xff]
  %v117 = vld [vmem:[%s0 + $0x2a8] sm:$0xff]
  %v118 = vld [vmem:[%s0 + $0x2b0] sm:$0xff]
  %v119 = vld [vmem:[%s0 + $0x2b8] sm:$0xff]
  %v120 = vld [vmem:[%s0 + $0x2c0] sm:$0xff]
  %v121 = vld [vmem:[%s0 + $0x2c8] sm:$0xff]
  %v122 = vld [vmem:[%s0 + $0x2d0] sm:$0xff]
  %v123 = vld [vmem:[%s0 + $0x2d8] sm:$0xff]
  %v124 = vld [vmem:[%s0 + $0x2e0] sm:$0xff]
  %v125 = vld [vmem:[%s0 + $0x2e8] sm:$0xff]
  %v126 = vld [vmem:[%s0 + $0x2f0] sm:$0xff]
  %v127 = vld [vmem:[%s0 + $0x2f8] sm:$0xff]
  %v128 = vld [vmem:[%s0 + $0x300] sm:$0xff]
  %v129 = vld [vmem:[%s0 + $0x308] sm:$0xff]
  %v130 = vld [vmem:[%s0 + $0x310] sm:$0xff]
  %v131 = vld [vmem:[%s0 + $0x318] sm:$0xff]
  %v132 = vld [vmem:[%s0 + $0x320] sm:$0xff]
  %v133 = vld [vmem:[%s0 + $0x328] sm:$0xff]
  %v134 = vld [vmem:[%s0 + $0x330] sm:$0xff]
  %v135 = vld [vmem:[%s0 + $0x338] sm:$0xff]
  %v136 = vld [vmem:[%s0 + $0x340] sm:$0xff]
  %v137 = vld [vmem:[%s0 + $0x348] sm:$0xff]
  %v138 = vld [vmem:[%s0 + $0x350] sm:$0xff]
  %v139 = vld [vmem:[%s0 + $0x358] sm:$0xff]
  %v140 = vld [vmem:[%s0 + $0x360] sm:$0xff]
  %v141 = vld [vmem:[%s0 + $0x368] sm:$0xff]
  %v142 = vld [vmem:[%s0 + $0x370] sm:$0xff]
  %v143 = vld [vmem:[%s0 + $0x378] sm:$0xff]
  %v144 = vld [vmem:[%s0 + $0x380] sm:$0xff]
  %v145 = vld [vmem:[%s0 + $0x388] sm:$0xff]
  %v146 = vld [vmem:[%s0 + $0x390] sm:$0xff]
  %v147 = vld [vmem:[%s0 + $0x398] sm:$0xff]
  %v148 = vld [vmem:[%s0 + $0x3a0] sm:$0xff]
  %v149 = vld [vmem:[%s0 + $0x3a8] sm:$0xff]
  %v150 = vld [vmem:[%s0 + $0x3b0] sm:$0xff]
  %v151 = vld [vmem:[%s0 + $0x3b8] sm:$0xff]
  %v152 = vld [vmem:[%s0 + $0x3c0] sm:$0xff]
  %v153 = vld [vmem:[%s0 + $0x3c8] sm:$0xff]
  %v154 = vld [vmem:[%s0 + $0x3d0] sm:$0xff]
  %v155 = vld [vmem:[%s0 + $0x3d8] sm:$0xff]
  %v156 = vld [vmem:[%s0 + $0x3e0] sm:$0xff]
  %v157 = vld [vmem:[%s0 + $0x3e8] sm:$0xff]
  %v158 = vld [vmem:[%s0 + $0x3f0] sm:$0xff]
  %v159 = vld [vmem:[%s0 + $0x3f8] sm:$0xff]
  %v160 = vld [vmem:[%s0 + $0x400] sm:$0xff]
  %v161 = vld [vmem:[%s0 + $0x408] sm:$0xff]
  %v162 = vld [vmem:[%s0 + $0x410] sm:$0xff]
  %v163 = vld [vmem:[%s0 + $0x418] sm:$0xff]
  %v164 = vld [vmem:[%s0 + $0x420] sm:$0xff]
  %v165 = vld [vmem:[%s0 + $0x428] sm:$0xff]
  %v166 = vld [vmem:[%s0 + $0x430] sm:$0xff]
  %v167 = vld [vmem:[%s0 + $0x438] sm:$0xff]
  %v168 = vld [vmem:[%s0 + $0x440] sm:$0xff]
  %v169 = vld [vmem:[%s0 + $0x448] sm:$0xff]
  %v170 = vld [vmem:[%s0 + $0x450] sm:$0xff]
  %v171 = vld [vmem:[%s0 + $0x458] sm:$0xff]
  %v172 = vld [vmem:[%s0 + $0x460] sm:$0xff]
  %v173 = vld [vmem:[%s0 + $0x468] sm:$0xff]
  %v174 = vld [vmem:[%s0 + $0x470] sm:$0xff]
  %v175 = vld [vmem:[%s0 + $0x478] sm:$0xff]
  %v176 = vld [vmem:[%s0 + $0x480] sm:$0xff]
  %v177 = vld [vmem:[%s0 + $0x488] sm:$0xff]
  %v178 = vld [vmem:[%s0 + $0x490] sm:$0xff]
  %v179 = vld [vmem:[%s0 + $0x498] sm:$0xff]
  %v180 = vld [vmem:[%s0 + $0x4a0] sm:$0xff]
  %v181 = vld [vmem:[%s0 + $0x4a8] sm:$0xff]
  %v182 = vld [vmem:[%s0 + $0x4b0] sm:$0xff]
  %v183 = vld [vmem:[%s0 + $0x4b8] sm:$0xff]
  %v184 = vld [vmem:[%s0 + $0x4c0] sm:$0xff]
  %v185 = vld [vmem:[%s0 + $0x4c8] sm:$0xff]
  %v186 = vld [vmem:[%s0 + $0x4d0] sm:$0xff]
  %v187 = vld [vmem:[%s0 + $0x4d8] sm:$0xff]
  %v188 = vld [vmem:[%s0 + $0x4e0] sm:$0xff]
  %v189 = vld [vmem:[%s0 + $0x4e8] sm:$0xff]
  %v190 = vld [vmem:[%s0 + $0x4f0] sm:$0xff]
  %v191 = vld [vmem:[%s0 + $0x4f8] sm:$0xff]
  %v192 = vld [vmem:[%s0 + $0x500] sm:$0xff]
  %v193 = vld [vmem:[%s0 + $0x508] sm:$0xff]
  %v194 = vld [vmem:[%s0 + $0x510] sm:$0xff]
  %v195 = vld [vmem:[%s0 + $0x518] sm:$0xff]
  %v196 = vld [vmem:[%s0 + $0x520] sm:$0xff]
  %v197 = vld [vmem:[%s0 + $0x528] sm:$0xff]
  %v198 = vld [vmem:[%s0 + $0x530] sm:$0xff]
  %v199 = vld [vmem:[%s0 + $0x538] sm:$0xff]
  %v200 = vld [vmem:[%s0 + $0x540] sm:$0xff]
  %v201 = vld [vmem:[%s0 + $0x548] sm:$0xff]
  %v202 = vld [vmem:[%s0 + $0x550] sm:$0xff]
  %v203 = vld [vmem:[%s0 + $0x558] sm:$0xff]
  %v204 = vld [vmem:[%s0 + $0x560] sm:$0xff]
  %v205 = vld [vmem:[%s0 + $0x568] sm:$0xff]
  %v206 = vld [vmem:[%s0 + $0x570] sm:$0xff]
  %v207 = vld [vmem:[%s0 + $0x578] sm:$0xff]
  %v208 = vld [vmem:[%s0 + $0x580] sm:$0xff]
  %v209 = vld [vmem:[%s0 + $0x588] sm:$0xff]
  %v210 = vld [vmem:[%s0 + $0x590] sm:$0xff]
  %v211 = vld [vmem:[%s0 + $0x598] sm:$0xff]
  %v212 = vld [vmem:[%s0 + $0x5a0] sm:$0xff]
  %v213 = vld [vmem:[%s0 + $0x5a8] sm:$0xff]
  %v214 = vld [vmem:[%s0 + $0x5b0] sm:$0xff]
  %v215 = vld [vmem:[%s0 + $0x5b8] sm:$0xff]
  %v216 = vld [vmem:[%s0 + $0x5c0] sm:$0xff]
  %v217 = vld [vmem:[%s0 + $0x5c8] sm:$0xff]
  %v218 = vld [vmem:[%s0 + $0x5d0] sm:$0xff]
  %v219 = vld [vmem:[%s0 + $0x5d8] sm:$0xff]
  %v220 = vld [vmem:[%s0 + $0x5e0] sm:$0xff]
  %v221 = vld [vmem:[%s0 + $0x5e8] sm:$0xff]
  %v222 = vld [vmem:[%s0 + $0x5f0] sm:$0xff]
  %v223 = vld [vmem:[%s0 + $0x5f8] sm:$0xff]
  %v224 = vld [vmem:[%s0 + $0x600] sm:$0xff]
  %v225 = vld [vmem:[%s0 + $0x608] sm:$0xff]
  %v226 = vld [vmem:[%s0 + $0x610] sm:$0xff]
  %v227 = vld [vmem:[%s0 + $0x618] sm:$0xff]
  %v228 = vld [vmem:[%s0 + $0x620] sm:$0xff]
  %v229 = vld [vmem:[%s0 + $0x628] sm:$0xff]
  %v230 = vld [vmem:[%s0 + $0x630] sm:$0xff]
  %v231 = vld [vmem:[%s0 + $0x638] sm:$0xff]
  %v232 = vld [vmem:[%s1] sm:$0xff]
  %v233 = vld [vmem:[%s1 + $0x8] sm:$0xff]
  %v234 = vld [vmem:[%s1 + $0x10] sm:$0xff]
  %v235 = vld [vmem:[%s1 + $0x18] sm:$0xff]
  %v236 = vld [vmem:[%s1 + $0x20] sm:$0xff]
  %v237 = vld [vmem:[%s1 + $0x28] sm:$0xff]
  %v238 = vld [vmem:[%s1 + $0x30] sm:$0xff]
  %v239 = vld [vmem:[%s1 + $0x38] sm:$0xff]
  %v240 = vld [vmem:[%s1 + $0x40] sm:$0xff]
  %v241 = vld [vmem:[%s1 + $0x48] sm:$0xff]
  %v242 = vld [vmem:[%s1 + $0x50] sm:$0xff]
  %v243 = vld [vmem:[%s1 + $0x58] sm:$0xff]
  %v244 = vld [vmem:[%s1 + $0x60] sm:$0xff]
  %v245 = vld [vmem:[%s1 + $0x68] sm:$0xff]
  %v246 = vld [vmem:[%s1 + $0x70] sm:$0xff]
  %v247 = vld [vmem:[%s1 + $0x78] sm:$0xff]
  %v248 = vld [vmem:[%s1 + $0x80] sm:$0xff]
  %v249 = vld [vmem:[%s1 + $0x88] sm:$0xff]
  %v250 = vld [vmem:[%s1 + $0x90] sm:$0x3f]
  %vm251 = vcmask 179200
  %v253 = vsel %vm251, %v33, 0
  %v256 = vsel %vm251, %v35, 0
  %v259 = vsel %vm251, %v37, 0
  %v262 = vsel %vm251, %v39, 0
  %v265 = vsel %vm251, %v41, 0
  %v268 = vsel %vm251, %v43, 0
  %v271 = vsel %vm251, %v45, 0
  %v274 = vsel %vm251, %v47, 0
  %v277 = vsel %vm251, %v49, 0
  %v280 = vsel %vm251, %v51, 0
  %v283 = vsel %vm251, %v53, 0
  %v286 = vsel %vm251, %v55, 0
  %v289 = vsel %vm251, %v57, 0
  %v292 = vsel %vm251, %v59, 0
  %v295 = vsel %vm251, %v61, 0
  %v298 = vsel %vm251, %v63, 0
  %v301 = vsel %vm251, %v65, 0
  %v304 = vsel %vm251, %v67, 0
  %v307 = vsel %vm251, %v69, 0
  %v310 = vsel %vm251, %v71, 0
  %v313 = vsel %vm251, %v73, 0
  %v316 = vsel %vm251, %v75, 0
  %v319 = vsel %vm251, %v77, 0
  %v322 = vsel %vm251, %v79, 0
  %v325 = vsel %vm251, %v81, 0
  %v328 = vsel %vm251, %v83, 0
  %v331 = vsel %vm251, %v85, 0
  %v334 = vsel %vm251, %v87, 0
  %v337 = vsel %vm251, %v89, 0
  %v340 = vsel %vm251, %v91, 0
  %v343 = vsel %vm251, %v93, 0
  %v346 = vsel %vm251, %v95, 0
  %v349 = vsel %vm251, %v97, 0
  %v352 = vsel %vm251, %v99, 0
  %v355 = vsel %vm251, %v101, 0
  %v358 = vsel %vm251, %v103, 0
  %v361 = vsel %vm251, %v105, 0
  %v364 = vsel %vm251, %v107, 0
  %v367 = vsel %vm251, %v109, 0
  %v370 = vsel %vm251, %v111, 0
  %v373 = vsel %vm251, %v113, 0
  %v376 = vsel %vm251, %v115, 0
  %v379 = vsel %vm251, %v117, 0
  %v382 = vsel %vm251, %v119, 0
  %v385 = vsel %vm251, %v121, 0
  %v388 = vsel %vm251, %v123, 0
  %v391 = vsel %vm251, %v125, 0
  %v394 = vsel %vm251, %v127, 0
  %v397 = vsel %vm251, %v129, 0
  %v400 = vsel %vm251, %v131, 0
  %v403 = vsel %vm251, %v133, 0
  %v406 = vsel %vm251, %v135, 0
  %v409 = vsel %vm251, %v137, 0
  %v412 = vsel %vm251, %v139, 0
  %v415 = vsel %vm251, %v141, 0
  %v418 = vsel %vm251, %v143, 0
  %v421 = vsel %vm251, %v145, 0
  %v424 = vsel %vm251, %v147, 0
  %v427 = vsel %vm251, %v149, 0
  %v430 = vsel %vm251, %v151, 0
  %v433 = vsel %vm251, %v153, 0
  %v436 = vsel %vm251, %v155, 0
  %v439 = vsel %vm251, %v157, 0
  %v442 = vsel %vm251, %v159, 0
  %v445 = vsel %vm251, %v161, 0
  %v448 = vsel %vm251, %v163, 0
  %v451 = vsel %vm251, %v165, 0
  %v454 = vsel %vm251, %v167, 0
  %v457 = vsel %vm251, %v169, 0
  %v460 = vsel %vm251, %v171, 0
  %v463 = vsel %vm251, %v173, 0
  %v466 = vsel %vm251, %v175, 0
  %v469 = vsel %vm251, %v177, 0
  %v472 = vsel %vm251, %v179, 0
  %v475 = vsel %vm251, %v181, 0
  %v478 = vsel %vm251, %v183, 0
  %v481 = vsel %vm251, %v185, 0
  %v484 = vsel %vm251, %v187, 0
  %v487 = vsel %vm251, %v189, 0
  %v490 = vsel %vm251, %v191, 0
  %v493 = vsel %vm251, %v193, 0
  %v496 = vsel %vm251, %v195, 0
  %v499 = vsel %vm251, %v197, 0
  %v502 = vsel %vm251, %v199, 0
  %v505 = vsel %vm251, %v201, 0
  %v508 = vsel %vm251, %v203, 0
  %v511 = vsel %vm251, %v205, 0
  %v514 = vsel %vm251, %v207, 0
  %v517 = vsel %vm251, %v209, 0
  %v520 = vsel %vm251, %v211, 0
  %v523 = vsel %vm251, %v213, 0
  %v526 = vsel %vm251, %v215, 0
  %v529 = vsel %vm251, %v217, 0
  %v532 = vsel %vm251, %v219, 0
  %v535 = vsel %vm251, %v221, 0
  %v538 = vsel %vm251, %v223, 0
  %v541 = vsel %vm251, %v225, 0
  %v544 = vsel %vm251, %v227, 0
  %v547 = vsel %vm251, %v229, 0
  %v550 = vsel %vm251, %v231, 0
  %vm552 = vcmask 1045504
  %v554 = vsel %vm552, %v250, 0
  %556 = vmatprep.subr.mxu0 0.0
  %557 = vmatpush1.msra.mxu0 %v247
  %558 = vmatprep.subr.mxu0 0.0
  %559 = vmatpush1.msra.mxu0 %v246
  %560 = vmatprep.subr.mxu0 0.0
  %561 = vmatpush1.msra.mxu0 %v245
  %562 = vmatprep.subr.mxu0 0.0
  %563 = vmatpush1.msra.mxu0 %v244
  %564 = vmatprep.subr.mxu0 0.0
  %565 = vmatpush1.msra.mxu0 %v243
  %566 = vmatprep.subr.mxu0 0.0
  %567 = vmatpush1.msra.mxu0 %v242
  %568 = vmatprep.subr.mxu0 0.0
  %569 = vmatpush1.msra.mxu0 %v241
  %570 = vmatprep.subr.mxu0 0.0
  %571 = vmatpush1.msra.mxu0 %v240
  %572 = vmatprep.subr.mxu0 0.0
  %573 = vmatpush1.msra.mxu0 %v239
  %574 = vmatprep.subr.mxu0 0.0
  %575 = vmatpush1.msra.mxu0 %v238
  %576 = vmatprep.subr.mxu0 0.0
  %577 = vmatpush1.msra.mxu0 %v237
  %578 = vmatprep.subr.mxu0 0.0
  %579 = vmatpush1.msra.mxu0 %v236
  %580 = vmatprep.subr.mxu0 0.0
  %581 = vmatpush1.msra.mxu0 %v235
  %582 = vmatprep.subr.mxu0 0.0
  %583 = vmatpush1.msra.mxu0 %v234
  %584 = vmatprep.subr.mxu0 0.0
  %585 = vmatpush1.msra.mxu0 %v233
  %586 = vmatprep.subr.mxu0 0.0
  %587 = vmatpush1.msra.mxu0 %v232
  %588 = vmatprep.subr.mxu0 0.0
  %589 = vmatpush2.msra.mxu0 0.0
  %590 = vmatprep.subr.mxu0 0.0
  %591 = vmatpush2.msra.mxu0 0.0
  %592 = vmatprep.subr.mxu0 0.0
  %593 = vmatpush2.msra.mxu0 0.0
  %594 = vmatprep.subr.mxu0 0.0
  %595 = vmatpush2.msra.mxu0 0.0
  %596 = vmatprep.subr.mxu0 0.0
  %597 = vmatpush2.msra.mxu0 0.0
  %598 = vmatprep.subr.mxu0 0.0
  %599 = vmatpush2.msra.mxu0 0.0
  %600 = vmatprep.subr.mxu0 0.0
  %601 = vmatpush2.msra.mxu0 0.0
  %602 = vmatprep.subr.mxu0 0.0
  %603 = vmatpush2.msra.mxu0 0.0
  %604 = vmatprep.subr.mxu0 0.0
  %605 = vmatpush2.msra.mxu0 0.0
  %606 = vmatprep.subr.mxu0 0.0
  %607 = vmatpush2.msra.mxu0 0.0
  %608 = vmatprep.subr.mxu0 0.0
  %609 = vmatpush2.msra.mxu0 0.0
  %610 = vmatprep.subr.mxu0 0.0
  %611 = vmatpush2.msra.mxu0 0.0
  %612 = vmatprep.subr.mxu0 0.0
  %613 = vmatpush2.msra.mxu0 0.0
  %614 = vmatprep.subr.mxu0 0.0
  %615 = vmatpush2.msra.mxu0 %v554
  %616 = vmatprep.subr.mxu0 0.0
  %617 = vmatpush2.msra.mxu0 %v249
  %618 = vmatprep.subr.mxu0 0.0
  %619 = vmatpush2.msra.mxu0 %v248
  %620 = vmatprep.mubr.f32.mxu0 %v253
  %621 = vmatmul.mubr.f32.gmra.mxu0 %v32
  %v622 = vpop.f32.mrf.mxu0
  %v623 = vadd.f32 0.0, %v622
  %v624 = vpop.f32.mrf.mxu0
  %625 = vmatprep.mubr.f32.mxu0 %v256
  %626 = vmatmul.mubr.f32.gmra.mxu0 %v34
  %v627 = vpop.f32.mrf.mxu0
  %v628 = vadd.f32 0.0, %v627
  %v629 = vpop.f32.mrf.mxu0
  %630 = vmatprep.mubr.f32.mxu0 %v259
  %631 = vmatmul.mubr.f32.gmra.mxu0 %v36
  %v632 = vpop.f32.mrf.mxu0
  %v633 = vadd.f32 0.0, %v632
  %v634 = vpop.f32.mrf.mxu0
  %635 = vmatprep.mubr.f32.mxu0 %v262
  %636 = vmatmul.mubr.f32.gmra.mxu0 %v38
  %v637 = vpop.f32.mrf.mxu0
  %v638 = vadd.f32 0.0, %v637
  %v639 = vpop.f32.mrf.mxu0
  %640 = vmatprep.mubr.f32.mxu0 %v265
  %641 = vmatmul.mubr.f32.gmra.mxu0 %v40
  %v642 = vpop.f32.mrf.mxu0
  %v643 = vadd.f32 0.0, %v642
  %v644 = vpop.f32.mrf.mxu0
  %645 = vmatprep.mubr.f32.mxu0 %v268
  %646 = vmatmul.mubr.f32.gmra.mxu0 %v42
  %v647 = vpop.f32.mrf.mxu0
  %v648 = vadd.f32 0.0, %v647
  %v649 = vpop.f32.mrf.mxu0
  %650 = vmatprep.mubr.f32.mxu0 %v271
  %651 = vmatmul.mubr.f32.gmra.mxu0 %v44
  %v652 = vpop.f32.mrf.mxu0
  %v653 = vadd.f32 0.0, %v652
  %v654 = vpop.f32.mrf.mxu0
  %655 = vmatprep.mubr.f32.mxu0 %v274
  %656 = vmatmul.mubr.f32.gmra.mxu0 %v46
  %v657 = vpop.f32.mrf.mxu0
  %v658 = vadd.f32 0.0, %v657
  %v659 = vpop.f32.mrf.mxu0
  %660 = vmatprep.mubr.f32.mxu0 %v277
  %661 = vmatmul.mubr.f32.gmra.mxu0 %v48
  %v662 = vpop.f32.mrf.mxu0
  %v663 = vadd.f32 0.0, %v662
  %v664 = vpop.f32.mrf.mxu0
  %665 = vmatprep.mubr.f32.mxu0 %v280
  %666 = vmatmul.mubr.f32.gmra.mxu0 %v50
  %v667 = vpop.f32.mrf.mxu0
  %v668 = vadd.f32 0.0, %v667
  %v669 = vpop.f32.mrf.mxu0
  %670 = vmatprep.mubr.f32.mxu0 %v283
  %671 = vmatmul.mubr.f32.gmra.mxu0 %v52
  %v672 = vpop.f32.mrf.mxu0
  %v673 = vadd.f32 0.0, %v672
  %v674 = vpop.f32.mrf.mxu0
  %675 = vmatprep.mubr.f32.mxu0 %v286
  %676 = vmatmul.mubr.f32.gmra.mxu0 %v54
  %v677 = vpop.f32.mrf.mxu0
  %v678 = vadd.f32 0.0, %v677
  %v679 = vpop.f32.mrf.mxu0
  %680 = vmatprep.mubr.f32.mxu0 %v289
  %681 = vmatmul.mubr.f32.gmra.mxu0 %v56
  %v682 = vpop.f32.mrf.mxu0
  %v683 = vadd.f32 0.0, %v682
  %v684 = vpop.f32.mrf.mxu0
  %685 = vmatprep.mubr.f32.mxu0 %v292
  %686 = vmatmul.mubr.f32.gmra.mxu0 %v58
  %v687 = vpop.f32.mrf.mxu0
  %v688 = vadd.f32 0.0, %v687
  %v689 = vpop.f32.mrf.mxu0
  %690 = vmatprep.mubr.f32.mxu0 %v295
  %691 = vmatmul.mubr.f32.gmra.mxu0 %v60
  %v692 = vpop.f32.mrf.mxu0
  %v693 = vadd.f32 0.0, %v692
  %v694 = vpop.f32.mrf.mxu0
  %695 = vmatprep.mubr.f32.mxu0 %v298
  %696 = vmatmul.mubr.f32.gmra.mxu0 %v62
  %v697 = vpop.f32.mrf.mxu0
  %v698 = vadd.f32 0.0, %v697
  %v699 = vpop.f32.mrf.mxu0
  %700 = vmatprep.mubr.f32.mxu0 %v301
  %701 = vmatmul.mubr.f32.gmra.mxu0 %v64
  %v702 = vpop.f32.mrf.mxu0
  %v703 = vadd.f32 0.0, %v702
  %v704 = vpop.f32.mrf.mxu0
  %705 = vmatprep.mubr.f32.mxu0 %v304
  %706 = vmatmul.mubr.f32.gmra.mxu0 %v66
  %v707 = vpop.f32.mrf.mxu0
  %v708 = vadd.f32 0.0, %v707
  %v709 = vpop.f32.mrf.mxu0
  %710 = vmatprep.mubr.f32.mxu0 %v307
  %711 = vmatmul.mubr.f32.gmra.mxu0 %v68
  %v712 = vpop.f32.mrf.mxu0
  %v713 = vadd.f32 0.0, %v712
  %v714 = vpop.f32.mrf.mxu0
  %715 = vmatprep.mubr.f32.mxu0 %v310
  %716 = vmatmul.mubr.f32.gmra.mxu0 %v70
  %v717 = vpop.f32.mrf.mxu0
  %v718 = vadd.f32 0.0, %v717
  %v719 = vpop.f32.mrf.mxu0
  %720 = vmatprep.mubr.f32.mxu0 %v313
  %721 = vmatmul.mubr.f32.gmra.mxu0 %v72
  %v722 = vpop.f32.mrf.mxu0
  %v723 = vadd.f32 0.0, %v722
  %v724 = vpop.f32.mrf.mxu0
  %725 = vmatprep.mubr.f32.mxu0 %v316
  %726 = vmatmul.mubr.f32.gmra.mxu0 %v74
  %v727 = vpop.f32.mrf.mxu0
  %v728 = vadd.f32 0.0, %v727
  %v729 = vpop.f32.mrf.mxu0
  %730 = vmatprep.mubr.f32.mxu0 %v319
  %731 = vmatmul.mubr.f32.gmra.mxu0 %v76
  %v732 = vpop.f32.mrf.mxu0
  %v733 = vadd.f32 0.0, %v732
  %v734 = vpop.f32.mrf.mxu0
  %735 = vmatprep.mubr.f32.mxu0 %v322
  %736 = vmatmul.mubr.f32.gmra.mxu0 %v78
  %v737 = vpop.f32.mrf.mxu0
  %v738 = vadd.f32 0.0, %v737
  %v739 = vpop.f32.mrf.mxu0
  %740 = vmatprep.mubr.f32.mxu0 %v325
  %741 = vmatmul.mubr.f32.gmra.mxu0 %v80
  %v742 = vpop.f32.mrf.mxu0
  %v743 = vadd.f32 0.0, %v742
  %v744 = vpop.f32.mrf.mxu0
  %745 = vmatprep.mubr.f32.mxu0 %v328
  %746 = vmatmul.mubr.f32.gmra.mxu0 %v82
  %v747 = vpop.f32.mrf.mxu0
  %v748 = vadd.f32 0.0, %v747
  %v749 = vpop.f32.mrf.mxu0
  %750 = vmatprep.mubr.f32.mxu0 %v331
  %751 = vmatmul.mubr.f32.gmra.mxu0 %v84
  %v752 = vpop.f32.mrf.mxu0
  %v753 = vadd.f32 0.0, %v752
  %v754 = vpop.f32.mrf.mxu0
  %755 = vmatprep.mubr.f32.mxu0 %v334
  %756 = vmatmul.mubr.f32.gmra.mxu0 %v86
  %v757 = vpop.f32.mrf.mxu0
  %v758 = vadd.f32 0.0, %v757
  %v759 = vpop.f32.mrf.mxu0
  %760 = vmatprep.mubr.f32.mxu0 %v337
  %761 = vmatmul.mubr.f32.gmra.mxu0 %v88
  %v762 = vpop.f32.mrf.mxu0
  %v763 = vadd.f32 0.0, %v762
  %v764 = vpop.f32.mrf.mxu0
  %765 = vmatprep.mubr.f32.mxu0 %v340
  %766 = vmatmul.mubr.f32.gmra.mxu0 %v90
  %v767 = vpop.f32.mrf.mxu0
  %v768 = vadd.f32 0.0, %v767
  %v769 = vpop.f32.mrf.mxu0
  %770 = vmatprep.mubr.f32.mxu0 %v343
  %771 = vmatmul.mubr.f32.gmra.mxu0 %v92
  %v772 = vpop.f32.mrf.mxu0
  %v773 = vadd.f32 0.0, %v772
  %v774 = vpop.f32.mrf.mxu0
  %775 = vmatprep.mubr.f32.mxu0 %v346
  %776 = vmatmul.mubr.f32.gmra.mxu0 %v94
  %v777 = vpop.f32.mrf.mxu0
  %v778 = vadd.f32 0.0, %v777
  %v779 = vpop.f32.mrf.mxu0
  %780 = vmatprep.mubr.f32.mxu0 %v349
  %781 = vmatmul.mubr.f32.gmra.mxu0 %v96
  %v782 = vpop.f32.mrf.mxu0
  %v783 = vadd.f32 0.0, %v782
  %v784 = vpop.f32.mrf.mxu0
  %785 = vmatprep.mubr.f32.mxu0 %v352
  %786 = vmatmul.mubr.f32.gmra.mxu0 %v98
  %v787 = vpop.f32.mrf.mxu0
  %v788 = vadd.f32 0.0, %v787
  %v789 = vpop.f32.mrf.mxu0
  %790 = vmatprep.mubr.f32.mxu0 %v355
  %791 = vmatmul.mubr.f32.gmra.mxu0 %v100
  %v792 = vpop.f32.mrf.mxu0
  %v793 = vadd.f32 0.0, %v792
  %v794 = vpop.f32.mrf.mxu0
  %795 = vmatprep.mubr.f32.mxu0 %v358
  %796 = vmatmul.mubr.f32.gmra.mxu0 %v102
  %v797 = vpop.f32.mrf.mxu0
  %v798 = vadd.f32 0.0, %v797
  %v799 = vpop.f32.mrf.mxu0
  %800 = vmatprep.mubr.f32.mxu0 %v361
  %801 = vmatmul.mubr.f32.gmra.mxu0 %v104
  %v802 = vpop.f32.mrf.mxu0
  %v803 = vadd.f32 0.0, %v802
  %v804 = vpop.f32.mrf.mxu0
  %805 = vmatprep.mubr.f32.mxu0 %v364
  %806 = vmatmul.mubr.f32.gmra.mxu0 %v106
  %v807 = vpop.f32.mrf.mxu0
  %v808 = vadd.f32 0.0, %v807
  %v809 = vpop.f32.mrf.mxu0
  %810 = vmatprep.mubr.f32.mxu0 %v367
  %811 = vmatmul.mubr.f32.gmra.mxu0 %v108
  %v812 = vpop.f32.mrf.mxu0
  %v813 = vadd.f32 0.0, %v812
  %v814 = vpop.f32.mrf.mxu0
  %815 = vmatprep.mubr.f32.mxu0 %v370
  %816 = vmatmul.mubr.f32.gmra.mxu0 %v110
  %v817 = vpop.f32.mrf.mxu0
  %v818 = vadd.f32 0.0, %v817
  %v819 = vpop.f32.mrf.mxu0
  %820 = vmatprep.mubr.f32.mxu0 %v373
  %821 = vmatmul.mubr.f32.gmra.mxu0 %v112
  %v822 = vpop.f32.mrf.mxu0
  %v823 = vadd.f32 0.0, %v822
  %v824 = vpop.f32.mrf.mxu0
  %825 = vmatprep.mubr.f32.mxu0 %v376
  %826 = vmatmul.mubr.f32.gmra.mxu0 %v114
  %v827 = vpop.f32.mrf.mxu0
  %v828 = vadd.f32 0.0, %v827
  %v829 = vpop.f32.mrf.mxu0
  %830 = vmatprep.mubr.f32.mxu0 %v379
  %831 = vmatmul.mubr.f32.gmra.mxu0 %v116
  %v832 = vpop.f32.mrf.mxu0
  %v833 = vadd.f32 0.0, %v832
  %v834 = vpop.f32.mrf.mxu0
  %835 = vmatprep.mubr.f32.mxu0 %v382
  %836 = vmatmul.mubr.f32.gmra.mxu0 %v118
  %v837 = vpop.f32.mrf.mxu0
  %v838 = vadd.f32 0.0, %v837
  %v839 = vpop.f32.mrf.mxu0
  %840 = vmatprep.mubr.f32.mxu0 %v385
  %841 = vmatmul.mubr.f32.gmra.mxu0 %v120
  %v842 = vpop.f32.mrf.mxu0
  %v843 = vadd.f32 0.0, %v842
  %v844 = vpop.f32.mrf.mxu0
  %845 = vmatprep.mubr.f32.mxu0 %v388
  %846 = vmatmul.mubr.f32.gmra.mxu0 %v122
  %v847 = vpop.f32.mrf.mxu0
  %v848 = vadd.f32 0.0, %v847
  %v849 = vpop.f32.mrf.mxu0
  %850 = vmatprep.mubr.f32.mxu0 %v391
  %851 = vmatmul.mubr.f32.gmra.mxu0 %v124
  %v852 = vpop.f32.mrf.mxu0
  %v853 = vadd.f32 0.0, %v852
  %v854 = vpop.f32.mrf.mxu0
  %855 = vmatprep.mubr.f32.mxu0 %v394
  %856 = vmatmul.mubr.f32.gmra.mxu0 %v126
  %v857 = vpop.f32.mrf.mxu0
  %v858 = vadd.f32 0.0, %v857
  %v859 = vpop.f32.mrf.mxu0
  %860 = vmatprep.mubr.f32.mxu0 %v397
  %861 = vmatmul.mubr.f32.gmra.mxu0 %v128
  %v862 = vpop.f32.mrf.mxu0
  %v863 = vadd.f32 0.0, %v862
  %v864 = vpop.f32.mrf.mxu0
  %865 = vmatprep.mubr.f32.mxu0 %v400
  %866 = vmatmul.mubr.f32.gmra.mxu0 %v130
  %v867 = vpop.f32.mrf.mxu0
  %v868 = vadd.f32 0.0, %v867
  %v869 = vpop.f32.mrf.mxu0
  %870 = vmatprep.mubr.f32.mxu0 %v403
  %871 = vmatmul.mubr.f32.gmra.mxu0 %v132
  %v872 = vpop.f32.mrf.mxu0
  %v873 = vadd.f32 0.0, %v872
  %v874 = vpop.f32.mrf.mxu0
  %875 = vmatprep.mubr.f32.mxu0 %v406
  %876 = vmatmul.mubr.f32.gmra.mxu0 %v134
  %v877 = vpop.f32.mrf.mxu0
  %v878 = vadd.f32 0.0, %v877
  %v879 = vpop.f32.mrf.mxu0
  %880 = vmatprep.mubr.f32.mxu0 %v409
  %881 = vmatmul.mubr.f32.gmra.mxu0 %v136
  %v882 = vpop.f32.mrf.mxu0
  %v883 = vadd.f32 0.0, %v882
  %v884 = vpop.f32.mrf.mxu0
  %885 = vmatprep.mubr.f32.mxu0 %v412
  %886 = vmatmul.mubr.f32.gmra.mxu0 %v138
  %v887 = vpop.f32.mrf.mxu0
  %v888 = vadd.f32 0.0, %v887
  %v889 = vpop.f32.mrf.mxu0
  %890 = vmatprep.mubr.f32.mxu0 %v415
  %891 = vmatmul.mubr.f32.gmra.mxu0 %v140
  %v892 = vpop.f32.mrf.mxu0
  %v893 = vadd.f32 0.0, %v892
  %v894 = vpop.f32.mrf.mxu0
  %895 = vmatprep.mubr.f32.mxu0 %v418
  %896 = vmatmul.mubr.f32.gmra.mxu0 %v142
  %v897 = vpop.f32.mrf.mxu0
  %v898 = vadd.f32 0.0, %v897
  %v899 = vpop.f32.mrf.mxu0
  %900 = vmatprep.mubr.f32.mxu0 %v421
  %901 = vmatmul.mubr.f32.gmra.mxu0 %v144
  %v902 = vpop.f32.mrf.mxu0
  %v903 = vadd.f32 0.0, %v902
  %v904 = vpop.f32.mrf.mxu0
  %905 = vmatprep.mubr.f32.mxu0 %v424
  %906 = vmatmul.mubr.f32.gmra.mxu0 %v146
  %v907 = vpop.f32.mrf.mxu0
  %v908 = vadd.f32 0.0, %v907
  %v909 = vpop.f32.mrf.mxu0
  %910 = vmatprep.mubr.f32.mxu0 %v427
  %911 = vmatmul.mubr.f32.gmra.mxu0 %v148
  %v912 = vpop.f32.mrf.mxu0
  %v913 = vadd.f32 0.0, %v912
  %v914 = vpop.f32.mrf.mxu0
  %915 = vmatprep.mubr.f32.mxu0 %v430
  %916 = vmatmul.mubr.f32.gmra.mxu0 %v150
  %v917 = vpop.f32.mrf.mxu0
  %v918 = vadd.f32 0.0, %v917
  %v919 = vpop.f32.mrf.mxu0
  %920 = vmatprep.mubr.f32.mxu0 %v433
  %921 = vmatmul.mubr.f32.gmra.mxu0 %v152
  %v922 = vpop.f32.mrf.mxu0
  %v923 = vadd.f32 0.0, %v922
  %v924 = vpop.f32.mrf.mxu0
  %925 = vmatprep.mubr.f32.mxu0 %v436
  %926 = vmatmul.mubr.f32.gmra.mxu0 %v154
  %v927 = vpop.f32.mrf.mxu0
  %v928 = vadd.f32 0.0, %v927
  %v929 = vpop.f32.mrf.mxu0
  %930 = vmatprep.mubr.f32.mxu0 %v439
  %931 = vmatmul.mubr.f32.gmra.mxu0 %v156
  %v932 = vpop.f32.mrf.mxu0
  %v933 = vadd.f32 0.0, %v932
  %v934 = vpop.f32.mrf.mxu0
  %935 = vmatprep.mubr.f32.mxu0 %v442
  %936 = vmatmul.mubr.f32.gmra.mxu0 %v158
  %v937 = vpop.f32.mrf.mxu0
  %v938 = vadd.f32 0.0, %v937
  %v939 = vpop.f32.mrf.mxu0
  %940 = vmatprep.mubr.f32.mxu0 %v445
  %941 = vmatmul.mubr.f32.gmra.mxu0 %v160
  %v942 = vpop.f32.mrf.mxu0
  %v943 = vadd.f32 0.0, %v942
  %v944 = vpop.f32.mrf.mxu0
  %945 = vmatprep.mubr.f32.mxu0 %v448
  %946 = vmatmul.mubr.f32.gmra.mxu0 %v162
  %v947 = vpop.f32.mrf.mxu0
  %v948 = vadd.f32 0.0, %v947
  %v949 = vpop.f32.mrf.mxu0
  %950 = vmatprep.mubr.f32.mxu0 %v451
  %951 = vmatmul.mubr.f32.gmra.mxu0 %v164
  %v952 = vpop.f32.mrf.mxu0
  %v953 = vadd.f32 0.0, %v952
  %v954 = vpop.f32.mrf.mxu0
  %955 = vmatprep.mubr.f32.mxu0 %v454
  %956 = vmatmul.mubr.f32.gmra.mxu0 %v166
  %v957 = vpop.f32.mrf.mxu0
  %v958 = vadd.f32 0.0, %v957
  %v959 = vpop.f32.mrf.mxu0
  %960 = vmatprep.mubr.f32.mxu0 %v457
  %961 = vmatmul.mubr.f32.gmra.mxu0 %v168
  %v962 = vpop.f32.mrf.mxu0
  %v963 = vadd.f32 0.0, %v962
  %v964 = vpop.f32.mrf.mxu0
  %965 = vmatprep.mubr.f32.mxu0 %v460
  %966 = vmatmul.mubr.f32.gmra.mxu0 %v170
  %v967 = vpop.f32.mrf.mxu0
  %v968 = vadd.f32 0.0, %v967
  %v969 = vpop.f32.mrf.mxu0
  %970 = vmatprep.mubr.f32.mxu0 %v463
  %971 = vmatmul.mubr.f32.gmra.mxu0 %v172
  %v972 = vpop.f32.mrf.mxu0
  %v973 = vadd.f32 0.0, %v972
  %v974 = vpop.f32.mrf.mxu0
  %975 = vmatprep.mubr.f32.mxu0 %v466
  %976 = vmatmul.mubr.f32.gmra.mxu0 %v174
  %v977 = vpop.f32.mrf.mxu0
  %v978 = vadd.f32 0.0, %v977
  %v979 = vpop.f32.mrf.mxu0
  %980 = vmatprep.mubr.f32.mxu0 %v469
  %981 = vmatmul.mubr.f32.gmra.mxu0 %v176
  %v982 = vpop.f32.mrf.mxu0
  %v983 = vadd.f32 0.0, %v982
  %v984 = vpop.f32.mrf.mxu0
  %985 = vmatprep.mubr.f32.mxu0 %v472
  %986 = vmatmul.mubr.f32.gmra.mxu0 %v178
  %v987 = vpop.f32.mrf.mxu0
  %v988 = vadd.f32 0.0, %v987
  %v989 = vpop.f32.mrf.mxu0
  %990 = vmatprep.mubr.f32.mxu0 %v475
  %991 = vmatmul.mubr.f32.gmra.mxu0 %v180
  %v992 = vpop.f32.mrf.mxu0
  %v993 = vadd.f32 0.0, %v992
  %v994 = vpop.f32.mrf.mxu0
  %995 = vmatprep.mubr.f32.mxu0 %v478
  %996 = vmatmul.mubr.f32.gmra.mxu0 %v182
  %v997 = vpop.f32.mrf.mxu0
  %v998 = vadd.f32 0.0, %v997
  %v999 = vpop.f32.mrf.mxu0
  %1000 = vmatprep.mubr.f32.mxu0 %v481
  %1001 = vmatmul.mubr.f32.gmra.mxu0 %v184
  %v1002 = vpop.f32.mrf.mxu0
  %v1003 = vadd.f32 0.0, %v1002
  %v1004 = vpop.f32.mrf.mxu0
  %1005 = vmatprep.mubr.f32.mxu0 %v484
  %1006 = vmatmul.mubr.f32.gmra.mxu0 %v186
  %v1007 = vpop.f32.mrf.mxu0
  %v1008 = vadd.f32 0.0, %v1007
  %v1009 = vpop.f32.mrf.mxu0
  %1010 = vmatprep.mubr.f32.mxu0 %v487
  %1011 = vmatmul.mubr.f32.gmra.mxu0 %v188
  %v1012 = vpop.f32.mrf.mxu0
  %v1013 = vadd.f32 0.0, %v1012
  %v1014 = vpop.f32.mrf.mxu0
  %1015 = vmatprep.mubr.f32.mxu0 %v490
  %1016 = vmatmul.mubr.f32.gmra.mxu0 %v190
  %v1017 = vpop.f32.mrf.mxu0
  %v1018 = vadd.f32 0.0, %v1017
  %v1019 = vpop.f32.mrf.mxu0
  %1020 = vmatprep.mubr.f32.mxu0 %v493
  %1021 = vmatmul.mubr.f32.gmra.mxu0 %v192
  %v1022 = vpop.f32.mrf.mxu0
  %v1023 = vadd.f32 0.0, %v1022
  %v1024 = vpop.f32.mrf.mxu0
  %1025 = vmatprep.mubr.f32.mxu0 %v496
  %1026 = vmatmul.mubr.f32.gmra.mxu0 %v194
  %v1027 = vpop.f32.mrf.mxu0
  %v1028 = vadd.f32 0.0, %v1027
  %v1029 = vpop.f32.mrf.mxu0
  %1030 = vmatprep.mubr.f32.mxu0 %v499
  %1031 = vmatmul.mubr.f32.gmra.mxu0 %v196
  %v1032 = vpop.f32.mrf.mxu0
  %v1033 = vadd.f32 0.0, %v1032
  %v1034 = vpop.f32.mrf.mxu0
  %1035 = vmatprep.mubr.f32.mxu0 %v502
  %1036 = vmatmul.mubr.f32.gmra.mxu0 %v198
  %v1037 = vpop.f32.mrf.mxu0
  %v1038 = vadd.f32 0.0, %v1037
  %v1039 = vpop.f32.mrf.mxu0
  %1040 = vmatprep.mubr.f32.mxu0 %v505
  %1041 = vmatmul.mubr.f32.gmra.mxu0 %v200
  %v1042 = vpop.f32.mrf.mxu0
  %v1043 = vadd.f32 0.0, %v1042
  %v1044 = vpop.f32.mrf.mxu0
  %1045 = vmatprep.mubr.f32.mxu0 %v508
  %1046 = vmatmul.mubr.f32.gmra.mxu0 %v202
  %v1047 = vpop.f32.mrf.mxu0
  %v1048 = vadd.f32 0.0, %v1047
  %v1049 = vpop.f32.mrf.mxu0
  %1050 = vmatprep.mubr.f32.mxu0 %v511
  %1051 = vmatmul.mubr.f32.gmra.mxu0 %v204
  %v1052 = vpop.f32.mrf.mxu0
  %v1053 = vadd.f32 0.0, %v1052
  %v1054 = vpop.f32.mrf.mxu0
  %1055 = vmatprep.mubr.f32.mxu0 %v514
  %1056 = vmatmul.mubr.f32.gmra.mxu0 %v206
  %v1057 = vpop.f32.mrf.mxu0
  %v1058 = vadd.f32 0.0, %v1057
  %v1059 = vpop.f32.mrf.mxu0
  %1060 = vmatprep.mubr.f32.mxu0 %v517
  %1061 = vmatmul.mubr.f32.gmra.mxu0 %v208
  %v1062 = vpop.f32.mrf.mxu0
  %v1063 = vadd.f32 0.0, %v1062
  %v1064 = vpop.f32.mrf.mxu0
  %1065 = vmatprep.mubr.f32.mxu0 %v520
  %1066 = vmatmul.mubr.f32.gmra.mxu0 %v210
  %v1067 = vpop.f32.mrf.mxu0
  %v1068 = vadd.f32 0.0, %v1067
  %v1069 = vpop.f32.mrf.mxu0
  %1070 = vmatprep.mubr.f32.mxu0 %v523
  %1071 = vmatmul.mubr.f32.gmra.mxu0 %v212
  %v1072 = vpop.f32.mrf.mxu0
  %v1073 = vadd.f32 0.0, %v1072
  %v1074 = vpop.f32.mrf.mxu0
  %1075 = vmatprep.mubr.f32.mxu0 %v526
  %1076 = vmatmul.mubr.f32.gmra.mxu0 %v214
  %v1077 = vpop.f32.mrf.mxu0
  %v1078 = vadd.f32 0.0, %v1077
  %v1079 = vpop.f32.mrf.mxu0
  %1080 = vmatprep.mubr.f32.mxu0 %v529
  %1081 = vmatmul.mubr.f32.gmra.mxu0 %v216
  %v1082 = vpop.f32.mrf.mxu0
  %v1083 = vadd.f32 0.0, %v1082
  %v1084 = vpop.f32.mrf.mxu0
  %1085 = vmatprep.mubr.f32.mxu0 %v532
  %1086 = vmatmul.mubr.f32.gmra.mxu0 %v218
  %v1087 = vpop.f32.mrf.mxu0
  %v1088 = vadd.f32 0.0, %v1087
  %v1089 = vpop.f32.mrf.mxu0
  %1090 = vmatprep.mubr.f32.mxu0 %v535
  %1091 = vmatmul.mubr.f32.gmra.mxu0 %v220
  %v1092 = vpop.f32.mrf.mxu0
  %v1093 = vadd.f32 0.0, %v1092
  %v1094 = vpop.f32.mrf.mxu0
  %1095 = vmatprep.mubr.f32.mxu0 %v538
  %1096 = vmatmul.mubr.f32.gmra.mxu0 %v222
  %v1097 = vpop.f32.mrf.mxu0
  %v1098 = vadd.f32 0.0, %v1097
  %v1099 = vpop.f32.mrf.mxu0
  %1100 = vmatprep.mubr.f32.mxu0 %v541
  %1101 = vmatmul.mubr.f32.gmra.mxu0 %v224
  %v1102 = vpop.f32.mrf.mxu0
  %v1103 = vadd.f32 0.0, %v1102
  %v1104 = vpop.f32.mrf.mxu0
  %1105 = vmatprep.mubr.f32.mxu0 %v544
  %1106 = vmatmul.mubr.f32.gmra.mxu0 %v226
  %v1107 = vpop.f32.mrf.mxu0
  %v1108 = vadd.f32 0.0, %v1107
  %v1109 = vpop.f32.mrf.mxu0
  %1110 = vmatprep.mubr.f32.mxu0 %v547
  %1111 = vmatmul.mubr.f32.gmra.mxu0 %v228
  %v1112 = vpop.f32.mrf.mxu0
  %v1113 = vadd.f32 0.0, %v1112
  %v1114 = vpop.f32.mrf.mxu0
  %1115 = vmatprep.mubr.f32.mxu0 %v550
  %1116 = vmatmul.mubr.f32.gmra.mxu0 %v230
  %v1117 = vpop.f32.mrf.mxu0
  %v1118 = vadd.f32 0.0, %v1117
  %v1119 = vpop.f32.mrf.mxu0
  %1120 = vdwg.mxu0
  %vm1121 = vcmask 130048
  %v1122 = vsel %vm1121, %v623, -inf
  %v1123 = vsel %vm1121, %v748, -inf
  %v1124 = vmax.f32 %v1122, %v1123
  %v1125 = vsel %vm1121, %v873, -inf
  %v1126 = vmax.f32 %v1124, %v1125
  %v1127 = vsel %vm1121, %v998, -inf
  %v1128 = vmax.f32 %v1126, %v1127
  %v1129 = vsel %vm1121, %v628, -inf
  %v1130 = vsel %vm1121, %v753, -inf
  %v1131 = vmax.f32 %v1129, %v1130
  %v1132 = vsel %vm1121, %v878, -inf
  %v1133 = vmax.f32 %v1131, %v1132
  %v1134 = vsel %vm1121, %v1003, -inf
  %v1135 = vmax.f32 %v1133, %v1134
  %v1136 = vsel %vm1121, %v633, -inf
  %v1137 = vsel %vm1121, %v758, -inf
  %v1138 = vmax.f32 %v1136, %v1137
  %v1139 = vsel %vm1121, %v883, -inf
  %v1140 = vmax.f32 %v1138, %v1139
  %v1141 = vsel %vm1121, %v1008, -inf
  %v1142 = vmax.f32 %v1140, %v1141
  %v1143 = vsel %vm1121, %v638, -inf
  %v1144 = vsel %vm1121, %v763, -inf
  %v1145 = vmax.f32 %v1143, %v1144
  %v1146 = vsel %vm1121, %v888, -inf
  %v1147 = vmax.f32 %v1145, %v1146
  %v1148 = vsel %vm1121, %v1013, -inf
  %v1149 = vmax.f32 %v1147, %v1148
  %v1150 = vsel %vm1121, %v643, -inf
  %v1151 = vsel %vm1121, %v768, -inf
  %v1152 = vmax.f32 %v1150, %v1151
  %v1153 = vsel %vm1121, %v893, -inf
  %v1154 = vmax.f32 %v1152, %v1153
  %v1155 = vsel %vm1121, %v1018, -inf
  %v1156 = vmax.f32 %v1154, %v1155
  %v1157 = vsel %vm1121, %v648, -inf
  %v1158 = vsel %vm1121, %v773, -inf
  %v1159 = vmax.f32 %v1157, %v1158
  %v1160 = vsel %vm1121, %v898, -inf
  %v1161 = vmax.f32 %v1159, %v1160
  %v1162 = vsel %vm1121, %v1023, -inf
  %v1163 = vmax.f32 %v1161, %v1162
  %v1164 = vsel %vm1121, %v653, -inf
  %v1165 = vsel %vm1121, %v778, -inf
  %v1166 = vmax.f32 %v1164, %v1165
  %v1167 = vsel %vm1121, %v903, -inf
  %v1168 = vmax.f32 %v1166, %v1167
  %v1169 = vsel %vm1121, %v1028, -inf
  %v1170 = vmax.f32 %v1168, %v1169
  %v1171 = vsel %vm1121, %v658, -inf
  %v1172 = vsel %vm1121, %v783, -inf
  %v1173 = vmax.f32 %v1171, %v1172
  %v1174 = vsel %vm1121, %v908, -inf
  %v1175 = vmax.f32 %v1173, %v1174
  %v1176 = vsel %vm1121, %v1033, -inf
  %v1177 = vmax.f32 %v1175, %v1176
  %v1178 = vsel %vm1121, %v663, -inf
  %v1179 = vsel %vm1121, %v788, -inf
  %v1180 = vmax.f32 %v1178, %v1179
  %v1181 = vsel %vm1121, %v913, -inf
  %v1182 = vmax.f32 %v1180, %v1181
  %v1183 = vsel %vm1121, %v1038, -inf
  %v1184 = vmax.f32 %v1182, %v1183
  %v1185 = vsel %vm1121, %v668, -inf
  %v1186 = vsel %vm1121, %v793, -inf
  %v1187 = vmax.f32 %v1185, %v1186
  %v1188 = vsel %vm1121, %v918, -inf
  %v1189 = vmax.f32 %v1187, %v1188
  %v1190 = vsel %vm1121, %v1043, -inf
  %v1191 = vmax.f32 %v1189, %v1190
  %v1192 = vsel %vm1121, %v673, -inf
  %v1193 = vsel %vm1121, %v798, -inf
  %v1194 = vmax.f32 %v1192, %v1193
  %v1195 = vsel %vm1121, %v923, -inf
  %v1196 = vmax.f32 %v1194, %v1195
  %v1197 = vsel %vm1121, %v1048, -inf
  %v1198 = vmax.f32 %v1196, %v1197
  %v1199 = vsel %vm1121, %v678, -inf
  %v1200 = vsel %vm1121, %v803, -inf
  %v1201 = vmax.f32 %v1199, %v1200
  %v1202 = vsel %vm1121, %v928, -inf
  %v1203 = vmax.f32 %v1201, %v1202
  %v1204 = vsel %vm1121, %v1053, -inf
  %v1205 = vmax.f32 %v1203, %v1204
  %v1206 = vsel %vm1121, %v683, -inf
  %v1207 = vsel %vm1121, %v808, -inf
  %v1208 = vmax.f32 %v1206, %v1207
  %v1209 = vsel %vm1121, %v933, -inf
  %v1210 = vmax.f32 %v1208, %v1209
  %v1211 = vsel %vm1121, %v1058, -inf
  %v1212 = vmax.f32 %v1210, %v1211
  %v1213 = vsel %vm1121, %v688, -inf
  %v1214 = vsel %vm1121, %v813, -inf
  %v1215 = vmax.f32 %v1213, %v1214
  %v1216 = vsel %vm1121, %v938, -inf
  %v1217 = vmax.f32 %v1215, %v1216
  %v1218 = vsel %vm1121, %v1063, -inf
  %v1219 = vmax.f32 %v1217, %v1218
  %v1220 = vsel %vm1121, %v693, -inf
  %v1221 = vsel %vm1121, %v818, -inf
  %v1222 = vmax.f32 %v1220, %v1221
  %v1223 = vsel %vm1121, %v943, -inf
  %v1224 = vmax.f32 %v1222, %v1223
  %v1225 = vsel %vm1121, %v1068, -inf
  %v1226 = vmax.f32 %v1224, %v1225
  %v1227 = vsel %vm1121, %v698, -inf
  %v1228 = vsel %vm1121, %v823, -inf
  %v1229 = vmax.f32 %v1227, %v1228
  %v1230 = vsel %vm1121, %v948, -inf
  %v1231 = vmax.f32 %v1229, %v1230
  %v1232 = vsel %vm1121, %v1073, -inf
  %v1233 = vmax.f32 %v1231, %v1232
  %v1234 = vsel %vm1121, %v703, -inf
  %v1235 = vsel %vm1121, %v828, -inf
  %v1236 = vmax.f32 %v1234, %v1235
  %v1237 = vsel %vm1121, %v953, -inf
  %v1238 = vmax.f32 %v1236, %v1237
  %v1239 = vsel %vm1121, %v1078, -inf
  %v1240 = vmax.f32 %v1238, %v1239
  %v1241 = vsel %vm1121, %v708, -inf
  %v1242 = vsel %vm1121, %v833, -inf
  %v1243 = vmax.f32 %v1241, %v1242
  %v1244 = vsel %vm1121, %v958, -inf
  %v1245 = vmax.f32 %v1243, %v1244
  %v1246 = vsel %vm1121, %v1083, -inf
  %v1247 = vmax.f32 %v1245, %v1246
  %v1248 = vsel %vm1121, %v713, -inf
  %v1249 = vsel %vm1121, %v838, -inf
  %v1250 = vmax.f32 %v1248, %v1249
  %v1251 = vsel %vm1121, %v963, -inf
  %v1252 = vmax.f32 %v1250, %v1251
  %v1253 = vsel %vm1121, %v1088, -inf
  %v1254 = vmax.f32 %v1252, %v1253
  %v1255 = vsel %vm1121, %v718, -inf
  %v1256 = vsel %vm1121, %v843, -inf
  %v1257 = vmax.f32 %v1255, %v1256
  %v1258 = vsel %vm1121, %v968, -inf
  %v1259 = vmax.f32 %v1257, %v1258
  %v1260 = vsel %vm1121, %v1093, -inf
  %v1261 = vmax.f32 %v1259, %v1260
  %v1262 = vsel %vm1121, %v723, -inf
  %v1263 = vsel %vm1121, %v848, -inf
  %v1264 = vmax.f32 %v1262, %v1263
  %v1265 = vsel %vm1121, %v973, -inf
  %v1266 = vmax.f32 %v1264, %v1265
  %v1267 = vsel %vm1121, %v1098, -inf
  %v1268 = vmax.f32 %v1266, %v1267
  %v1269 = vsel %vm1121, %v728, -inf
  %v1270 = vsel %vm1121, %v853, -inf
  %v1271 = vmax.f32 %v1269, %v1270
  %v1272 = vsel %vm1121, %v978, -inf
  %v1273 = vmax.f32 %v1271, %v1272
  %v1274 = vsel %vm1121, %v1103, -inf
  %v1275 = vmax.f32 %v1273, %v1274
  %v1276 = vsel %vm1121, %v733, -inf
  %v1277 = vsel %vm1121, %v858, -inf
  %v1278 = vmax.f32 %v1276, %v1277
  %v1279 = vsel %vm1121, %v983, -inf
  %v1280 = vmax.f32 %v1278, %v1279
  %v1281 = vsel %vm1121, %v1108, -inf
  %v1282 = vmax.f32 %v1280, %v1281
  %v1283 = vsel %vm1121, %v738, -inf
  %v1284 = vsel %vm1121, %v863, -inf
  %v1285 = vmax.f32 %v1283, %v1284
  %v1286 = vsel %vm1121, %v988, -inf
  %v1287 = vmax.f32 %v1285, %v1286
  %v1288 = vsel %vm1121, %v1113, -inf
  %v1289 = vmax.f32 %v1287, %v1288
  %v1290 = vsel %vm1121, %v743, -inf
  %v1291 = vsel %vm1121, %v868, -inf
  %v1292 = vmax.f32 %v1290, %v1291
  %v1293 = vsel %vm1121, %v993, -inf
  %v1294 = vmax.f32 %v1292, %v1293
  %v1295 = vsel %vm1121, %v1118, -inf
  %v1296 = vmax.f32 %v1294, %v1295
  %v1297 = vld [vmem:[%s2] sm:$0x1]
  %v1299 = vlaneseq
  %v1300 = vshrl.u32 %v1299, 7
  %v1301 = vsub.s32 0, %v1300
  %v1302 = vrot.slane %v1297, %v1301
  %v1304 = vadd.f32 %v1128, %v1302
  %v1305 = vadd.f32 %v1135, %v1302
  %v1306 = vadd.f32 %v1142, %v1302
  %v1307 = vadd.f32 %v1149, %v1302
  %v1308 = vadd.f32 %v1156, %v1302
  %v1309 = vadd.f32 %v1163, %v1302
  %v1310 = vadd.f32 %v1170, %v1302
  %v1311 = vadd.f32 %v1177, %v1302
  %v1312 = vadd.f32 %v1184, %v1302
  %v1313 = vadd.f32 %v1191, %v1302
  %v1314 = vadd.f32 %v1198, %v1302
  %v1315 = vadd.f32 %v1205, %v1302
  %v1316 = vadd.f32 %v1212, %v1302
  %v1317 = vadd.f32 %v1219, %v1302
  %v1318 = vadd.f32 %v1226, %v1302
  %v1319 = vadd.f32 %v1233, %v1302
  %v1320 = vadd.f32 %v1240, %v1302
  %v1321 = vadd.f32 %v1247, %v1302
  %v1322 = vadd.f32 %v1254, %v1302
  %v1323 = vadd.f32 %v1261, %v1302
  %v1324 = vadd.f32 %v1268, %v1302
  %v1325 = vadd.f32 %v1275, %v1302
  %v1326 = vadd.f32 %v1282, %v1302
  %v1327 = vadd.f32 %v1289, %v1302
  %v1328 = vadd.f32 %v1296, %v1302
  %v1329 = vmax.f32 %v1304, 0.0
  %v1330 = vmax.f32 %v1305, 0.0
  %v1331 = vmax.f32 %v1306, 0.0
  %v1332 = vmax.f32 %v1307, 0.0
  %v1333 = vmax.f32 %v1308, 0.0
  %v1334 = vmax.f32 %v1309, 0.0
  %v1335 = vmax.f32 %v1310, 0.0
  %v1336 = vmax.f32 %v1311, 0.0
  %v1337 = vmax.f32 %v1312, 0.0
  %v1338 = vmax.f32 %v1313, 0.0
  %v1339 = vmax.f32 %v1314, 0.0
  %v1340 = vmax.f32 %v1315, 0.0
  %v1341 = vmax.f32 %v1316, 0.0
  %v1342 = vmax.f32 %v1317, 0.0
  %v1343 = vmax.f32 %v1318, 0.0
  %v1344 = vmax.f32 %v1319, 0.0
  %v1345 = vmax.f32 %v1320, 0.0
  %v1346 = vmax.f32 %v1321, 0.0
  %v1347 = vmax.f32 %v1322, 0.0
  %v1348 = vmax.f32 %v1323, 0.0
  %v1349 = vmax.f32 %v1324, 0.0
  %v1350 = vmax.f32 %v1325, 0.0
  %v1351 = vmax.f32 %v1326, 0.0
  %v1352 = vmax.f32 %v1327, 0.0
  %v1353 = vmax.f32 %v1328, 0.0
  %v1354 = vld [vmem:[%s3] sm:$0xff]
  %v1355 = vld [vmem:[%s3 + $0x8] sm:$0xff]
  %s1356 = scalar_lea.vmem %s3, 16
  %v1357 = vld [vmem:[%s1356] sm:$0xff]
  %v1358 = vld [vmem:[%s1356 + $0x8] sm:$0xff]
  %v1360 = vsel %vm1121, %v1330, 0
  %1362 = vmatprep.subr.mxu0 0.0
  %1363 = vmatpush1.msra.mxu0 0.0
  %1364 = vmatprep.subr.mxu0 0.0
  %1365 = vmatpush1.msra.mxu0 0.0
  %1366 = vmatprep.subr.mxu0 0.0
  %1367 = vmatpush1.msra.mxu0 0.0
  %1368 = vmatprep.subr.mxu0 0.0
  %1369 = vmatpush1.msra.mxu0 0.0
  %1370 = vmatprep.subr.mxu0 0.0
  %1371 = vmatpush1.msra.mxu0 0.0
  %1372 = vmatprep.subr.mxu0 0.0
  %1373 = vmatpush1.msra.mxu0 0.0
  %1374 = vmatprep.subr.mxu0 0.0
  %1375 = vmatpush1.msra.mxu0 0.0
  %1376 = vmatprep.subr.mxu0 0.0
  %1377 = vmatpush1.msra.mxu0 0.0
  %1378 = vmatprep.subr.mxu0 0.0
  %1379 = vmatpush1.msra.mxu0 0.0
  %1380 = vmatprep.subr.mxu0 0.0
  %1381 = vmatpush1.msra.mxu0 0.0
  %1382 = vmatprep.subr.mxu0 0.0
  %1383 = vmatpush1.msra.mxu0 0.0
  %1384 = vmatprep.subr.mxu0 0.0
  %1385 = vmatpush1.msra.mxu0 0.0
  %1386 = vmatprep.subr.mxu0 0.0
  %1387 = vmatpush1.msra.mxu0 0.0
  %1388 = vmatprep.subr.mxu0 0.0
  %1389 = vmatpush1.msra.mxu0 0.0
  %1390 = vmatprep.subr.mxu0 0.0
  %1391 = vmatpush1.msra.mxu0 %v1358
  %1392 = vmatprep.subr.mxu0 0.0
  %1393 = vmatpush1.msra.mxu0 %v1357
  %1394 = vmatprep.subr.mxu0 0.0
  %1395 = vmatpush2.msra.mxu0 0.0
  %1396 = vmatprep.subr.mxu0 0.0
  %1397 = vmatpush2.msra.mxu0 0.0
  %1398 = vmatprep.subr.mxu0 0.0
  %1399 = vmatpush2.msra.mxu0 0.0
  %1400 = vmatprep.subr.mxu0 0.0
  %1401 = vmatpush2.msra.mxu0 0.0
  %1402 = vmatprep.subr.mxu0 0.0
  %1403 = vmatpush2.msra.mxu0 0.0
  %1404 = vmatprep.subr.mxu0 0.0
  %1405 = vmatpush2.msra.mxu0 0.0
  %1406 = vmatprep.subr.mxu0 0.0
  %1407 = vmatpush2.msra.mxu0 0.0
  %1408 = vmatprep.subr.mxu0 0.0
  %1409 = vmatpush2.msra.mxu0 0.0
  %1410 = vmatprep.subr.mxu0 0.0
  %1411 = vmatpush2.msra.mxu0 0.0
  %1412 = vmatprep.subr.mxu0 0.0
  %1413 = vmatpush2.msra.mxu0 0.0
  %1414 = vmatprep.subr.mxu0 0.0
  %1415 = vmatpush2.msra.mxu0 0.0
  %1416 = vmatprep.subr.mxu0 0.0
  %1417 = vmatpush2.msra.mxu0 0.0
  %1418 = vmatprep.subr.mxu0 0.0
  %1419 = vmatpush2.msra.mxu0 0.0
  %1420 = vmatprep.subr.mxu0 0.0
  %1421 = vmatpush2.msra.mxu0 0.0
  %1422 = vmatprep.subr.mxu0 0.0
  %1423 = vmatpush2.msra.mxu0 0.0
  %1424 = vmatprep.subr.mxu0 0.0
  %1425 = vmatpush2.msra.mxu0 0.0
  %1426 = vmatprep.mubr.f32.mxu0 0.0
  %1427 = vmatmul.mubr.f32.gmra.mxu0 %v1360
  %v1428 = vpop.f32.mrf.mxu0
  %v1429 = vadd.f32 0.0, %v1428
  %v1430 = vpop.f32.mrf.mxu0
  %1431 = vdwg.mxu0
  %v1433 = vsel %vm1121, %v1329, 0
  %1435 = vmatprep.subr.mxu0 0.0
  %1436 = vmatpush1.msra.mxu0 0.0
  %1437 = vmatprep.subr.mxu0 0.0
  %1438 = vmatpush1.msra.mxu0 0.0
  %1439 = vmatprep.subr.mxu0 0.0
  %1440 = vmatpush1.msra.mxu0 0.0
  %1441 = vmatprep.subr.mxu0 0.0
  %1442 = vmatpush1.msra.mxu0 0.0
  %1443 = vmatprep.subr.mxu0 0.0
  %1444 = vmatpush1.msra.mxu0 0.0
  %1445 = vmatprep.subr.mxu0 0.0
  %1446 = vmatpush1.msra.mxu0 0.0
  %1447 = vmatprep.subr.mxu0 0.0
  %1448 = vmatpush1.msra.mxu0 0.0
  %1449 = vmatprep.subr.mxu0 0.0
  %1450 = vmatpush1.msra.mxu0 0.0
  %1451 = vmatprep.subr.mxu0 0.0
  %1452 = vmatpush1.msra.mxu0 0.0
  %1453 = vmatprep.subr.mxu0 0.0
  %1454 = vmatpush1.msra.mxu0 0.0
  %1455 = vmatprep.subr.mxu0 0.0
  %1456 = vmatpush1.msra.mxu0 0.0
  %1457 = vmatprep.subr.mxu0 0.0
  %1458 = vmatpush1.msra.mxu0 0.0
  %1459 = vmatprep.subr.mxu0 0.0
  %1460 = vmatpush1.msra.mxu0 0.0
  %1461 = vmatprep.subr.mxu0 0.0
  %1462 = vmatpush1.msra.mxu0 0.0
  %1463 = vmatprep.subr.mxu0 0.0
  %1464 = vmatpush1.msra.mxu0 %v1355
  %1465 = vmatprep.subr.mxu0 0.0
  %1466 = vmatpush1.msra.mxu0 %v1354
  %1467 = vmatprep.subr.mxu0 0.0
  %1468 = vmatpush2.msra.mxu0 0.0
  %1469 = vmatprep.subr.mxu0 0.0
  %1470 = vmatpush2.msra.mxu0 0.0
  %1471 = vmatprep.subr.mxu0 0.0
  %1472 = vmatpush2.msra.mxu0 0.0
  %1473 = vmatprep.subr.mxu0 0.0
  %1474 = vmatpush2.msra.mxu0 0.0
  %1475 = vmatprep.subr.mxu0 0.0
  %1476 = vmatpush2.msra.mxu0 0.0
  %1477 = vmatprep.subr.mxu0 0.0
  %1478 = vmatpush2.msra.mxu0 0.0
  %1479 = vmatprep.subr.mxu0 0.0
  %1480 = vmatpush2.msra.mxu0 0.0
  %1481 = vmatprep.subr.mxu0 0.0
  %1482 = vmatpush2.msra.mxu0 0.0
  %1483 = vmatprep.subr.mxu0 0.0
  %1484 = vmatpush2.msra.mxu0 0.0
  %1485 = vmatprep.subr.mxu0 0.0
  %1486 = vmatpush2.msra.mxu0 0.0
  %1487 = vmatprep.subr.mxu0 0.0
  %1488 = vmatpush2.msra.mxu0 0.0
  %1489 = vmatprep.subr.mxu0 0.0
  %1490 = vmatpush2.msra.mxu0 0.0
  %1491 = vmatprep.subr.mxu0 0.0
  %1492 = vmatpush2.msra.mxu0 0.0
  %1493 = vmatprep.subr.mxu0 0.0
  %1494 = vmatpush2.msra.mxu0 0.0
  %1495 = vmatprep.subr.mxu0 0.0
  %1496 = vmatpush2.msra.mxu0 0.0
  %1497 = vmatprep.subr.mxu0 0.0
  %1498 = vmatpush2.msra.mxu0 0.0
  %1499 = vmatprep.mubr.f32.mxu0 0.0
  %1500 = vmatmul.mubr.f32.gmra.mxu0 %v1433
  %v1501 = vpop.f32.mrf.mxu0
  %v1502 = vadd.f32 %v1429, %v1501
  %v1503 = vpop.f32.mrf.mxu0
  %1504 = vdwg.mxu0
  %s1505 = scalar_lea.vmem %s3, 32
  %v1506 = vld [vmem:[%s1505] sm:$0xff]
  %v1507 = vld [vmem:[%s1505 + $0x8] sm:$0xff]
  %v1509 = vsel %vm1121, %v1331, 0
  %1511 = vmatprep.subr.mxu0 0.0
  %1512 = vmatpush1.msra.mxu0 0.0
  %1513 = vmatprep.subr.mxu0 0.0
  %1514 = vmatpush1.msra.mxu0 0.0
  %1515 = vmatprep.subr.mxu0 0.0
  %1516 = vmatpush1.msra.mxu0 0.0
  %1517 = vmatprep.subr.mxu0 0.0
  %1518 = vmatpush1.msra.mxu0 0.0
  %1519 = vmatprep.subr.mxu0 0.0
  %1520 = vmatpush1.msra.mxu0 0.0
  %1521 = vmatprep.subr.mxu0 0.0
  %1522 = vmatpush1.msra.mxu0 0.0
  %1523 = vmatprep.subr.mxu0 0.0
  %1524 = vmatpush1.msra.mxu0 0.0
  %1525 = vmatprep.subr.mxu0 0.0
  %1526 = vmatpush1.msra.mxu0 0.0
  %1527 = vmatprep.subr.mxu0 0.0
  %1528 = vmatpush1.msra.mxu0 0.0
  %1529 = vmatprep.subr.mxu0 0.0
  %1530 = vmatpush1.msra.mxu0 0.0
  %1531 = vmatprep.subr.mxu0 0.0
  %1532 = vmatpush1.msra.mxu0 0.0
  %1533 = vmatprep.subr.mxu0 0.0
  %1534 = vmatpush1.msra.mxu0 0.0
  %1535 = vmatprep.subr.mxu0 0.0
  %1536 = vmatpush1.msra.mxu0 0.0
  %1537 = vmatprep.subr.mxu0 0.0
  %1538 = vmatpush1.msra.mxu0 0.0
  %1539 = vmatprep.subr.mxu0 0.0
  %1540 = vmatpush1.msra.mxu0 %v1507
  %1541 = vmatprep.subr.mxu0 0.0
  %1542 = vmatpush1.msra.mxu0 %v1506
  %1543 = vmatprep.subr.mxu0 0.0
  %1544 = vmatpush2.msra.mxu0 0.0
  %1545 = vmatprep.subr.mxu0 0.0
  %1546 = vmatpush2.msra.mxu0 0.0
  %1547 = vmatprep.subr.mxu0 0.0
  %1548 = vmatpush2.msra.mxu0 0.0
  %1549 = vmatprep.subr.mxu0 0.0
  %1550 = vmatpush2.msra.mxu0 0.0
  %1551 = vmatprep.subr.mxu0 0.0
  %1552 = vmatpush2.msra.mxu0 0.0
  %1553 = vmatprep.subr.mxu0 0.0
  %1554 = vmatpush2.msra.mxu0 0.0
  %1555 = vmatprep.subr.mxu0 0.0
  %1556 = vmatpush2.msra.mxu0 0.0
  %1557 = vmatprep.subr.mxu0 0.0
  %1558 = vmatpush2.msra.mxu0 0.0
  %1559 = vmatprep.subr.mxu0 0.0
  %1560 = vmatpush2.msra.mxu0 0.0
  %1561 = vmatprep.subr.mxu0 0.0
  %1562 = vmatpush2.msra.mxu0 0.0
  %1563 = vmatprep.subr.mxu0 0.0
  %1564 = vmatpush2.msra.mxu0 0.0
  %1565 = vmatprep.subr.mxu0 0.0
  %1566 = vmatpush2.msra.mxu0 0.0
  %1567 = vmatprep.subr.mxu0 0.0
  %1568 = vmatpush2.msra.mxu0 0.0
  %1569 = vmatprep.subr.mxu0 0.0
  %1570 = vmatpush2.msra.mxu0 0.0
  %1571 = vmatprep.subr.mxu0 0.0
  %1572 = vmatpush2.msra.mxu0 0.0
  %1573 = vmatprep.subr.mxu0 0.0
  %1574 = vmatpush2.msra.mxu0 0.0
  %1575 = vmatprep.mubr.f32.mxu0 0.0
  %1576 = vmatmul.mubr.f32.gmra.mxu0 %v1509
  %v1577 = vpop.f32.mrf.mxu0
  %v1578 = vadd.f32 0.0, %v1577
  %v1579 = vpop.f32.mrf.mxu0
  %1580 = vdwg.mxu0
  %v1581 = vadd.f32 %v1502, %v1578
  %s1582 = scalar_lea.vmem %s3, 48
  %v1583 = vld [vmem:[%s1582] sm:$0xff]
  %v1584 = vld [vmem:[%s1582 + $0x8] sm:$0xff]
  %v1586 = vsel %vm1121, %v1332, 0
  %1588 = vmatprep.subr.mxu0 0.0
  %1589 = vmatpush1.msra.mxu0 0.0
  %1590 = vmatprep.subr.mxu0 0.0
  %1591 = vmatpush1.msra.mxu0 0.0
  %1592 = vmatprep.subr.mxu0 0.0
  %1593 = vmatpush1.msra.mxu0 0.0
  %1594 = vmatprep.subr.mxu0 0.0
  %1595 = vmatpush1.msra.mxu0 0.0
  %1596 = vmatprep.subr.mxu0 0.0
  %1597 = vmatpush1.msra.mxu0 0.0
  %1598 = vmatprep.subr.mxu0 0.0
  %1599 = vmatpush1.msra.mxu0 0.0
  %1600 = vmatprep.subr.mxu0 0.0
  %1601 = vmatpush1.msra.mxu0 0.0
  %1602 = vmatprep.subr.mxu0 0.0
  %1603 = vmatpush1.msra.mxu0 0.0
  %1604 = vmatprep.subr.mxu0 0.0
  %1605 = vmatpush1.msra.mxu0 0.0
  %1606 = vmatprep.subr.mxu0 0.0
  %1607 = vmatpush1.msra.mxu0 0.0
  %1608 = vmatprep.subr.mxu0 0.0
  %1609 = vmatpush1.msra.mxu0 0.0
  %1610 = vmatprep.subr.mxu0 0.0
  %1611 = vmatpush1.msra.mxu0 0.0
  %1612 = vmatprep.subr.mxu0 0.0
  %1613 = vmatpush1.msra.mxu0 0.0
  %1614 = vmatprep.subr.mxu0 0.0
  %1615 = vmatpush1.msra.mxu0 0.0
  %1616 = vmatprep.subr.mxu0 0.0
  %1617 = vmatpush1.msra.mxu0 %v1584
  %1618 = vmatprep.subr.mxu0 0.0
  %1619 = vmatpush1.msra.mxu0 %v1583
  %1620 = vmatprep.subr.mxu0 0.0
  %1621 = vmatpush2.msra.mxu0 0.0
  %1622 = vmatprep.subr.mxu0 0.0
  %1623 = vmatpush2.msra.mxu0 0.0
  %1624 = vmatprep.subr.mxu0 0.0
  %1625 = vmatpush2.msra.mxu0 0.0
  %1626 = vmatprep.subr.mxu0 0.0
  %1627 = vmatpush2.msra.mxu0 0.0
  %1628 = vmatprep.subr.mxu0 0.0
  %1629 = vmatpush2.msra.mxu0 0.0
  %1630 = vmatprep.subr.mxu0 0.0
  %1631 = vmatpush2.msra.mxu0 0.0
  %1632 = vmatprep.subr.mxu0 0.0
  %1633 = vmatpush2.msra.mxu0 0.0
  %1634 = vmatprep.subr.mxu0 0.0
  %1635 = vmatpush2.msra.mxu0 0.0
  %1636 = vmatprep.subr.mxu0 0.0
  %1637 = vmatpush2.msra.mxu0 0.0
  %1638 = vmatprep.subr.mxu0 0.0
  %1639 = vmatpush2.msra.mxu0 0.0
  %1640 = vmatprep.subr.mxu0 0.0
  %1641 = vmatpush2.msra.mxu0 0.0
  %1642 = vmatprep.subr.mxu0 0.0
  %1643 = vmatpush2.msra.mxu0 0.0
  %1644 = vmatprep.subr.mxu0 0.0
  %1645 = vmatpush2.msra.mxu0 0.0
  %1646 = vmatprep.subr.mxu0 0.0
  %1647 = vmatpush2.msra.mxu0 0.0
  %1648 = vmatprep.subr.mxu0 0.0
  %1649 = vmatpush2.msra.mxu0 0.0
  %1650 = vmatprep.subr.mxu0 0.0
  %1651 = vmatpush2.msra.mxu0 0.0
  %1652 = vmatprep.mubr.f32.mxu0 0.0
  %1653 = vmatmul.mubr.f32.gmra.mxu0 %v1586
  %v1654 = vpop.f32.mrf.mxu0
  %v1655 = vadd.f32 0.0, %v1654
  %v1656 = vpop.f32.mrf.mxu0
  %1657 = vdwg.mxu0
  %v1658 = vadd.f32 %v1581, %v1655
  %s1659 = scalar_lea.vmem %s3, 64
  %v1660 = vld [vmem:[%s1659] sm:$0xff]
  %v1661 = vld [vmem:[%s1659 + $0x8] sm:$0xff]
  %v1663 = vsel %vm1121, %v1333, 0
  %1665 = vmatprep.subr.mxu0 0.0
  %1666 = vmatpush1.msra.mxu0 0.0
  %1667 = vmatprep.subr.mxu0 0.0
  %1668 = vmatpush1.msra.mxu0 0.0
  %1669 = vmatprep.subr.mxu0 0.0
  %1670 = vmatpush1.msra.mxu0 0.0
  %1671 = vmatprep.subr.mxu0 0.0
  %1672 = vmatpush1.msra.mxu0 0.0
  %1673 = vmatprep.subr.mxu0 0.0
  %1674 = vmatpush1.msra.mxu0 0.0
  %1675 = vmatprep.subr.mxu0 0.0
  %1676 = vmatpush1.msra.mxu0 0.0
  %1677 = vmatprep.subr.mxu0 0.0
  %1678 = vmatpush1.msra.mxu0 0.0
  %1679 = vmatprep.subr.mxu0 0.0
  %1680 = vmatpush1.msra.mxu0 0.0
  %1681 = vmatprep.subr.mxu0 0.0
  %1682 = vmatpush1.msra.mxu0 0.0
  %1683 = vmatprep.subr.mxu0 0.0
  %1684 = vmatpush1.msra.mxu0 0.0
  %1685 = vmatprep.subr.mxu0 0.0
  %1686 = vmatpush1.msra.mxu0 0.0
  %1687 = vmatprep.subr.mxu0 0.0
  %1688 = vmatpush1.msra.mxu0 0.0
  %1689 = vmatprep.subr.mxu0 0.0
  %1690 = vmatpush1.msra.mxu0 0.0
  %1691 = vmatprep.subr.mxu0 0.0
  %1692 = vmatpush1.msra.mxu0 0.0
  %1693 = vmatprep.subr.mxu0 0.0
  %1694 = vmatpush1.msra.mxu0 %v1661
  %1695 = vmatprep.subr.mxu0 0.0
  %1696 = vmatpush1.msra.mxu0 %v1660
  %1697 = vmatprep.subr.mxu0 0.0
  %1698 = vmatpush2.msra.mxu0 0.0
  %1699 = vmatprep.subr.mxu0 0.0
  %1700 = vmatpush2.msra.mxu0 0.0
  %1701 = vmatprep.subr.mxu0 0.0
  %1702 = vmatpush2.msra.mxu0 0.0
  %1703 = vmatprep.subr.mxu0 0.0
  %1704 = vmatpush2.msra.mxu0 0.0
  %1705 = vmatprep.subr.mxu0 0.0
  %1706 = vmatpush2.msra.mxu0 0.0
  %1707 = vmatprep.subr.mxu0 0.0
  %1708 = vmatpush2.msra.mxu0 0.0
  %1709 = vmatprep.subr.mxu0 0.0
  %1710 = vmatpush2.msra.mxu0 0.0
  %1711 = vmatprep.subr.mxu0 0.0
  %1712 = vmatpush2.msra.mxu0 0.0
  %1713 = vmatprep.subr.mxu0 0.0
  %1714 = vmatpush2.msra.mxu0 0.0
  %1715 = vmatprep.subr.mxu0 0.0
  %1716 = vmatpush2.msra.mxu0 0.0
  %1717 = vmatprep.subr.mxu0 0.0
  %1718 = vmatpush2.msra.mxu0 0.0
  %1719 = vmatprep.subr.mxu0 0.0
  %1720 = vmatpush2.msra.mxu0 0.0
  %1721 = vmatprep.subr.mxu0 0.0
  %1722 = vmatpush2.msra.mxu0 0.0
  %1723 = vmatprep.subr.mxu0 0.0
  %1724 = vmatpush2.msra.mxu0 0.0
  %1725 = vmatprep.subr.mxu0 0.0
  %1726 = vmatpush2.msra.mxu0 0.0
  %1727 = vmatprep.subr.mxu0 0.0
  %1728 = vmatpush2.msra.mxu0 0.0
  %1729 = vmatprep.mubr.f32.mxu0 0.0
  %1730 = vmatmul.mubr.f32.gmra.mxu0 %v1663
  %v1731 = vpop.f32.mrf.mxu0
  %v1732 = vadd.f32 0.0, %v1731
  %v1733 = vpop.f32.mrf.mxu0
  %1734 = vdwg.mxu0
  %v1735 = vadd.f32 %v1658, %v1732
  %s1736 = scalar_lea.vmem %s3, 80
  %v1737 = vld [vmem:[%s1736] sm:$0xff]
  %v1738 = vld [vmem:[%s1736 + $0x8] sm:$0xff]
  %v1740 = vsel %vm1121, %v1334, 0
  %1742 = vmatprep.subr.mxu0 0.0
  %1743 = vmatpush1.msra.mxu0 0.0
  %1744 = vmatprep.subr.mxu0 0.0
  %1745 = vmatpush1.msra.mxu0 0.0
  %1746 = vmatprep.subr.mxu0 0.0
  %1747 = vmatpush1.msra.mxu0 0.0
  %1748 = vmatprep.subr.mxu0 0.0
  %1749 = vmatpush1.msra.mxu0 0.0
  %1750 = vmatprep.subr.mxu0 0.0
  %1751 = vmatpush1.msra.mxu0 0.0
  %1752 = vmatprep.subr.mxu0 0.0
  %1753 = vmatpush1.msra.mxu0 0.0
  %1754 = vmatprep.subr.mxu0 0.0
  %1755 = vmatpush1.msra.mxu0 0.0
  %1756 = vmatprep.subr.mxu0 0.0
  %1757 = vmatpush1.msra.mxu0 0.0
  %1758 = vmatprep.subr.mxu0 0.0
  %1759 = vmatpush1.msra.mxu0 0.0
  %1760 = vmatprep.subr.mxu0 0.0
  %1761 = vmatpush1.msra.mxu0 0.0
  %1762 = vmatprep.subr.mxu0 0.0
  %1763 = vmatpush1.msra.mxu0 0.0
  %1764 = vmatprep.subr.mxu0 0.0
  %1765 = vmatpush1.msra.mxu0 0.0
  %1766 = vmatprep.subr.mxu0 0.0
  %1767 = vmatpush1.msra.mxu0 0.0
  %1768 = vmatprep.subr.mxu0 0.0
  %1769 = vmatpush1.msra.mxu0 0.0
  %1770 = vmatprep.subr.mxu0 0.0
  %1771 = vmatpush1.msra.mxu0 %v1738
  %1772 = vmatprep.subr.mxu0 0.0
  %1773 = vmatpush1.msra.mxu0 %v1737
  %1774 = vmatprep.subr.mxu0 0.0
  %1775 = vmatpush2.msra.mxu0 0.0
  %1776 = vmatprep.subr.mxu0 0.0
  %1777 = vmatpush2.msra.mxu0 0.0
  %1778 = vmatprep.subr.mxu0 0.0
  %1779 = vmatpush2.msra.mxu0 0.0
  %1780 = vmatprep.subr.mxu0 0.0
  %1781 = vmatpush2.msra.mxu0 0.0
  %1782 = vmatprep.subr.mxu0 0.0
  %1783 = vmatpush2.msra.mxu0 0.0
  %1784 = vmatprep.subr.mxu0 0.0
  %1785 = vmatpush2.msra.mxu0 0.0
  %1786 = vmatprep.subr.mxu0 0.0
  %1787 = vmatpush2.msra.mxu0 0.0
  %1788 = vmatprep.subr.mxu0 0.0
  %1789 = vmatpush2.msra.mxu0 0.0
  %1790 = vmatprep.subr.mxu0 0.0
  %1791 = vmatpush2.msra.mxu0 0.0
  %1792 = vmatprep.subr.mxu0 0.0
  %1793 = vmatpush2.msra.mxu0 0.0
  %1794 = vmatprep.subr.mxu0 0.0
  %1795 = vmatpush2.msra.mxu0 0.0
  %1796 = vmatprep.subr.mxu0 0.0
  %1797 = vmatpush2.msra.mxu0 0.0
  %1798 = vmatprep.subr.mxu0 0.0
  %1799 = vmatpush2.msra.mxu0 0.0
  %1800 = vmatprep.subr.mxu0 0.0
  %1801 = vmatpush2.msra.mxu0 0.0
  %1802 = vmatprep.subr.mxu0 0.0
  %1803 = vmatpush2.msra.mxu0 0.0
  %1804 = vmatprep.subr.mxu0 0.0
  %1805 = vmatpush2.msra.mxu0 0.0
  %1806 = vmatprep.mubr.f32.mxu0 0.0
  %1807 = vmatmul.mubr.f32.gmra.mxu0 %v1740
  %v1808 = vpop.f32.mrf.mxu0
  %v1809 = vadd.f32 0.0, %v1808
  %v1810 = vpop.f32.mrf.mxu0
  %1811 = vdwg.mxu0
  %v1812 = vadd.f32 %v1735, %v1809
  %s1813 = scalar_lea.vmem %s3, 96
  %v1814 = vld [vmem:[%s1813] sm:$0xff]
  %v1815 = vld [vmem:[%s1813 + $0x8] sm:$0xff]
  %v1817 = vsel %vm1121, %v1335, 0
  %1819 = vmatprep.subr.mxu0 0.0
  %1820 = vmatpush1.msra.mxu0 0.0
  %1821 = vmatprep.subr.mxu0 0.0
  %1822 = vmatpush1.msra.mxu0 0.0
  %1823 = vmatprep.subr.mxu0 0.0
  %1824 = vmatpush1.msra.mxu0 0.0
  %1825 = vmatprep.subr.mxu0 0.0
  %1826 = vmatpush1.msra.mxu0 0.0
  %1827 = vmatprep.subr.mxu0 0.0
  %1828 = vmatpush1.msra.mxu0 0.0
  %1829 = vmatprep.subr.mxu0 0.0
  %1830 = vmatpush1.msra.mxu0 0.0
  %1831 = vmatprep.subr.mxu0 0.0
  %1832 = vmatpush1.msra.mxu0 0.0
  %1833 = vmatprep.subr.mxu0 0.0
  %1834 = vmatpush1.msra.mxu0 0.0
  %1835 = vmatprep.subr.mxu0 0.0
  %1836 = vmatpush1.msra.mxu0 0.0
  %1837 = vmatprep.subr.mxu0 0.0
  %1838 = vmatpush1.msra.mxu0 0.0
  %1839 = vmatprep.subr.mxu0 0.0
  %1840 = vmatpush1.msra.mxu0 0.0
  %1841 = vmatprep.subr.mxu0 0.0
  %1842 = vmatpush1.msra.mxu0 0.0
  %1843 = vmatprep.subr.mxu0 0.0
  %1844 = vmatpush1.msra.mxu0 0.0
  %1845 = vmatprep.subr.mxu0 0.0
  %1846 = vmatpush1.msra.mxu0 0.0
  %1847 = vmatprep.subr.mxu0 0.0
  %1848 = vmatpush1.msra.mxu0 %v1815
  %1849 = vmatprep.subr.mxu0 0.0
  %1850 = vmatpush1.msra.mxu0 %v1814
  %1851 = vmatprep.subr.mxu0 0.0
  %1852 = vmatpush2.msra.mxu0 0.0
  %1853 = vmatprep.subr.mxu0 0.0
  %1854 = vmatpush2.msra.mxu0 0.0
  %1855 = vmatprep.subr.mxu0 0.0
  %1856 = vmatpush2.msra.mxu0 0.0
  %1857 = vmatprep.subr.mxu0 0.0
  %1858 = vmatpush2.msra.mxu0 0.0
  %1859 = vmatprep.subr.mxu0 0.0
  %1860 = vmatpush2.msra.mxu0 0.0
  %1861 = vmatprep.subr.mxu0 0.0
  %1862 = vmatpush2.msra.mxu0 0.0
  %1863 = vmatprep.subr.mxu0 0.0
  %1864 = vmatpush2.msra.mxu0 0.0
  %1865 = vmatprep.subr.mxu0 0.0
  %1866 = vmatpush2.msra.mxu0 0.0
  %1867 = vmatprep.subr.mxu0 0.0
  %1868 = vmatpush2.msra.mxu0 0.0
  %1869 = vmatprep.subr.mxu0 0.0
  %1870 = vmatpush2.msra.mxu0 0.0
  %1871 = vmatprep.subr.mxu0 0.0
  %1872 = vmatpush2.msra.mxu0 0.0
  %1873 = vmatprep.subr.mxu0 0.0
  %1874 = vmatpush2.msra.mxu0 0.0
  %1875 = vmatprep.subr.mxu0 0.0
  %1876 = vmatpush2.msra.mxu0 0.0
  %1877 = vmatprep.subr.mxu0 0.0
  %1878 = vmatpush2.msra.mxu0 0.0
  %1879 = vmatprep.subr.mxu0 0.0
  %1880 = vmatpush2.msra.mxu0 0.0
  %1881 = vmatprep.subr.mxu0 0.0
  %1882 = vmatpush2.msra.mxu0 0.0
  %1883 = vmatprep.mubr.f32.mxu0 0.0
  %1884 = vmatmul.mubr.f32.gmra.mxu0 %v1817
  %v1885 = vpop.f32.mrf.mxu0
  %v1886 = vadd.f32 0.0, %v1885
  %v1887 = vpop.f32.mrf.mxu0
  %1888 = vdwg.mxu0
  %v1889 = vadd.f32 %v1812, %v1886
  %s1890 = scalar_lea.vmem %s3, 112
  %v1891 = vld [vmem:[%s1890] sm:$0xff]
  %v1892 = vld [vmem:[%s1890 + $0x8] sm:$0xff]
  %v1894 = vsel %vm1121, %v1336, 0
  %1896 = vmatprep.subr.mxu0 0.0
  %1897 = vmatpush1.msra.mxu0 0.0
  %1898 = vmatprep.subr.mxu0 0.0
  %1899 = vmatpush1.msra.mxu0 0.0
  %1900 = vmatprep.subr.mxu0 0.0
  %1901 = vmatpush1.msra.mxu0 0.0
  %1902 = vmatprep.subr.mxu0 0.0
  %1903 = vmatpush1.msra.mxu0 0.0
  %1904 = vmatprep.subr.mxu0 0.0
  %1905 = vmatpush1.msra.mxu0 0.0
  %1906 = vmatprep.subr.mxu0 0.0
  %1907 = vmatpush1.msra.mxu0 0.0
  %1908 = vmatprep.subr.mxu0 0.0
  %1909 = vmatpush1.msra.mxu0 0.0
  %1910 = vmatprep.subr.mxu0 0.0
  %1911 = vmatpush1.msra.mxu0 0.0
  %1912 = vmatprep.subr.mxu0 0.0
  %1913 = vmatpush1.msra.mxu0 0.0
  %1914 = vmatprep.subr.mxu0 0.0
  %1915 = vmatpush1.msra.mxu0 0.0
  %1916 = vmatprep.subr.mxu0 0.0
  %1917 = vmatpush1.msra.mxu0 0.0
  %1918 = vmatprep.subr.mxu0 0.0
  %1919 = vmatpush1.msra.mxu0 0.0
  %1920 = vmatprep.subr.mxu0 0.0
  %1921 = vmatpush1.msra.mxu0 0.0
  %1922 = vmatprep.subr.mxu0 0.0
  %1923 = vmatpush1.msra.mxu0 0.0
  %1924 = vmatprep.subr.mxu0 0.0
  %1925 = vmatpush1.msra.mxu0 %v1892
  %1926 = vmatprep.subr.mxu0 0.0
  %1927 = vmatpush1.msra.mxu0 %v1891
  %1928 = vmatprep.subr.mxu0 0.0
  %1929 = vmatpush2.msra.mxu0 0.0
  %1930 = vmatprep.subr.mxu0 0.0
  %1931 = vmatpush2.msra.mxu0 0.0
  %1932 = vmatprep.subr.mxu0 0.0
  %1933 = vmatpush2.msra.mxu0 0.0
  %1934 = vmatprep.subr.mxu0 0.0
  %1935 = vmatpush2.msra.mxu0 0.0
  %1936 = vmatprep.subr.mxu0 0.0
  %1937 = vmatpush2.msra.mxu0 0.0
  %1938 = vmatprep.subr.mxu0 0.0
  %1939 = vmatpush2.msra.mxu0 0.0
  %1940 = vmatprep.subr.mxu0 0.0
  %1941 = vmatpush2.msra.mxu0 0.0
  %1942 = vmatprep.subr.mxu0 0.0
  %1943 = vmatpush2.msra.mxu0 0.0
  %1944 = vmatprep.subr.mxu0 0.0
  %1945 = vmatpush2.msra.mxu0 0.0
  %1946 = vmatprep.subr.mxu0 0.0
  %1947 = vmatpush2.msra.mxu0 0.0
  %1948 = vmatprep.subr.mxu0 0.0
  %1949 = vmatpush2.msra.mxu0 0.0
  %1950 = vmatprep.subr.mxu0 0.0
  %1951 = vmatpush2.msra.mxu0 0.0
  %1952 = vmatprep.subr.mxu0 0.0
  %1953 = vmatpush2.msra.mxu0 0.0
  %1954 = vmatprep.subr.mxu0 0.0
  %1955 = vmatpush2.msra.mxu0 0.0
  %1956 = vmatprep.subr.mxu0 0.0
  %1957 = vmatpush2.msra.mxu0 0.0
  %1958 = vmatprep.subr.mxu0 0.0
  %1959 = vmatpush2.msra.mxu0 0.0
  %1960 = vmatprep.mubr.f32.mxu0 0.0
  %1961 = vmatmul.mubr.f32.gmra.mxu0 %v1894
  %v1962 = vpop.f32.mrf.mxu0
  %v1963 = vadd.f32 0.0, %v1962
  %v1964 = vpop.f32.mrf.mxu0
  %1965 = vdwg.mxu0
  %v1966 = vadd.f32 %v1889, %v1963
  %s1967 = scalar_lea.vmem %s3, 128
  %v1968 = vld [vmem:[%s1967] sm:$0xff]
  %v1969 = vld [vmem:[%s1967 + $0x8] sm:$0xff]
  %v1971 = vsel %vm1121, %v1337, 0
  %1973 = vmatprep.subr.mxu0 0.0
  %1974 = vmatpush1.msra.mxu0 0.0
  %1975 = vmatprep.subr.mxu0 0.0
  %1976 = vmatpush1.msra.mxu0 0.0
  %1977 = vmatprep.subr.mxu0 0.0
  %1978 = vmatpush1.msra.mxu0 0.0
  %1979 = vmatprep.subr.mxu0 0.0
  %1980 = vmatpush1.msra.mxu0 0.0
  %1981 = vmatprep.subr.mxu0 0.0
  %1982 = vmatpush1.msra.mxu0 0.0
  %1983 = vmatprep.subr.mxu0 0.0
  %1984 = vmatpush1.msra.mxu0 0.0
  %1985 = vmatprep.subr.mxu0 0.0
  %1986 = vmatpush1.msra.mxu0 0.0
  %1987 = vmatprep.subr.mxu0 0.0
  %1988 = vmatpush1.msra.mxu0 0.0
  %1989 = vmatprep.subr.mxu0 0.0
  %1990 = vmatpush1.msra.mxu0 0.0
  %1991 = vmatprep.subr.mxu0 0.0
  %1992 = vmatpush1.msra.mxu0 0.0
  %1993 = vmatprep.subr.mxu0 0.0
  %1994 = vmatpush1.msra.mxu0 0.0
  %1995 = vmatprep.subr.mxu0 0.0
  %1996 = vmatpush1.msra.mxu0 0.0
  %1997 = vmatprep.subr.mxu0 0.0
  %1998 = vmatpush1.msra.mxu0 0.0
  %1999 = vmatprep.subr.mxu0 0.0
  %2000 = vmatpush1.msra.mxu0 0.0
  %2001 = vmatprep.subr.mxu0 0.0
  %2002 = vmatpush1.msra.mxu0 %v1969
  %2003 = vmatprep.subr.mxu0 0.0
  %2004 = vmatpush1.msra.mxu0 %v1968
  %2005 = vmatprep.subr.mxu0 0.0
  %2006 = vmatpush2.msra.mxu0 0.0
  %2007 = vmatprep.subr.mxu0 0.0
  %2008 = vmatpush2.msra.mxu0 0.0
  %2009 = vmatprep.subr.mxu0 0.0
  %2010 = vmatpush2.msra.mxu0 0.0
  %2011 = vmatprep.subr.mxu0 0.0
  %2012 = vmatpush2.msra.mxu0 0.0
  %2013 = vmatprep.subr.mxu0 0.0
  %2014 = vmatpush2.msra.mxu0 0.0
  %2015 = vmatprep.subr.mxu0 0.0
  %2016 = vmatpush2.msra.mxu0 0.0
  %2017 = vmatprep.subr.mxu0 0.0
  %2018 = vmatpush2.msra.mxu0 0.0
  %2019 = vmatprep.subr.mxu0 0.0
  %2020 = vmatpush2.msra.mxu0 0.0
  %2021 = vmatprep.subr.mxu0 0.0
  %2022 = vmatpush2.msra.mxu0 0.0
  %2023 = vmatprep.subr.mxu0 0.0
  %2024 = vmatpush2.msra.mxu0 0.0
  %2025 = vmatprep.subr.mxu0 0.0
  %2026 = vmatpush2.msra.mxu0 0.0
  %2027 = vmatprep.subr.mxu0 0.0
  %2028 = vmatpush2.msra.mxu0 0.0
  %2029 = vmatprep.subr.mxu0 0.0
  %2030 = vmatpush2.msra.mxu0 0.0
  %2031 = vmatprep.subr.mxu0 0.0
  %2032 = vmatpush2.msra.mxu0 0.0
  %2033 = vmatprep.subr.mxu0 0.0
  %2034 = vmatpush2.msra.mxu0 0.0
  %2035 = vmatprep.subr.mxu0 0.0
  %2036 = vmatpush2.msra.mxu0 0.0
  %2037 = vmatprep.mubr.f32.mxu0 0.0
  %2038 = vmatmul.mubr.f32.gmra.mxu0 %v1971
  %v2039 = vpop.f32.mrf.mxu0
  %v2040 = vadd.f32 0.0, %v2039
  %v2041 = vpop.f32.mrf.mxu0
  %2042 = vdwg.mxu0
  %v2043 = vadd.f32 %v1966, %v2040
  %s2044 = scalar_lea.vmem %s3, 144
  %v2045 = vld [vmem:[%s2044] sm:$0xff]
  %v2046 = vld [vmem:[%s2044 + $0x8] sm:$0xff]
  %v2048 = vsel %vm1121, %v1338, 0
  %2050 = vmatprep.subr.mxu0 0.0
  %2051 = vmatpush1.msra.mxu0 0.0
  %2052 = vmatprep.subr.mxu0 0.0
  %2053 = vmatpush1.msra.mxu0 0.0
  %2054 = vmatprep.subr.mxu0 0.0
  %2055 = vmatpush1.msra.mxu0 0.0
  %2056 = vmatprep.subr.mxu0 0.0
  %2057 = vmatpush1.msra.mxu0 0.0
  %2058 = vmatprep.subr.mxu0 0.0
  %2059 = vmatpush1.msra.mxu0 0.0
  %2060 = vmatprep.subr.mxu0 0.0
  %2061 = vmatpush1.msra.mxu0 0.0
  %2062 = vmatprep.subr.mxu0 0.0
  %2063 = vmatpush1.msra.mxu0 0.0
  %2064 = vmatprep.subr.mxu0 0.0
  %2065 = vmatpush1.msra.mxu0 0.0
  %2066 = vmatprep.subr.mxu0 0.0
  %2067 = vmatpush1.msra.mxu0 0.0
  %2068 = vmatprep.subr.mxu0 0.0
  %2069 = vmatpush1.msra.mxu0 0.0
  %2070 = vmatprep.subr.mxu0 0.0
  %2071 = vmatpush1.msra.mxu0 0.0
  %2072 = vmatprep.subr.mxu0 0.0
  %2073 = vmatpush1.msra.mxu0 0.0
  %2074 = vmatprep.subr.mxu0 0.0
  %2075 = vmatpush1.msra.mxu0 0.0
  %2076 = vmatprep.subr.mxu0 0.0
  %2077 = vmatpush1.msra.mxu0 0.0
  %2078 = vmatprep.subr.mxu0 0.0
  %2079 = vmatpush1.msra.mxu0 %v2046
  %2080 = vmatprep.subr.mxu0 0.0
  %2081 = vmatpush1.msra.mxu0 %v2045
  %2082 = vmatprep.subr.mxu0 0.0
  %2083 = vmatpush2.msra.mxu0 0.0
  %2084 = vmatprep.subr.mxu0 0.0
  %2085 = vmatpush2.msra.mxu0 0.0
  %2086 = vmatprep.subr.mxu0 0.0
  %2087 = vmatpush2.msra.mxu0 0.0
  %2088 = vmatprep.subr.mxu0 0.0
  %2089 = vmatpush2.msra.mxu0 0.0
  %2090 = vmatprep.subr.mxu0 0.0
  %2091 = vmatpush2.msra.mxu0 0.0
  %2092 = vmatprep.subr.mxu0 0.0
  %2093 = vmatpush2.msra.mxu0 0.0
  %2094 = vmatprep.subr.mxu0 0.0
  %2095 = vmatpush2.msra.mxu0 0.0
  %2096 = vmatprep.subr.mxu0 0.0
  %2097 = vmatpush2.msra.mxu0 0.0
  %2098 = vmatprep.subr.mxu0 0.0
  %2099 = vmatpush2.msra.mxu0 0.0
  %2100 = vmatprep.subr.mxu0 0.0
  %2101 = vmatpush2.msra.mxu0 0.0
  %2102 = vmatprep.subr.mxu0 0.0
  %2103 = vmatpush2.msra.mxu0 0.0
  %2104 = vmatprep.subr.mxu0 0.0
  %2105 = vmatpush2.msra.mxu0 0.0
  %2106 = vmatprep.subr.mxu0 0.0
  %2107 = vmatpush2.msra.mxu0 0.0
  %2108 = vmatprep.subr.mxu0 0.0
  %2109 = vmatpush2.msra.mxu0 0.0
  %2110 = vmatprep.subr.mxu0 0.0
  %2111 = vmatpush2.msra.mxu0 0.0
  %2112 = vmatprep.subr.mxu0 0.0
  %2113 = vmatpush2.msra.mxu0 0.0
  %2114 = vmatprep.mubr.f32.mxu0 0.0
  %2115 = vmatmul.mubr.f32.gmra.mxu0 %v2048
  %v2116 = vpop.f32.mrf.mxu0
  %v2117 = vadd.f32 0.0, %v2116
  %v2118 = vpop.f32.mrf.mxu0
  %2119 = vdwg.mxu0
  %v2120 = vadd.f32 %v2043, %v2117
  %s2121 = scalar_lea.vmem %s3, 160
  %v2122 = vld [vmem:[%s2121] sm:$0xff]
  %v2123 = vld [vmem:[%s2121 + $0x8] sm:$0xff]
  %v2125 = vsel %vm1121, %v1339, 0
  %2127 = vmatprep.subr.mxu0 0.0
  %2128 = vmatpush1.msra.mxu0 0.0
  %2129 = vmatprep.subr.mxu0 0.0
  %2130 = vmatpush1.msra.mxu0 0.0
  %2131 = vmatprep.subr.mxu0 0.0
  %2132 = vmatpush1.msra.mxu0 0.0
  %2133 = vmatprep.subr.mxu0 0.0
  %2134 = vmatpush1.msra.mxu0 0.0
  %2135 = vmatprep.subr.mxu0 0.0
  %2136 = vmatpush1.msra.mxu0 0.0
  %2137 = vmatprep.subr.mxu0 0.0
  %2138 = vmatpush1.msra.mxu0 0.0
  %2139 = vmatprep.subr.mxu0 0.0
  %2140 = vmatpush1.msra.mxu0 0.0
  %2141 = vmatprep.subr.mxu0 0.0
  %2142 = vmatpush1.msra.mxu0 0.0
  %2143 = vmatprep.subr.mxu0 0.0
  %2144 = vmatpush1.msra.mxu0 0.0
  %2145 = vmatprep.subr.mxu0 0.0
  %2146 = vmatpush1.msra.mxu0 0.0
  %2147 = vmatprep.subr.mxu0 0.0
  %2148 = vmatpush1.msra.mxu0 0.0
  %2149 = vmatprep.subr.mxu0 0.0
  %2150 = vmatpush1.msra.mxu0 0.0
  %2151 = vmatprep.subr.mxu0 0.0
  %2152 = vmatpush1.msra.mxu0 0.0
  %2153 = vmatprep.subr.mxu0 0.0
  %2154 = vmatpush1.msra.mxu0 0.0
  %2155 = vmatprep.subr.mxu0 0.0
  %2156 = vmatpush1.msra.mxu0 %v2123
  %2157 = vmatprep.subr.mxu0 0.0
  %2158 = vmatpush1.msra.mxu0 %v2122
  %2159 = vmatprep.subr.mxu0 0.0
  %2160 = vmatpush2.msra.mxu0 0.0
  %2161 = vmatprep.subr.mxu0 0.0
  %2162 = vmatpush2.msra.mxu0 0.0
  %2163 = vmatprep.subr.mxu0 0.0
  %2164 = vmatpush2.msra.mxu0 0.0
  %2165 = vmatprep.subr.mxu0 0.0
  %2166 = vmatpush2.msra.mxu0 0.0
  %2167 = vmatprep.subr.mxu0 0.0
  %2168 = vmatpush2.msra.mxu0 0.0
  %2169 = vmatprep.subr.mxu0 0.0
  %2170 = vmatpush2.msra.mxu0 0.0
  %2171 = vmatprep.subr.mxu0 0.0
  %2172 = vmatpush2.msra.mxu0 0.0
  %2173 = vmatprep.subr.mxu0 0.0
  %2174 = vmatpush2.msra.mxu0 0.0
  %2175 = vmatprep.subr.mxu0 0.0
  %2176 = vmatpush2.msra.mxu0 0.0
  %2177 = vmatprep.subr.mxu0 0.0
  %2178 = vmatpush2.msra.mxu0 0.0
  %2179 = vmatprep.subr.mxu0 0.0
  %2180 = vmatpush2.msra.mxu0 0.0
  %2181 = vmatprep.subr.mxu0 0.0
  %2182 = vmatpush2.msra.mxu0 0.0
  %2183 = vmatprep.subr.mxu0 0.0
  %2184 = vmatpush2.msra.mxu0 0.0
  %2185 = vmatprep.subr.mxu0 0.0
  %2186 = vmatpush2.msra.mxu0 0.0
  %2187 = vmatprep.subr.mxu0 0.0
  %2188 = vmatpush2.msra.mxu0 0.0
  %2189 = vmatprep.subr.mxu0 0.0
  %2190 = vmatpush2.msra.mxu0 0.0
  %2191 = vmatprep.mubr.f32.mxu0 0.0
  %2192 = vmatmul.mubr.f32.gmra.mxu0 %v2125
  %v2193 = vpop.f32.mrf.mxu0
  %v2194 = vadd.f32 0.0, %v2193
  %v2195 = vpop.f32.mrf.mxu0
  %2196 = vdwg.mxu0
  %v2197 = vadd.f32 %v2120, %v2194
  %s2198 = scalar_lea.vmem %s3, 176
  %v2199 = vld [vmem:[%s2198] sm:$0xff]
  %v2200 = vld [vmem:[%s2198 + $0x8] sm:$0xff]
  %v2202 = vsel %vm1121, %v1340, 0
  %2204 = vmatprep.subr.mxu0 0.0
  %2205 = vmatpush1.msra.mxu0 0.0
  %2206 = vmatprep.subr.mxu0 0.0
  %2207 = vmatpush1.msra.mxu0 0.0
  %2208 = vmatprep.subr.mxu0 0.0
  %2209 = vmatpush1.msra.mxu0 0.0
  %2210 = vmatprep.subr.mxu0 0.0
  %2211 = vmatpush1.msra.mxu0 0.0
  %2212 = vmatprep.subr.mxu0 0.0
  %2213 = vmatpush1.msra.mxu0 0.0
  %2214 = vmatprep.subr.mxu0 0.0
  %2215 = vmatpush1.msra.mxu0 0.0
  %2216 = vmatprep.subr.mxu0 0.0
  %2217 = vmatpush1.msra.mxu0 0.0
  %2218 = vmatprep.subr.mxu0 0.0
  %2219 = vmatpush1.msra.mxu0 0.0
  %2220 = vmatprep.subr.mxu0 0.0
  %2221 = vmatpush1.msra.mxu0 0.0
  %2222 = vmatprep.subr.mxu0 0.0
  %2223 = vmatpush1.msra.mxu0 0.0
  %2224 = vmatprep.subr.mxu0 0.0
  %2225 = vmatpush1.msra.mxu0 0.0
  %2226 = vmatprep.subr.mxu0 0.0
  %2227 = vmatpush1.msra.mxu0 0.0
  %2228 = vmatprep.subr.mxu0 0.0
  %2229 = vmatpush1.msra.mxu0 0.0
  %2230 = vmatprep.subr.mxu0 0.0
  %2231 = vmatpush1.msra.mxu0 0.0
  %2232 = vmatprep.subr.mxu0 0.0
  %2233 = vmatpush1.msra.mxu0 %v2200
  %2234 = vmatprep.subr.mxu0 0.0
  %2235 = vmatpush1.msra.mxu0 %v2199
  %2236 = vmatprep.subr.mxu0 0.0
  %2237 = vmatpush2.msra.mxu0 0.0
  %2238 = vmatprep.subr.mxu0 0.0
  %2239 = vmatpush2.msra.mxu0 0.0
  %2240 = vmatprep.subr.mxu0 0.0
  %2241 = vmatpush2.msra.mxu0 0.0
  %2242 = vmatprep.subr.mxu0 0.0
  %2243 = vmatpush2.msra.mxu0 0.0
  %2244 = vmatprep.subr.mxu0 0.0
  %2245 = vmatpush2.msra.mxu0 0.0
  %2246 = vmatprep.subr.mxu0 0.0
  %2247 = vmatpush2.msra.mxu0 0.0
  %2248 = vmatprep.subr.mxu0 0.0
  %2249 = vmatpush2.msra.mxu0 0.0
  %2250 = vmatprep.subr.mxu0 0.0
  %2251 = vmatpush2.msra.mxu0 0.0
  %2252 = vmatprep.subr.mxu0 0.0
  %2253 = vmatpush2.msra.mxu0 0.0
  %2254 = vmatprep.subr.mxu0 0.0
  %2255 = vmatpush2.msra.mxu0 0.0
  %2256 = vmatprep.subr.mxu0 0.0
  %2257 = vmatpush2.msra.mxu0 0.0
  %2258 = vmatprep.subr.mxu0 0.0
  %2259 = vmatpush2.msra.mxu0 0.0
  %2260 = vmatprep.subr.mxu0 0.0
  %2261 = vmatpush2.msra.mxu0 0.0
  %2262 = vmatprep.subr.mxu0 0.0
  %2263 = vmatpush2.msra.mxu0 0.0
  %2264 = vmatprep.subr.mxu0 0.0
  %2265 = vmatpush2.msra.mxu0 0.0
  %2266 = vmatprep.subr.mxu0 0.0
  %2267 = vmatpush2.msra.mxu0 0.0
  %2268 = vmatprep.mubr.f32.mxu0 0.0
  %2269 = vmatmul.mubr.f32.gmra.mxu0 %v2202
  %v2270 = vpop.f32.mrf.mxu0
  %v2271 = vadd.f32 0.0, %v2270
  %v2272 = vpop.f32.mrf.mxu0
  %2273 = vdwg.mxu0
  %v2274 = vadd.f32 %v2197, %v2271
  %s2275 = scalar_lea.vmem %s3, 192
  %v2276 = vld [vmem:[%s2275] sm:$0xff]
  %v2277 = vld [vmem:[%s2275 + $0x8] sm:$0xff]
  %v2279 = vsel %vm1121, %v1341, 0
  %2281 = vmatprep.subr.mxu0 0.0
  %2282 = vmatpush1.msra.mxu0 0.0
  %2283 = vmatprep.subr.mxu0 0.0
  %2284 = vmatpush1.msra.mxu0 0.0
  %2285 = vmatprep.subr.mxu0 0.0
  %2286 = vmatpush1.msra.mxu0 0.0
  %2287 = vmatprep.subr.mxu0 0.0
  %2288 = vmatpush1.msra.mxu0 0.0
  %2289 = vmatprep.subr.mxu0 0.0
  %2290 = vmatpush1.msra.mxu0 0.0
  %2291 = vmatprep.subr.mxu0 0.0
  %2292 = vmatpush1.msra.mxu0 0.0
  %2293 = vmatprep.subr.mxu0 0.0
  %2294 = vmatpush1.msra.mxu0 0.0
  %2295 = vmatprep.subr.mxu0 0.0
  %2296 = vmatpush1.msra.mxu0 0.0
  %2297 = vmatprep.subr.mxu0 0.0
  %2298 = vmatpush1.msra.mxu0 0.0
  %2299 = vmatprep.subr.mxu0 0.0
  %2300 = vmatpush1.msra.mxu0 0.0
  %2301 = vmatprep.subr.mxu0 0.0
  %2302 = vmatpush1.msra.mxu0 0.0
  %2303 = vmatprep.subr.mxu0 0.0
  %2304 = vmatpush1.msra.mxu0 0.0
  %2305 = vmatprep.subr.mxu0 0.0
  %2306 = vmatpush1.msra.mxu0 0.0
  %2307 = vmatprep.subr.mxu0 0.0
  %2308 = vmatpush1.msra.mxu0 0.0
  %2309 = vmatprep.subr.mxu0 0.0
  %2310 = vmatpush1.msra.mxu0 %v2277
  %2311 = vmatprep.subr.mxu0 0.0
  %2312 = vmatpush1.msra.mxu0 %v2276
  %2313 = vmatprep.subr.mxu0 0.0
  %2314 = vmatpush2.msra.mxu0 0.0
  %2315 = vmatprep.subr.mxu0 0.0
  %2316 = vmatpush2.msra.mxu0 0.0
  %2317 = vmatprep.subr.mxu0 0.0
  %2318 = vmatpush2.msra.mxu0 0.0
  %2319 = vmatprep.subr.mxu0 0.0
  %2320 = vmatpush2.msra.mxu0 0.0
  %2321 = vmatprep.subr.mxu0 0.0
  %2322 = vmatpush2.msra.mxu0 0.0
  %2323 = vmatprep.subr.mxu0 0.0
  %2324 = vmatpush2.msra.mxu0 0.0
  %2325 = vmatprep.subr.mxu0 0.0
  %2326 = vmatpush2.msra.mxu0 0.0
  %2327 = vmatprep.subr.mxu0 0.0
  %2328 = vmatpush2.msra.mxu0 0.0
  %2329 = vmatprep.subr.mxu0 0.0
  %2330 = vmatpush2.msra.mxu0 0.0
  %2331 = vmatprep.subr.mxu0 0.0
  %2332 = vmatpush2.msra.mxu0 0.0
  %2333 = vmatprep.subr.mxu0 0.0
  %2334 = vmatpush2.msra.mxu0 0.0
  %2335 = vmatprep.subr.mxu0 0.0
  %2336 = vmatpush2.msra.mxu0 0.0
  %2337 = vmatprep.subr.mxu0 0.0
  %2338 = vmatpush2.msra.mxu0 0.0
  %2339 = vmatprep.subr.mxu0 0.0
  %2340 = vmatpush2.msra.mxu0 0.0
  %2341 = vmatprep.subr.mxu0 0.0
  %2342 = vmatpush2.msra.mxu0 0.0
  %2343 = vmatprep.subr.mxu0 0.0
  %2344 = vmatpush2.msra.mxu0 0.0
  %2345 = vmatprep.mubr.f32.mxu0 0.0
  %2346 = vmatmul.mubr.f32.gmra.mxu0 %v2279
  %v2347 = vpop.f32.mrf.mxu0
  %v2348 = vadd.f32 0.0, %v2347
  %v2349 = vpop.f32.mrf.mxu0
  %2350 = vdwg.mxu0
  %v2351 = vadd.f32 %v2274, %v2348
  %s2352 = scalar_lea.vmem %s3, 208
  %v2353 = vld [vmem:[%s2352] sm:$0xff]
  %v2354 = vld [vmem:[%s2352 + $0x8] sm:$0xff]
  %v2356 = vsel %vm1121, %v1342, 0
  %2358 = vmatprep.subr.mxu0 0.0
  %2359 = vmatpush1.msra.mxu0 0.0
  %2360 = vmatprep.subr.mxu0 0.0
  %2361 = vmatpush1.msra.mxu0 0.0
  %2362 = vmatprep.subr.mxu0 0.0
  %2363 = vmatpush1.msra.mxu0 0.0
  %2364 = vmatprep.subr.mxu0 0.0
  %2365 = vmatpush1.msra.mxu0 0.0
  %2366 = vmatprep.subr.mxu0 0.0
  %2367 = vmatpush1.msra.mxu0 0.0
  %2368 = vmatprep.subr.mxu0 0.0
  %2369 = vmatpush1.msra.mxu0 0.0
  %2370 = vmatprep.subr.mxu0 0.0
  %2371 = vmatpush1.msra.mxu0 0.0
  %2372 = vmatprep.subr.mxu0 0.0
  %2373 = vmatpush1.msra.mxu0 0.0
  %2374 = vmatprep.subr.mxu0 0.0
  %2375 = vmatpush1.msra.mxu0 0.0
  %2376 = vmatprep.subr.mxu0 0.0
  %2377 = vmatpush1.msra.mxu0 0.0
  %2378 = vmatprep.subr.mxu0 0.0
  %2379 = vmatpush1.msra.mxu0 0.0
  %2380 = vmatprep.subr.mxu0 0.0
  %2381 = vmatpush1.msra.mxu0 0.0
  %2382 = vmatprep.subr.mxu0 0.0
  %2383 = vmatpush1.msra.mxu0 0.0
  %2384 = vmatprep.subr.mxu0 0.0
  %2385 = vmatpush1.msra.mxu0 0.0
  %2386 = vmatprep.subr.mxu0 0.0
  %2387 = vmatpush1.msra.mxu0 %v2354
  %2388 = vmatprep.subr.mxu0 0.0
  %2389 = vmatpush1.msra.mxu0 %v2353
  %2390 = vmatprep.subr.mxu0 0.0
  %2391 = vmatpush2.msra.mxu0 0.0
  %2392 = vmatprep.subr.mxu0 0.0
  %2393 = vmatpush2.msra.mxu0 0.0
  %2394 = vmatprep.subr.mxu0 0.0
  %2395 = vmatpush2.msra.mxu0 0.0
  %2396 = vmatprep.subr.mxu0 0.0
  %2397 = vmatpush2.msra.mxu0 0.0
  %2398 = vmatprep.subr.mxu0 0.0
  %2399 = vmatpush2.msra.mxu0 0.0
  %2400 = vmatprep.subr.mxu0 0.0
  %2401 = vmatpush2.msra.mxu0 0.0
  %2402 = vmatprep.subr.mxu0 0.0
  %2403 = vmatpush2.msra.mxu0 0.0
  %2404 = vmatprep.subr.mxu0 0.0
  %2405 = vmatpush2.msra.mxu0 0.0
  %2406 = vmatprep.subr.mxu0 0.0
  %2407 = vmatpush2.msra.mxu0 0.0
  %2408 = vmatprep.subr.mxu0 0.0
  %2409 = vmatpush2.msra.mxu0 0.0
  %2410 = vmatprep.subr.mxu0 0.0
  %2411 = vmatpush2.msra.mxu0 0.0
  %2412 = vmatprep.subr.mxu0 0.0
  %2413 = vmatpush2.msra.mxu0 0.0
  %2414 = vmatprep.subr.mxu0 0.0
  %2415 = vmatpush2.msra.mxu0 0.0
  %2416 = vmatprep.subr.mxu0 0.0
  %2417 = vmatpush2.msra.mxu0 0.0
  %2418 = vmatprep.subr.mxu0 0.0
  %2419 = vmatpush2.msra.mxu0 0.0
  %2420 = vmatprep.subr.mxu0 0.0
  %2421 = vmatpush2.msra.mxu0 0.0
  %2422 = vmatprep.mubr.f32.mxu0 0.0
  %2423 = vmatmul.mubr.f32.gmra.mxu0 %v2356
  %v2424 = vpop.f32.mrf.mxu0
  %v2425 = vadd.f32 0.0, %v2424
  %v2426 = vpop.f32.mrf.mxu0
  %2427 = vdwg.mxu0
  %v2428 = vadd.f32 %v2351, %v2425
  %s2429 = scalar_lea.vmem %s3, 224
  %v2430 = vld [vmem:[%s2429] sm:$0xff]
  %v2431 = vld [vmem:[%s2429 + $0x8] sm:$0xff]
  %v2433 = vsel %vm1121, %v1343, 0
  %2435 = vmatprep.subr.mxu0 0.0
  %2436 = vmatpush1.msra.mxu0 0.0
  %2437 = vmatprep.subr.mxu0 0.0
  %2438 = vmatpush1.msra.mxu0 0.0
  %2439 = vmatprep.subr.mxu0 0.0
  %2440 = vmatpush1.msra.mxu0 0.0
  %2441 = vmatprep.subr.mxu0 0.0
  %2442 = vmatpush1.msra.mxu0 0.0
  %2443 = vmatprep.subr.mxu0 0.0
  %2444 = vmatpush1.msra.mxu0 0.0
  %2445 = vmatprep.subr.mxu0 0.0
  %2446 = vmatpush1.msra.mxu0 0.0
  %2447 = vmatprep.subr.mxu0 0.0
  %2448 = vmatpush1.msra.mxu0 0.0
  %2449 = vmatprep.subr.mxu0 0.0
  %2450 = vmatpush1.msra.mxu0 0.0
  %2451 = vmatprep.subr.mxu0 0.0
  %2452 = vmatpush1.msra.mxu0 0.0
  %2453 = vmatprep.subr.mxu0 0.0
  %2454 = vmatpush1.msra.mxu0 0.0
  %2455 = vmatprep.subr.mxu0 0.0
  %2456 = vmatpush1.msra.mxu0 0.0
  %2457 = vmatprep.subr.mxu0 0.0
  %2458 = vmatpush1.msra.mxu0 0.0
  %2459 = vmatprep.subr.mxu0 0.0
  %2460 = vmatpush1.msra.mxu0 0.0
  %2461 = vmatprep.subr.mxu0 0.0
  %2462 = vmatpush1.msra.mxu0 0.0
  %2463 = vmatprep.subr.mxu0 0.0
  %2464 = vmatpush1.msra.mxu0 %v2431
  %2465 = vmatprep.subr.mxu0 0.0
  %2466 = vmatpush1.msra.mxu0 %v2430
  %2467 = vmatprep.subr.mxu0 0.0
  %2468 = vmatpush2.msra.mxu0 0.0
  %2469 = vmatprep.subr.mxu0 0.0
  %2470 = vmatpush2.msra.mxu0 0.0
  %2471 = vmatprep.subr.mxu0 0.0
  %2472 = vmatpush2.msra.mxu0 0.0
  %2473 = vmatprep.subr.mxu0 0.0
  %2474 = vmatpush2.msra.mxu0 0.0
  %2475 = vmatprep.subr.mxu0 0.0
  %2476 = vmatpush2.msra.mxu0 0.0
  %2477 = vmatprep.subr.mxu0 0.0
  %2478 = vmatpush2.msra.mxu0 0.0
  %2479 = vmatprep.subr.mxu0 0.0
  %2480 = vmatpush2.msra.mxu0 0.0
  %2481 = vmatprep.subr.mxu0 0.0
  %2482 = vmatpush2.msra.mxu0 0.0
  %2483 = vmatprep.subr.mxu0 0.0
  %2484 = vmatpush2.msra.mxu0 0.0
  %2485 = vmatprep.subr.mxu0 0.0
  %2486 = vmatpush2.msra.mxu0 0.0
  %2487 = vmatprep.subr.mxu0 0.0
  %2488 = vmatpush2.msra.mxu0 0.0
  %2489 = vmatprep.subr.mxu0 0.0
  %2490 = vmatpush2.msra.mxu0 0.0
  %2491 = vmatprep.subr.mxu0 0.0
  %2492 = vmatpush2.msra.mxu0 0.0
  %2493 = vmatprep.subr.mxu0 0.0
  %2494 = vmatpush2.msra.mxu0 0.0
  %2495 = vmatprep.subr.mxu0 0.0
  %2496 = vmatpush2.msra.mxu0 0.0
  %2497 = vmatprep.subr.mxu0 0.0
  %2498 = vmatpush2.msra.mxu0 0.0
  %2499 = vmatprep.mubr.f32.mxu0 0.0
  %2500 = vmatmul.mubr.f32.gmra.mxu0 %v2433
  %v2501 = vpop.f32.mrf.mxu0
  %v2502 = vadd.f32 0.0, %v2501
  %v2503 = vpop.f32.mrf.mxu0
  %2504 = vdwg.mxu0
  %v2505 = vadd.f32 %v2428, %v2502
  %s2506 = scalar_lea.vmem %s3, 240
  %v2507 = vld [vmem:[%s2506] sm:$0xff]
  %v2508 = vld [vmem:[%s2506 + $0x8] sm:$0xff]
  %v2510 = vsel %vm1121, %v1344, 0
  %2512 = vmatprep.subr.mxu0 0.0
  %2513 = vmatpush1.msra.mxu0 0.0
  %2514 = vmatprep.subr.mxu0 0.0
  %2515 = vmatpush1.msra.mxu0 0.0
  %2516 = vmatprep.subr.mxu0 0.0
  %2517 = vmatpush1.msra.mxu0 0.0
  %2518 = vmatprep.subr.mxu0 0.0
  %2519 = vmatpush1.msra.mxu0 0.0
  %2520 = vmatprep.subr.mxu0 0.0
  %2521 = vmatpush1.msra.mxu0 0.0
  %2522 = vmatprep.subr.mxu0 0.0
  %2523 = vmatpush1.msra.mxu0 0.0
  %2524 = vmatprep.subr.mxu0 0.0
  %2525 = vmatpush1.msra.mxu0 0.0
  %2526 = vmatprep.subr.mxu0 0.0
  %2527 = vmatpush1.msra.mxu0 0.0
  %2528 = vmatprep.subr.mxu0 0.0
  %2529 = vmatpush1.msra.mxu0 0.0
  %2530 = vmatprep.subr.mxu0 0.0
  %2531 = vmatpush1.msra.mxu0 0.0
  %2532 = vmatprep.subr.mxu0 0.0
  %2533 = vmatpush1.msra.mxu0 0.0
  %2534 = vmatprep.subr.mxu0 0.0
  %2535 = vmatpush1.msra.mxu0 0.0
  %2536 = vmatprep.subr.mxu0 0.0
  %2537 = vmatpush1.msra.mxu0 0.0
  %2538 = vmatprep.subr.mxu0 0.0
  %2539 = vmatpush1.msra.mxu0 0.0
  %2540 = vmatprep.subr.mxu0 0.0
  %2541 = vmatpush1.msra.mxu0 %v2508
  %2542 = vmatprep.subr.mxu0 0.0
  %2543 = vmatpush1.msra.mxu0 %v2507
  %2544 = vmatprep.subr.mxu0 0.0
  %2545 = vmatpush2.msra.mxu0 0.0
  %2546 = vmatprep.subr.mxu0 0.0
  %2547 = vmatpush2.msra.mxu0 0.0
  %2548 = vmatprep.subr.mxu0 0.0
  %2549 = vmatpush2.msra.mxu0 0.0
  %2550 = vmatprep.subr.mxu0 0.0
  %2551 = vmatpush2.msra.mxu0 0.0
  %2552 = vmatprep.subr.mxu0 0.0
  %2553 = vmatpush2.msra.mxu0 0.0
  %2554 = vmatprep.subr.mxu0 0.0
  %2555 = vmatpush2.msra.mxu0 0.0
  %2556 = vmatprep.subr.mxu0 0.0
  %2557 = vmatpush2.msra.mxu0 0.0
  %2558 = vmatprep.subr.mxu0 0.0
  %2559 = vmatpush2.msra.mxu0 0.0
  %2560 = vmatprep.subr.mxu0 0.0
  %2561 = vmatpush2.msra.mxu0 0.0
  %2562 = vmatprep.subr.mxu0 0.0
  %2563 = vmatpush2.msra.mxu0 0.0
  %2564 = vmatprep.subr.mxu0 0.0
  %2565 = vmatpush2.msra.mxu0 0.0
  %2566 = vmatprep.subr.mxu0 0.0
  %2567 = vmatpush2.msra.mxu0 0.0
  %2568 = vmatprep.subr.mxu0 0.0
  %2569 = vmatpush2.msra.mxu0 0.0
  %2570 = vmatprep.subr.mxu0 0.0
  %2571 = vmatpush2.msra.mxu0 0.0
  %2572 = vmatprep.subr.mxu0 0.0
  %2573 = vmatpush2.msra.mxu0 0.0
  %2574 = vmatprep.subr.mxu0 0.0
  %2575 = vmatpush2.msra.mxu0 0.0
  %2576 = vmatprep.mubr.f32.mxu0 0.0
  %2577 = vmatmul.mubr.f32.gmra.mxu0 %v2510
  %v2578 = vpop.f32.mrf.mxu0
  %v2579 = vadd.f32 0.0, %v2578
  %v2580 = vpop.f32.mrf.mxu0
  %2581 = vdwg.mxu0
  %v2582 = vadd.f32 %v2505, %v2579
  %s2583 = scalar_lea.vmem %s3, 256
  %v2584 = vld [vmem:[%s2583] sm:$0xff]
  %v2585 = vld [vmem:[%s2583 + $0x8] sm:$0xff]
  %v2587 = vsel %vm1121, %v1345, 0
  %2589 = vmatprep.subr.mxu0 0.0
  %2590 = vmatpush1.msra.mxu0 0.0
  %2591 = vmatprep.subr.mxu0 0.0
  %2592 = vmatpush1.msra.mxu0 0.0
  %2593 = vmatprep.subr.mxu0 0.0
  %2594 = vmatpush1.msra.mxu0 0.0
  %2595 = vmatprep.subr.mxu0 0.0
  %2596 = vmatpush1.msra.mxu0 0.0
  %2597 = vmatprep.subr.mxu0 0.0
  %2598 = vmatpush1.msra.mxu0 0.0
  %2599 = vmatprep.subr.mxu0 0.0
  %2600 = vmatpush1.msra.mxu0 0.0
  %2601 = vmatprep.subr.mxu0 0.0
  %2602 = vmatpush1.msra.mxu0 0.0
  %2603 = vmatprep.subr.mxu0 0.0
  %2604 = vmatpush1.msra.mxu0 0.0
  %2605 = vmatprep.subr.mxu0 0.0
  %2606 = vmatpush1.msra.mxu0 0.0
  %2607 = vmatprep.subr.mxu0 0.0
  %2608 = vmatpush1.msra.mxu0 0.0
  %2609 = vmatprep.subr.mxu0 0.0
  %2610 = vmatpush1.msra.mxu0 0.0
  %2611 = vmatprep.subr.mxu0 0.0
  %2612 = vmatpush1.msra.mxu0 0.0
  %2613 = vmatprep.subr.mxu0 0.0
  %2614 = vmatpush1.msra.mxu0 0.0
  %2615 = vmatprep.subr.mxu0 0.0
  %2616 = vmatpush1.msra.mxu0 0.0
  %2617 = vmatprep.subr.mxu0 0.0
  %2618 = vmatpush1.msra.mxu0 %v2585
  %2619 = vmatprep.subr.mxu0 0.0
  %2620 = vmatpush1.msra.mxu0 %v2584
  %2621 = vmatprep.subr.mxu0 0.0
  %2622 = vmatpush2.msra.mxu0 0.0
  %2623 = vmatprep.subr.mxu0 0.0
  %2624 = vmatpush2.msra.mxu0 0.0
  %2625 = vmatprep.subr.mxu0 0.0
  %2626 = vmatpush2.msra.mxu0 0.0
  %2627 = vmatprep.subr.mxu0 0.0
  %2628 = vmatpush2.msra.mxu0 0.0
  %2629 = vmatprep.subr.mxu0 0.0
  %2630 = vmatpush2.msra.mxu0 0.0
  %2631 = vmatprep.subr.mxu0 0.0
  %2632 = vmatpush2.msra.mxu0 0.0
  %2633 = vmatprep.subr.mxu0 0.0
  %2634 = vmatpush2.msra.mxu0 0.0
  %2635 = vmatprep.subr.mxu0 0.0
  %2636 = vmatpush2.msra.mxu0 0.0
  %2637 = vmatprep.subr.mxu0 0.0
  %2638 = vmatpush2.msra.mxu0 0.0
  %2639 = vmatprep.subr.mxu0 0.0
  %2640 = vmatpush2.msra.mxu0 0.0
  %2641 = vmatprep.subr.mxu0 0.0
  %2642 = vmatpush2.msra.mxu0 0.0
  %2643 = vmatprep.subr.mxu0 0.0
  %2644 = vmatpush2.msra.mxu0 0.0
  %2645 = vmatprep.subr.mxu0 0.0
  %2646 = vmatpush2.msra.mxu0 0.0
  %2647 = vmatprep.subr.mxu0 0.0
  %2648 = vmatpush2.msra.mxu0 0.0
  %2649 = vmatprep.subr.mxu0 0.0
  %2650 = vmatpush2.msra.mxu0 0.0
  %2651 = vmatprep.subr.mxu0 0.0
  %2652 = vmatpush2.msra.mxu0 0.0
  %2653 = vmatprep.mubr.f32.mxu0 0.0
  %2654 = vmatmul.mubr.f32.gmra.mxu0 %v2587
  %v2655 = vpop.f32.mrf.mxu0
  %v2656 = vadd.f32 0.0, %v2655
  %v2657 = vpop.f32.mrf.mxu0
  %2658 = vdwg.mxu0
  %v2659 = vadd.f32 %v2582, %v2656
  %s2660 = scalar_lea.vmem %s3, 272
  %v2661 = vld [vmem:[%s2660] sm:$0xff]
  %v2662 = vld [vmem:[%s2660 + $0x8] sm:$0xff]
  %v2664 = vsel %vm1121, %v1346, 0
  %2666 = vmatprep.subr.mxu0 0.0
  %2667 = vmatpush1.msra.mxu0 0.0
  %2668 = vmatprep.subr.mxu0 0.0
  %2669 = vmatpush1.msra.mxu0 0.0
  %2670 = vmatprep.subr.mxu0 0.0
  %2671 = vmatpush1.msra.mxu0 0.0
  %2672 = vmatprep.subr.mxu0 0.0
  %2673 = vmatpush1.msra.mxu0 0.0
  %2674 = vmatprep.subr.mxu0 0.0
  %2675 = vmatpush1.msra.mxu0 0.0
  %2676 = vmatprep.subr.mxu0 0.0
  %2677 = vmatpush1.msra.mxu0 0.0
  %2678 = vmatprep.subr.mxu0 0.0
  %2679 = vmatpush1.msra.mxu0 0.0
  %2680 = vmatprep.subr.mxu0 0.0
  %2681 = vmatpush1.msra.mxu0 0.0
  %2682 = vmatprep.subr.mxu0 0.0
  %2683 = vmatpush1.msra.mxu0 0.0
  %2684 = vmatprep.subr.mxu0 0.0
  %2685 = vmatpush1.msra.mxu0 0.0
  %2686 = vmatprep.subr.mxu0 0.0
  %2687 = vmatpush1.msra.mxu0 0.0
  %2688 = vmatprep.subr.mxu0 0.0
  %2689 = vmatpush1.msra.mxu0 0.0
  %2690 = vmatprep.subr.mxu0 0.0
  %2691 = vmatpush1.msra.mxu0 0.0
  %2692 = vmatprep.subr.mxu0 0.0
  %2693 = vmatpush1.msra.mxu0 0.0
  %2694 = vmatprep.subr.mxu0 0.0
  %2695 = vmatpush1.msra.mxu0 %v2662
  %2696 = vmatprep.subr.mxu0 0.0
  %2697 = vmatpush1.msra.mxu0 %v2661
  %2698 = vmatprep.subr.mxu0 0.0
  %2699 = vmatpush2.msra.mxu0 0.0
  %2700 = vmatprep.subr.mxu0 0.0
  %2701 = vmatpush2.msra.mxu0 0.0
  %2702 = vmatprep.subr.mxu0 0.0
  %2703 = vmatpush2.msra.mxu0 0.0
  %2704 = vmatprep.subr.mxu0 0.0
  %2705 = vmatpush2.msra.mxu0 0.0
  %2706 = vmatprep.subr.mxu0 0.0
  %2707 = vmatpush2.msra.mxu0 0.0
  %2708 = vmatprep.subr.mxu0 0.0
  %2709 = vmatpush2.msra.mxu0 0.0
  %2710 = vmatprep.subr.mxu0 0.0
  %2711 = vmatpush2.msra.mxu0 0.0
  %2712 = vmatprep.subr.mxu0 0.0
  %2713 = vmatpush2.msra.mxu0 0.0
  %2714 = vmatprep.subr.mxu0 0.0
  %2715 = vmatpush2.msra.mxu0 0.0
  %2716 = vmatprep.subr.mxu0 0.0
  %2717 = vmatpush2.msra.mxu0 0.0
  %2718 = vmatprep.subr.mxu0 0.0
  %2719 = vmatpush2.msra.mxu0 0.0
  %2720 = vmatprep.subr.mxu0 0.0
  %2721 = vmatpush2.msra.mxu0 0.0
  %2722 = vmatprep.subr.mxu0 0.0
  %2723 = vmatpush2.msra.mxu0 0.0
  %2724 = vmatprep.subr.mxu0 0.0
  %2725 = vmatpush2.msra.mxu0 0.0
  %2726 = vmatprep.subr.mxu0 0.0
  %2727 = vmatpush2.msra.mxu0 0.0
  %2728 = vmatprep.subr.mxu0 0.0
  %2729 = vmatpush2.msra.mxu0 0.0
  %2730 = vmatprep.mubr.f32.mxu0 0.0
  %2731 = vmatmul.mubr.f32.gmra.mxu0 %v2664
  %v2732 = vpop.f32.mrf.mxu0
  %v2733 = vadd.f32 0.0, %v2732
  %v2734 = vpop.f32.mrf.mxu0
  %2735 = vdwg.mxu0
  %v2736 = vadd.f32 %v2659, %v2733
  %s2737 = scalar_lea.vmem %s3, 288
  %v2738 = vld [vmem:[%s2737] sm:$0xff]
  %v2739 = vld [vmem:[%s2737 + $0x8] sm:$0xff]
  %v2741 = vsel %vm1121, %v1347, 0
  %2743 = vmatprep.subr.mxu0 0.0
  %2744 = vmatpush1.msra.mxu0 0.0
  %2745 = vmatprep.subr.mxu0 0.0
  %2746 = vmatpush1.msra.mxu0 0.0
  %2747 = vmatprep.subr.mxu0 0.0
  %2748 = vmatpush1.msra.mxu0 0.0
  %2749 = vmatprep.subr.mxu0 0.0
  %2750 = vmatpush1.msra.mxu0 0.0
  %2751 = vmatprep.subr.mxu0 0.0
  %2752 = vmatpush1.msra.mxu0 0.0
  %2753 = vmatprep.subr.mxu0 0.0
  %2754 = vmatpush1.msra.mxu0 0.0
  %2755 = vmatprep.subr.mxu0 0.0
  %2756 = vmatpush1.msra.mxu0 0.0
  %2757 = vmatprep.subr.mxu0 0.0
  %2758 = vmatpush1.msra.mxu0 0.0
  %2759 = vmatprep.subr.mxu0 0.0
  %2760 = vmatpush1.msra.mxu0 0.0
  %2761 = vmatprep.subr.mxu0 0.0
  %2762 = vmatpush1.msra.mxu0 0.0
  %2763 = vmatprep.subr.mxu0 0.0
  %2764 = vmatpush1.msra.mxu0 0.0
  %2765 = vmatprep.subr.mxu0 0.0
  %2766 = vmatpush1.msra.mxu0 0.0
  %2767 = vmatprep.subr.mxu0 0.0
  %2768 = vmatpush1.msra.mxu0 0.0
  %2769 = vmatprep.subr.mxu0 0.0
  %2770 = vmatpush1.msra.mxu0 0.0
  %2771 = vmatprep.subr.mxu0 0.0
  %2772 = vmatpush1.msra.mxu0 %v2739
  %2773 = vmatprep.subr.mxu0 0.0
  %2774 = vmatpush1.msra.mxu0 %v2738
  %2775 = vmatprep.subr.mxu0 0.0
  %2776 = vmatpush2.msra.mxu0 0.0
  %2777 = vmatprep.subr.mxu0 0.0
  %2778 = vmatpush2.msra.mxu0 0.0
  %2779 = vmatprep.subr.mxu0 0.0
  %2780 = vmatpush2.msra.mxu0 0.0
  %2781 = vmatprep.subr.mxu0 0.0
  %2782 = vmatpush2.msra.mxu0 0.0
  %2783 = vmatprep.subr.mxu0 0.0
  %2784 = vmatpush2.msra.mxu0 0.0
  %2785 = vmatprep.subr.mxu0 0.0
  %2786 = vmatpush2.msra.mxu0 0.0
  %2787 = vmatprep.subr.mxu0 0.0
  %2788 = vmatpush2.msra.mxu0 0.0
  %2789 = vmatprep.subr.mxu0 0.0
  %2790 = vmatpush2.msra.mxu0 0.0
  %2791 = vmatprep.subr.mxu0 0.0
  %2792 = vmatpush2.msra.mxu0 0.0
  %2793 = vmatprep.subr.mxu0 0.0
  %2794 = vmatpush2.msra.mxu0 0.0
  %2795 = vmatprep.subr.mxu0 0.0
  %2796 = vmatpush2.msra.mxu0 0.0
  %2797 = vmatprep.subr.mxu0 0.0
  %2798 = vmatpush2.msra.mxu0 0.0
  %2799 = vmatprep.subr.mxu0 0.0
  %2800 = vmatpush2.msra.mxu0 0.0
  %2801 = vmatprep.subr.mxu0 0.0
  %2802 = vmatpush2.msra.mxu0 0.0
  %2803 = vmatprep.subr.mxu0 0.0
  %2804 = vmatpush2.msra.mxu0 0.0
  %2805 = vmatprep.subr.mxu0 0.0
  %2806 = vmatpush2.msra.mxu0 0.0
  %2807 = vmatprep.mubr.f32.mxu0 0.0
  %2808 = vmatmul.mubr.f32.gmra.mxu0 %v2741
  %v2809 = vpop.f32.mrf.mxu0
  %v2810 = vadd.f32 0.0, %v2809
  %v2811 = vpop.f32.mrf.mxu0
  %2812 = vdwg.mxu0
  %v2813 = vadd.f32 %v2736, %v2810
  %s2814 = scalar_lea.vmem %s3, 304
  %v2815 = vld [vmem:[%s2814] sm:$0xff]
  %v2816 = vld [vmem:[%s2814 + $0x8] sm:$0xff]
  %v2818 = vsel %vm1121, %v1348, 0
  %2820 = vmatprep.subr.mxu0 0.0
  %2821 = vmatpush1.msra.mxu0 0.0
  %2822 = vmatprep.subr.mxu0 0.0
  %2823 = vmatpush1.msra.mxu0 0.0
  %2824 = vmatprep.subr.mxu0 0.0
  %2825 = vmatpush1.msra.mxu0 0.0
  %2826 = vmatprep.subr.mxu0 0.0
  %2827 = vmatpush1.msra.mxu0 0.0
  %2828 = vmatprep.subr.mxu0 0.0
  %2829 = vmatpush1.msra.mxu0 0.0
  %2830 = vmatprep.subr.mxu0 0.0
  %2831 = vmatpush1.msra.mxu0 0.0
  %2832 = vmatprep.subr.mxu0 0.0
  %2833 = vmatpush1.msra.mxu0 0.0
  %2834 = vmatprep.subr.mxu0 0.0
  %2835 = vmatpush1.msra.mxu0 0.0
  %2836 = vmatprep.subr.mxu0 0.0
  %2837 = vmatpush1.msra.mxu0 0.0
  %2838 = vmatprep.subr.mxu0 0.0
  %2839 = vmatpush1.msra.mxu0 0.0
  %2840 = vmatprep.subr.mxu0 0.0
  %2841 = vmatpush1.msra.mxu0 0.0
  %2842 = vmatprep.subr.mxu0 0.0
  %2843 = vmatpush1.msra.mxu0 0.0
  %2844 = vmatprep.subr.mxu0 0.0
  %2845 = vmatpush1.msra.mxu0 0.0
  %2846 = vmatprep.subr.mxu0 0.0
  %2847 = vmatpush1.msra.mxu0 0.0
  %2848 = vmatprep.subr.mxu0 0.0
  %2849 = vmatpush1.msra.mxu0 %v2816
  %2850 = vmatprep.subr.mxu0 0.0
  %2851 = vmatpush1.msra.mxu0 %v2815
  %2852 = vmatprep.subr.mxu0 0.0
  %2853 = vmatpush2.msra.mxu0 0.0
  %2854 = vmatprep.subr.mxu0 0.0
  %2855 = vmatpush2.msra.mxu0 0.0
  %2856 = vmatprep.subr.mxu0 0.0
  %2857 = vmatpush2.msra.mxu0 0.0
  %2858 = vmatprep.subr.mxu0 0.0
  %2859 = vmatpush2.msra.mxu0 0.0
  %2860 = vmatprep.subr.mxu0 0.0
  %2861 = vmatpush2.msra.mxu0 0.0
  %2862 = vmatprep.subr.mxu0 0.0
  %2863 = vmatpush2.msra.mxu0 0.0
  %2864 = vmatprep.subr.mxu0 0.0
  %2865 = vmatpush2.msra.mxu0 0.0
  %2866 = vmatprep.subr.mxu0 0.0
  %2867 = vmatpush2.msra.mxu0 0.0
  %2868 = vmatprep.subr.mxu0 0.0
  %2869 = vmatpush2.msra.mxu0 0.0
  %2870 = vmatprep.subr.mxu0 0.0
  %2871 = vmatpush2.msra.mxu0 0.0
  %2872 = vmatprep.subr.mxu0 0.0
  %2873 = vmatpush2.msra.mxu0 0.0
  %2874 = vmatprep.subr.mxu0 0.0
  %2875 = vmatpush2.msra.mxu0 0.0
  %2876 = vmatprep.subr.mxu0 0.0
  %2877 = vmatpush2.msra.mxu0 0.0
  %2878 = vmatprep.subr.mxu0 0.0
  %2879 = vmatpush2.msra.mxu0 0.0
  %2880 = vmatprep.subr.mxu0 0.0
  %2881 = vmatpush2.msra.mxu0 0.0
  %2882 = vmatprep.subr.mxu0 0.0
  %2883 = vmatpush2.msra.mxu0 0.0
  %2884 = vmatprep.mubr.f32.mxu0 0.0
  %2885 = vmatmul.mubr.f32.gmra.mxu0 %v2818
  %v2886 = vpop.f32.mrf.mxu0
  %v2887 = vadd.f32 0.0, %v2886
  %v2888 = vpop.f32.mrf.mxu0
  %2889 = vdwg.mxu0
  %v2890 = vadd.f32 %v2813, %v2887
  %s2891 = scalar_lea.vmem %s3, 320
  %v2892 = vld [vmem:[%s2891] sm:$0xff]
  %v2893 = vld [vmem:[%s2891 + $0x8] sm:$0xff]
  %v2895 = vsel %vm1121, %v1349, 0
  %2897 = vmatprep.subr.mxu0 0.0
  %2898 = vmatpush1.msra.mxu0 0.0
  %2899 = vmatprep.subr.mxu0 0.0
  %2900 = vmatpush1.msra.mxu0 0.0
  %2901 = vmatprep.subr.mxu0 0.0
  %2902 = vmatpush1.msra.mxu0 0.0
  %2903 = vmatprep.subr.mxu0 0.0
  %2904 = vmatpush1.msra.mxu0 0.0
  %2905 = vmatprep.subr.mxu0 0.0
  %2906 = vmatpush1.msra.mxu0 0.0
  %2907 = vmatprep.subr.mxu0 0.0
  %2908 = vmatpush1.msra.mxu0 0.0
  %2909 = vmatprep.subr.mxu0 0.0
  %2910 = vmatpush1.msra.mxu0 0.0
  %2911 = vmatprep.subr.mxu0 0.0
  %2912 = vmatpush1.msra.mxu0 0.0
  %2913 = vmatprep.subr.mxu0 0.0
  %2914 = vmatpush1.msra.mxu0 0.0
  %2915 = vmatprep.subr.mxu0 0.0
  %2916 = vmatpush1.msra.mxu0 0.0
  %2917 = vmatprep.subr.mxu0 0.0
  %2918 = vmatpush1.msra.mxu0 0.0
  %2919 = vmatprep.subr.mxu0 0.0
  %2920 = vmatpush1.msra.mxu0 0.0
  %2921 = vmatprep.subr.mxu0 0.0
  %2922 = vmatpush1.msra.mxu0 0.0
  %2923 = vmatprep.subr.mxu0 0.0
  %2924 = vmatpush1.msra.mxu0 0.0
  %2925 = vmatprep.subr.mxu0 0.0
  %2926 = vmatpush1.msra.mxu0 %v2893
  %2927 = vmatprep.subr.mxu0 0.0
  %2928 = vmatpush1.msra.mxu0 %v2892
  %2929 = vmatprep.subr.mxu0 0.0
  %2930 = vmatpush2.msra.mxu0 0.0
  %2931 = vmatprep.subr.mxu0 0.0
  %2932 = vmatpush2.msra.mxu0 0.0
  %2933 = vmatprep.subr.mxu0 0.0
  %2934 = vmatpush2.msra.mxu0 0.0
  %2935 = vmatprep.subr.mxu0 0.0
  %2936 = vmatpush2.msra.mxu0 0.0
  %2937 = vmatprep.subr.mxu0 0.0
  %2938 = vmatpush2.msra.mxu0 0.0
  %2939 = vmatprep.subr.mxu0 0.0
  %2940 = vmatpush2.msra.mxu0 0.0
  %2941 = vmatprep.subr.mxu0 0.0
  %2942 = vmatpush2.msra.mxu0 0.0
  %2943 = vmatprep.subr.mxu0 0.0
  %2944 = vmatpush2.msra.mxu0 0.0
  %2945 = vmatprep.subr.mxu0 0.0
  %2946 = vmatpush2.msra.mxu0 0.0
  %2947 = vmatprep.subr.mxu0 0.0
  %2948 = vmatpush2.msra.mxu0 0.0
  %2949 = vmatprep.subr.mxu0 0.0
  %2950 = vmatpush2.msra.mxu0 0.0
  %2951 = vmatprep.subr.mxu0 0.0
  %2952 = vmatpush2.msra.mxu0 0.0
  %2953 = vmatprep.subr.mxu0 0.0
  %2954 = vmatpush2.msra.mxu0 0.0
  %2955 = vmatprep.subr.mxu0 0.0
  %2956 = vmatpush2.msra.mxu0 0.0
  %2957 = vmatprep.subr.mxu0 0.0
  %2958 = vmatpush2.msra.mxu0 0.0
  %2959 = vmatprep.subr.mxu0 0.0
  %2960 = vmatpush2.msra.mxu0 0.0
  %2961 = vmatprep.mubr.f32.mxu0 0.0
  %2962 = vmatmul.mubr.f32.gmra.mxu0 %v2895
  %v2963 = vpop.f32.mrf.mxu0
  %v2964 = vadd.f32 0.0, %v2963
  %v2965 = vpop.f32.mrf.mxu0
  %2966 = vdwg.mxu0
  %v2967 = vadd.f32 %v2890, %v2964
  %s2968 = scalar_lea.vmem %s3, 336
  %v2969 = vld [vmem:[%s2968] sm:$0xff]
  %v2970 = vld [vmem:[%s2968 + $0x8] sm:$0xff]
  %v2972 = vsel %vm1121, %v1350, 0
  %2974 = vmatprep.subr.mxu0 0.0
  %2975 = vmatpush1.msra.mxu0 0.0
  %2976 = vmatprep.subr.mxu0 0.0
  %2977 = vmatpush1.msra.mxu0 0.0
  %2978 = vmatprep.subr.mxu0 0.0
  %2979 = vmatpush1.msra.mxu0 0.0
  %2980 = vmatprep.subr.mxu0 0.0
  %2981 = vmatpush1.msra.mxu0 0.0
  %2982 = vmatprep.subr.mxu0 0.0
  %2983 = vmatpush1.msra.mxu0 0.0
  %2984 = vmatprep.subr.mxu0 0.0
  %2985 = vmatpush1.msra.mxu0 0.0
  %2986 = vmatprep.subr.mxu0 0.0
  %2987 = vmatpush1.msra.mxu0 0.0
  %2988 = vmatprep.subr.mxu0 0.0
  %2989 = vmatpush1.msra.mxu0 0.0
  %2990 = vmatprep.subr.mxu0 0.0
  %2991 = vmatpush1.msra.mxu0 0.0
  %2992 = vmatprep.subr.mxu0 0.0
  %2993 = vmatpush1.msra.mxu0 0.0
  %2994 = vmatprep.subr.mxu0 0.0
  %2995 = vmatpush1.msra.mxu0 0.0
  %2996 = vmatprep.subr.mxu0 0.0
  %2997 = vmatpush1.msra.mxu0 0.0
  %2998 = vmatprep.subr.mxu0 0.0
  %2999 = vmatpush1.msra.mxu0 0.0
  %3000 = vmatprep.subr.mxu0 0.0
  %3001 = vmatpush1.msra.mxu0 0.0
  %3002 = vmatprep.subr.mxu0 0.0
  %3003 = vmatpush1.msra.mxu0 %v2970
  %3004 = vmatprep.subr.mxu0 0.0
  %3005 = vmatpush1.msra.mxu0 %v2969
  %3006 = vmatprep.subr.mxu0 0.0
  %3007 = vmatpush2.msra.mxu0 0.0
  %3008 = vmatprep.subr.mxu0 0.0
  %3009 = vmatpush2.msra.mxu0 0.0
  %3010 = vmatprep.subr.mxu0 0.0
  %3011 = vmatpush2.msra.mxu0 0.0
  %3012 = vmatprep.subr.mxu0 0.0
  %3013 = vmatpush2.msra.mxu0 0.0
  %3014 = vmatprep.subr.mxu0 0.0
  %3015 = vmatpush2.msra.mxu0 0.0
  %3016 = vmatprep.subr.mxu0 0.0
  %3017 = vmatpush2.msra.mxu0 0.0
  %3018 = vmatprep.subr.mxu0 0.0
  %3019 = vmatpush2.msra.mxu0 0.0
  %3020 = vmatprep.subr.mxu0 0.0
  %3021 = vmatpush2.msra.mxu0 0.0
  %3022 = vmatprep.subr.mxu0 0.0
  %3023 = vmatpush2.msra.mxu0 0.0
  %3024 = vmatprep.subr.mxu0 0.0
  %3025 = vmatpush2.msra.mxu0 0.0
  %3026 = vmatprep.subr.mxu0 0.0
  %3027 = vmatpush2.msra.mxu0 0.0
  %3028 = vmatprep.subr.mxu0 0.0
  %3029 = vmatpush2.msra.mxu0 0.0
  %3030 = vmatprep.subr.mxu0 0.0
  %3031 = vmatpush2.msra.mxu0 0.0
  %3032 = vmatprep.subr.mxu0 0.0
  %3033 = vmatpush2.msra.mxu0 0.0
  %3034 = vmatprep.subr.mxu0 0.0
  %3035 = vmatpush2.msra.mxu0 0.0
  %3036 = vmatprep.subr.mxu0 0.0
  %3037 = vmatpush2.msra.mxu0 0.0
  %3038 = vmatprep.mubr.f32.mxu0 0.0
  %3039 = vmatmul.mubr.f32.gmra.mxu0 %v2972
  %v3040 = vpop.f32.mrf.mxu0
  %v3041 = vadd.f32 0.0, %v3040
  %v3042 = vpop.f32.mrf.mxu0
  %3043 = vdwg.mxu0
  %v3044 = vadd.f32 %v2967, %v3041
  %s3045 = scalar_lea.vmem %s3, 352
  %v3046 = vld [vmem:[%s3045] sm:$0xff]
  %v3047 = vld [vmem:[%s3045 + $0x8] sm:$0xff]
  %v3049 = vsel %vm1121, %v1351, 0
  %3051 = vmatprep.subr.mxu0 0.0
  %3052 = vmatpush1.msra.mxu0 0.0
  %3053 = vmatprep.subr.mxu0 0.0
  %3054 = vmatpush1.msra.mxu0 0.0
  %3055 = vmatprep.subr.mxu0 0.0
  %3056 = vmatpush1.msra.mxu0 0.0
  %3057 = vmatprep.subr.mxu0 0.0
  %3058 = vmatpush1.msra.mxu0 0.0
  %3059 = vmatprep.subr.mxu0 0.0
  %3060 = vmatpush1.msra.mxu0 0.0
  %3061 = vmatprep.subr.mxu0 0.0
  %3062 = vmatpush1.msra.mxu0 0.0
  %3063 = vmatprep.subr.mxu0 0.0
  %3064 = vmatpush1.msra.mxu0 0.0
  %3065 = vmatprep.subr.mxu0 0.0
  %3066 = vmatpush1.msra.mxu0 0.0
  %3067 = vmatprep.subr.mxu0 0.0
  %3068 = vmatpush1.msra.mxu0 0.0
  %3069 = vmatprep.subr.mxu0 0.0
  %3070 = vmatpush1.msra.mxu0 0.0
  %3071 = vmatprep.subr.mxu0 0.0
  %3072 = vmatpush1.msra.mxu0 0.0
  %3073 = vmatprep.subr.mxu0 0.0
  %3074 = vmatpush1.msra.mxu0 0.0
  %3075 = vmatprep.subr.mxu0 0.0
  %3076 = vmatpush1.msra.mxu0 0.0
  %3077 = vmatprep.subr.mxu0 0.0
  %3078 = vmatpush1.msra.mxu0 0.0
  %3079 = vmatprep.subr.mxu0 0.0
  %3080 = vmatpush1.msra.mxu0 %v3047
  %3081 = vmatprep.subr.mxu0 0.0
  %3082 = vmatpush1.msra.mxu0 %v3046
  %3083 = vmatprep.subr.mxu0 0.0
  %3084 = vmatpush2.msra.mxu0 0.0
  %3085 = vmatprep.subr.mxu0 0.0
  %3086 = vmatpush2.msra.mxu0 0.0
  %3087 = vmatprep.subr.mxu0 0.0
  %3088 = vmatpush2.msra.mxu0 0.0
  %3089 = vmatprep.subr.mxu0 0.0
  %3090 = vmatpush2.msra.mxu0 0.0
  %3091 = vmatprep.subr.mxu0 0.0
  %3092 = vmatpush2.msra.mxu0 0.0
  %3093 = vmatprep.subr.mxu0 0.0
  %3094 = vmatpush2.msra.mxu0 0.0
  %3095 = vmatprep.subr.mxu0 0.0
  %3096 = vmatpush2.msra.mxu0 0.0
  %3097 = vmatprep.subr.mxu0 0.0
  %3098 = vmatpush2.msra.mxu0 0.0
  %3099 = vmatprep.subr.mxu0 0.0
  %3100 = vmatpush2.msra.mxu0 0.0
  %3101 = vmatprep.subr.mxu0 0.0
  %3102 = vmatpush2.msra.mxu0 0.0
  %3103 = vmatprep.subr.mxu0 0.0
  %3104 = vmatpush2.msra.mxu0 0.0
  %3105 = vmatprep.subr.mxu0 0.0
  %3106 = vmatpush2.msra.mxu0 0.0
  %3107 = vmatprep.subr.mxu0 0.0
  %3108 = vmatpush2.msra.mxu0 0.0
  %3109 = vmatprep.subr.mxu0 0.0
  %3110 = vmatpush2.msra.mxu0 0.0
  %3111 = vmatprep.subr.mxu0 0.0
  %3112 = vmatpush2.msra.mxu0 0.0
  %3113 = vmatprep.subr.mxu0 0.0
  %3114 = vmatpush2.msra.mxu0 0.0
  %3115 = vmatprep.mubr.f32.mxu0 0.0
  %3116 = vmatmul.mubr.f32.gmra.mxu0 %v3049
  %v3117 = vpop.f32.mrf.mxu0
  %v3118 = vadd.f32 0.0, %v3117
  %v3119 = vpop.f32.mrf.mxu0
  %3120 = vdwg.mxu0
  %v3121 = vadd.f32 %v3044, %v3118
  %s3122 = scalar_lea.vmem %s3, 368
  %v3123 = vld [vmem:[%s3122] sm:$0xff]
  %v3124 = vld [vmem:[%s3122 + $0x8] sm:$0xff]
  %v3126 = vsel %vm1121, %v1352, 0
  %3128 = vmatprep.subr.mxu0 0.0
  %3129 = vmatpush1.msra.mxu0 0.0
  %3130 = vmatprep.subr.mxu0 0.0
  %3131 = vmatpush1.msra.mxu0 0.0
  %3132 = vmatprep.subr.mxu0 0.0
  %3133 = vmatpush1.msra.mxu0 0.0
  %3134 = vmatprep.subr.mxu0 0.0
  %3135 = vmatpush1.msra.mxu0 0.0
  %3136 = vmatprep.subr.mxu0 0.0
  %3137 = vmatpush1.msra.mxu0 0.0
  %3138 = vmatprep.subr.mxu0 0.0
  %3139 = vmatpush1.msra.mxu0 0.0
  %3140 = vmatprep.subr.mxu0 0.0
  %3141 = vmatpush1.msra.mxu0 0.0
  %3142 = vmatprep.subr.mxu0 0.0
  %3143 = vmatpush1.msra.mxu0 0.0
  %3144 = vmatprep.subr.mxu0 0.0
  %3145 = vmatpush1.msra.mxu0 0.0
  %3146 = vmatprep.subr.mxu0 0.0
  %3147 = vmatpush1.msra.mxu0 0.0
  %3148 = vmatprep.subr.mxu0 0.0
  %3149 = vmatpush1.msra.mxu0 0.0
  %3150 = vmatprep.subr.mxu0 0.0
  %3151 = vmatpush1.msra.mxu0 0.0
  %3152 = vmatprep.subr.mxu0 0.0
  %3153 = vmatpush1.msra.mxu0 0.0
  %3154 = vmatprep.subr.mxu0 0.0
  %3155 = vmatpush1.msra.mxu0 0.0
  %3156 = vmatprep.subr.mxu0 0.0
  %3157 = vmatpush1.msra.mxu0 %v3124
  %3158 = vmatprep.subr.mxu0 0.0
  %3159 = vmatpush1.msra.mxu0 %v3123
  %3160 = vmatprep.subr.mxu0 0.0
  %3161 = vmatpush2.msra.mxu0 0.0
  %3162 = vmatprep.subr.mxu0 0.0
  %3163 = vmatpush2.msra.mxu0 0.0
  %3164 = vmatprep.subr.mxu0 0.0
  %3165 = vmatpush2.msra.mxu0 0.0
  %3166 = vmatprep.subr.mxu0 0.0
  %3167 = vmatpush2.msra.mxu0 0.0
  %3168 = vmatprep.subr.mxu0 0.0
  %3169 = vmatpush2.msra.mxu0 0.0
  %3170 = vmatprep.subr.mxu0 0.0
  %3171 = vmatpush2.msra.mxu0 0.0
  %3172 = vmatprep.subr.mxu0 0.0
  %3173 = vmatpush2.msra.mxu0 0.0
  %3174 = vmatprep.subr.mxu0 0.0
  %3175 = vmatpush2.msra.mxu0 0.0
  %3176 = vmatprep.subr.mxu0 0.0
  %3177 = vmatpush2.msra.mxu0 0.0
  %3178 = vmatprep.subr.mxu0 0.0
  %3179 = vmatpush2.msra.mxu0 0.0
  %3180 = vmatprep.subr.mxu0 0.0
  %3181 = vmatpush2.msra.mxu0 0.0
  %3182 = vmatprep.subr.mxu0 0.0
  %3183 = vmatpush2.msra.mxu0 0.0
  %3184 = vmatprep.subr.mxu0 0.0
  %3185 = vmatpush2.msra.mxu0 0.0
  %3186 = vmatprep.subr.mxu0 0.0
  %3187 = vmatpush2.msra.mxu0 0.0
  %3188 = vmatprep.subr.mxu0 0.0
  %3189 = vmatpush2.msra.mxu0 0.0
  %3190 = vmatprep.subr.mxu0 0.0
  %3191 = vmatpush2.msra.mxu0 0.0
  %3192 = vmatprep.mubr.f32.mxu0 0.0
  %3193 = vmatmul.mubr.f32.gmra.mxu0 %v3126
  %v3194 = vpop.f32.mrf.mxu0
  %v3195 = vadd.f32 0.0, %v3194
  %v3196 = vpop.f32.mrf.mxu0
  %3197 = vdwg.mxu0
  %v3198 = vadd.f32 %v3121, %v3195
  %s3199 = scalar_lea.vmem %s3, 384
  %v3200 = vld [vmem:[%s3199] sm:$0xff]
  %v3201 = vld [vmem:[%s3199 + $0x8] sm:$0xff]
  %v3203 = vsel %vm1121, %v1353, 0
  %3205 = vmatprep.subr.mxu0 0.0
  %3206 = vmatpush1.msra.mxu0 0.0
  %3207 = vmatprep.subr.mxu0 0.0
  %3208 = vmatpush1.msra.mxu0 0.0
  %3209 = vmatprep.subr.mxu0 0.0
  %3210 = vmatpush1.msra.mxu0 0.0
  %3211 = vmatprep.subr.mxu0 0.0
  %3212 = vmatpush1.msra.mxu0 0.0
  %3213 = vmatprep.subr.mxu0 0.0
  %3214 = vmatpush1.msra.mxu0 0.0
  %3215 = vmatprep.subr.mxu0 0.0
  %3216 = vmatpush1.msra.mxu0 0.0
  %3217 = vmatprep.subr.mxu0 0.0
  %3218 = vmatpush1.msra.mxu0 0.0
  %3219 = vmatprep.subr.mxu0 0.0
  %3220 = vmatpush1.msra.mxu0 0.0
  %3221 = vmatprep.subr.mxu0 0.0
  %3222 = vmatpush1.msra.mxu0 0.0
  %3223 = vmatprep.subr.mxu0 0.0
  %3224 = vmatpush1.msra.mxu0 0.0
  %3225 = vmatprep.subr.mxu0 0.0
  %3226 = vmatpush1.msra.mxu0 0.0
  %3227 = vmatprep.subr.mxu0 0.0
  %3228 = vmatpush1.msra.mxu0 0.0
  %3229 = vmatprep.subr.mxu0 0.0
  %3230 = vmatpush1.msra.mxu0 0.0
  %3231 = vmatprep.subr.mxu0 0.0
  %3232 = vmatpush1.msra.mxu0 0.0
  %3233 = vmatprep.subr.mxu0 0.0
  %3234 = vmatpush1.msra.mxu0 %v3201
  %3235 = vmatprep.subr.mxu0 0.0
  %3236 = vmatpush1.msra.mxu0 %v3200
  %3237 = vmatprep.subr.mxu0 0.0
  %3238 = vmatpush2.msra.mxu0 0.0
  %3239 = vmatprep.subr.mxu0 0.0
  %3240 = vmatpush2.msra.mxu0 0.0
  %3241 = vmatprep.subr.mxu0 0.0
  %3242 = vmatpush2.msra.mxu0 0.0
  %3243 = vmatprep.subr.mxu0 0.0
  %3244 = vmatpush2.msra.mxu0 0.0
  %3245 = vmatprep.subr.mxu0 0.0
  %3246 = vmatpush2.msra.mxu0 0.0
  %3247 = vmatprep.subr.mxu0 0.0
  %3248 = vmatpush2.msra.mxu0 0.0
  %3249 = vmatprep.subr.mxu0 0.0
  %3250 = vmatpush2.msra.mxu0 0.0
  %3251 = vmatprep.subr.mxu0 0.0
  %3252 = vmatpush2.msra.mxu0 0.0
  %3253 = vmatprep.subr.mxu0 0.0
  %3254 = vmatpush2.msra.mxu0 0.0
  %3255 = vmatprep.subr.mxu0 0.0
  %3256 = vmatpush2.msra.mxu0 0.0
  %3257 = vmatprep.subr.mxu0 0.0
  %3258 = vmatpush2.msra.mxu0 0.0
  %3259 = vmatprep.subr.mxu0 0.0
  %3260 = vmatpush2.msra.mxu0 0.0
  %3261 = vmatprep.subr.mxu0 0.0
  %3262 = vmatpush2.msra.mxu0 0.0
  %3263 = vmatprep.subr.mxu0 0.0
  %3264 = vmatpush2.msra.mxu0 0.0
  %3265 = vmatprep.subr.mxu0 0.0
  %3266 = vmatpush2.msra.mxu0 0.0
  %3267 = vmatprep.subr.mxu0 0.0
  %3268 = vmatpush2.msra.mxu0 0.0
  %3269 = vmatprep.mubr.f32.mxu0 0.0
  %3270 = vmatmul.mubr.f32.gmra.mxu0 %v3203
  %v3271 = vpop.f32.mrf.mxu0
  %v3272 = vadd.f32 0.0, %v3271
  %v3273 = vpop.f32.mrf.mxu0
  %3274 = vdwg.mxu0
  %v3275 = vadd.f32 %v3198, %v3272
  %v3276 = vld [vmem:[%s4] sm:$0x1]
  %v3278 = vlaneseq
  %v3279 = vshrl.u32 %v3278, 7
  %v3280 = vsub.s32 0, %v3279
  %v3281 = vrot.slane %v3276, %v3280
  %v3283 = vadd.f32 %v3275, %v3281
  %v3284 = vmax.f32 %v3283, 0.0
  %v3285 = vld [vmem:[%s5] sm:$0xff]
  %v3286 = vld [vmem:[%s5 + $0x8] sm:$0xff]
  %v3287 = vld [vmem:[%s5 + $0x10] sm:$0xff]
  %v3288 = vld [vmem:[%s5 + $0x18] sm:$0xff]
  %v3289 = vld [vmem:[%s5 + $0x20] sm:$0xff]
  %v3290 = vld [vmem:[%s5 + $0x28] sm:$0xff]
  %v3291 = vld [vmem:[%s5 + $0x30] sm:$0xff]
  %v3292 = vld [vmem:[%s5 + $0x38] sm:$0xff]
  %v3293 = vld [vmem:[%s5 + $0x40] sm:$0xff]
  %v3294 = vld [vmem:[%s5 + $0x48] sm:$0xff]
  %v3295 = vld [vmem:[%s5 + $0x50] sm:$0xff]
  %v3296 = vld [vmem:[%s5 + $0x58] sm:$0xff]
  %v3297 = vld [vmem:[%s5 + $0x60] sm:$0xff]
  %v3298 = vld [vmem:[%s5 + $0x68] sm:$0xff]
  %v3299 = vld [vmem:[%s5 + $0x70] sm:$0xff]
  %v3300 = vld [vmem:[%s6] sm:$0x1]
  %v3302 = vlaneseq
  %v3303 = vshrl.u32 %v3302, 7
  %v3304 = vsub.s32 0, %v3303
  %v3305 = vrot.slane %v3300, %v3304
  %vm3307 = vcmask 982016
  %v3309 = vsel %vm3307, %v3284, 0
  %3311 = vmatprep.subr.mxu0 0.0
  %3312 = vmatpush1.msra.mxu0 0.0
  %3313 = vmatprep.subr.mxu0 0.0
  %3314 = vmatpush1.msra.mxu0 %v3299
  %3315 = vmatprep.subr.mxu0 0.0
  %3316 = vmatpush1.msra.mxu0 %v3298
  %3317 = vmatprep.subr.mxu0 0.0
  %3318 = vmatpush1.msra.mxu0 %v3297
  %3319 = vmatprep.subr.mxu0 0.0
  %3320 = vmatpush1.msra.mxu0 %v3296
  %3321 = vmatprep.subr.mxu0 0.0
  %3322 = vmatpush1.msra.mxu0 %v3295
  %3323 = vmatprep.subr.mxu0 0.0
  %3324 = vmatpush1.msra.mxu0 %v3294
  %3325 = vmatprep.subr.mxu0 0.0
  %3326 = vmatpush1.msra.mxu0 %v3293
  %3327 = vmatprep.subr.mxu0 0.0
  %3328 = vmatpush1.msra.mxu0 %v3292
  %3329 = vmatprep.subr.mxu0 0.0
  %3330 = vmatpush1.msra.mxu0 %v3291
  %3331 = vmatprep.subr.mxu0 0.0
  %3332 = vmatpush1.msra.mxu0 %v3290
  %3333 = vmatprep.subr.mxu0 0.0
  %3334 = vmatpush1.msra.mxu0 %v3289
  %3335 = vmatprep.subr.mxu0 0.0
  %3336 = vmatpush1.msra.mxu0 %v3288
  %3337 = vmatprep.subr.mxu0 0.0
  %3338 = vmatpush1.msra.mxu0 %v3287
  %3339 = vmatprep.subr.mxu0 0.0
  %3340 = vmatpush1.msra.mxu0 %v3286
  %3341 = vmatprep.subr.mxu0 0.0
  %3342 = vmatpush1.msra.mxu0 %v3285
  %3343 = vmatprep.subr.mxu0 0.0
  %3344 = vmatpush2.msra.mxu0 0.0
  %3345 = vmatprep.subr.mxu0 0.0
  %3346 = vmatpush2.msra.mxu0 0.0
  %3347 = vmatprep.subr.mxu0 0.0
  %3348 = vmatpush2.msra.mxu0 0.0
  %3349 = vmatprep.subr.mxu0 0.0
  %3350 = vmatpush2.msra.mxu0 0.0
  %3351 = vmatprep.subr.mxu0 0.0
  %3352 = vmatpush2.msra.mxu0 0.0
  %3353 = vmatprep.subr.mxu0 0.0
  %3354 = vmatpush2.msra.mxu0 0.0
  %3355 = vmatprep.subr.mxu0 0.0
  %3356 = vmatpush2.msra.mxu0 0.0
  %3357 = vmatprep.subr.mxu0 0.0
  %3358 = vmatpush2.msra.mxu0 0.0
  %3359 = vmatprep.subr.mxu0 0.0
  %3360 = vmatpush2.msra.mxu0 0.0
  %3361 = vmatprep.subr.mxu0 0.0
  %3362 = vmatpush2.msra.mxu0 0.0
  %3363 = vmatprep.subr.mxu0 0.0
  %3364 = vmatpush2.msra.mxu0 0.0
  %3365 = vmatprep.subr.mxu0 0.0
  %3366 = vmatpush2.msra.mxu0 0.0
  %3367 = vmatprep.subr.mxu0 0.0
  %3368 = vmatpush2.msra.mxu0 0.0
  %3369 = vmatprep.subr.mxu0 0.0
  %3370 = vmatpush2.msra.mxu0 0.0
  %3371 = vmatprep.subr.mxu0 0.0
  %3372 = vmatpush2.msra.mxu0 0.0
  %3373 = vmatprep.subr.mxu0 0.0
  %3374 = vmatpush2.msra.mxu0 0.0
  %3375 = vmatprep.mubr.f32.mxu0 0.0
  %3376 = vmatmul.mubr.f32.gmra.mxu0 %v3309
  %v3377 = vpop.f32.mrf.mxu0
  %v3378 = vadd.f32 %v3305, %v3377
  %v3379 = vpop.f32.mrf.mxu0
  %3380 = vdwg.mxu0
  %v3381 = vmax.f32 %v3378, 0.0
  %v3382 = vld [vmem:[%s7] sm:$0xff]
  %v3383 = vld [vmem:[%s7 + $0x8] sm:$0xff]
  %v3384 = vld [vmem:[%s7 + $0x10] sm:$0xff]
  %v3385 = vld [vmem:[%s7 + $0x18] sm:$0xff]
  %v3386 = vld [vmem:[%s7 + $0x20] sm:$0xff]
  %v3387 = vld [vmem:[%s7 + $0x28] sm:$0xff]
  %v3388 = vld [vmem:[%s7 + $0x30] sm:$0xff]
  %v3389 = vld [vmem:[%s7 + $0x38] sm:$0xff]
  %v3390 = vld [vmem:[%s7 + $0x40] sm:$0xff]
  %v3391 = vld [vmem:[%s7 + $0x48] sm:$0xff]
  %v3392 = vld [vmem:[%s7 + $0x50] sm:$0xf]
  %v3393 = vld [vmem:[%s8] sm:$0x1]
  %v3395 = vlaneseq
  %v3396 = vshrl.u32 %v3395, 7
  %v3397 = vsub.s32 0, %v3396
  %v3398 = vrot.slane %v3393, %v3397
  %vm3400 = vcmask 687104
  %v3402 = vsel %vm3400, %v3381, 0
  %vm3404 = vcmask 1043456
  %v3406 = vsel %vm3404, %v3392, 0
  %3408 = vmatprep.subr.mxu0 0.0
  %3409 = vmatpush1.msra.mxu0 0.0
  %3410 = vmatprep.subr.mxu0 0.0
  %3411 = vmatpush1.msra.mxu0 0.0
  %3412 = vmatprep.subr.mxu0 0.0
  %3413 = vmatpush1.msra.mxu0 0.0
  %3414 = vmatprep.subr.mxu0 0.0
  %3415 = vmatpush1.msra.mxu0 0.0
  %3416 = vmatprep.subr.mxu0 0.0
  %3417 = vmatpush1.msra.mxu0 0.0
  %3418 = vmatprep.subr.mxu0 0.0
  %3419 = vmatpush1.msra.mxu0 %v3406
  %3420 = vmatprep.subr.mxu0 0.0
  %3421 = vmatpush1.msra.mxu0 %v3391
  %3422 = vmatprep.subr.mxu0 0.0
  %3423 = vmatpush1.msra.mxu0 %v3390
  %3424 = vmatprep.subr.mxu0 0.0
  %3425 = vmatpush1.msra.mxu0 %v3389
  %3426 = vmatprep.subr.mxu0 0.0
  %3427 = vmatpush1.msra.mxu0 %v3388
  %3428 = vmatprep.subr.mxu0 0.0
  %3429 = vmatpush1.msra.mxu0 %v3387
  %3430 = vmatprep.subr.mxu0 0.0
  %3431 = vmatpush1.msra.mxu0 %v3386
  %3432 = vmatprep.subr.mxu0 0.0
  %3433 = vmatpush1.msra.mxu0 %v3385
  %3434 = vmatprep.subr.mxu0 0.0
  %3435 = vmatpush1.msra.mxu0 %v3384
  %3436 = vmatprep.subr.mxu0 0.0
  %3437 = vmatpush1.msra.mxu0 %v3383
  %3438 = vmatprep.subr.mxu0 0.0
  %3439 = vmatpush1.msra.mxu0 %v3382
  %3440 = vmatprep.subr.mxu0 0.0
  %3441 = vmatpush2.msra.mxu0 0.0
  %3442 = vmatprep.subr.mxu0 0.0
  %3443 = vmatpush2.msra.mxu0 0.0
  %3444 = vmatprep.subr.mxu0 0.0
  %3445 = vmatpush2.msra.mxu0 0.0
  %3446 = vmatprep.subr.mxu0 0.0
  %3447 = vmatpush2.msra.mxu0 0.0
  %3448 = vmatprep.subr.mxu0 0.0
  %3449 = vmatpush2.msra.mxu0 0.0
  %3450 = vmatprep.subr.mxu0 0.0
  %3451 = vmatpush2.msra.mxu0 0.0
  %3452 = vmatprep.subr.mxu0 0.0
  %3453 = vmatpush2.msra.mxu0 0.0
  %3454 = vmatprep.subr.mxu0 0.0
  %3455 = vmatpush2.msra.mxu0 0.0
  %3456 = vmatprep.subr.mxu0 0.0
  %3457 = vmatpush2.msra.mxu0 0.0
  %3458 = vmatprep.subr.mxu0 0.0
  %3459 = vmatpush2.msra.mxu0 0.0
  %3460 = vmatprep.subr.mxu0 0.0
  %3461 = vmatpush2.msra.mxu0 0.0
  %3462 = vmatprep.subr.mxu0 0.0
  %3463 = vmatpush2.msra.mxu0 0.0
  %3464 = vmatprep.subr.mxu0 0.0
  %3465 = vmatpush2.msra.mxu0 0.0
  %3466 = vmatprep.subr.mxu0 0.0
  %3467 = vmatpush2.msra.mxu0 0.0
  %3468 = vmatprep.subr.mxu0 0.0
  %3469 = vmatpush2.msra.mxu0 0.0
  %3470 = vmatprep.subr.mxu0 0.0
  %3471 = vmatpush2.msra.mxu0 0.0
  %3472 = vmatprep.mubr.f32.mxu0 0.0
  %3473 = vmatmul.mubr.f32.gmra.mxu0 %v3402
  %v3474 = vpop.f32.mrf.mxu0
  %v3475 = vadd.f32 %v3398, %v3474
  %v3476 = vpop.f32.mrf.mxu0
  %3477 = vdwg.mxu0
  %3478 = vst [vmem:[%s9] sm:$0xff] %v3475
  // Predicated region
  $region38: #{conv_cifar_forward.3} parent=0 // pred_check
    _
  $region39: #{conv_cifar_forward.3} parent=0 // pred_check_branch
    %3480 = sbr.rel (0) target = $region41
  $region40: #{conv_cifar_forward.3} parent=0 // pred_region
    _
  $region41: #{conv_cifar_forward.3} parent=0 // pred_fallthru
    _
  // Predicated region
  $region42: #{conv_cifar_forward.3} parent=0 // pred_check
    _
  $region43: #{conv_cifar_forward.3} parent=0 // pred_check_branch
    %3482 = sbr.rel (0) target = $region45
  $region44: #{conv_cifar_forward.3} parent=0 // pred_region
    _
  $region45: #{conv_cifar_forward.3} parent=0 // pred_fallthru
    _

</llo_original>
